<compile_context>
chip_gen: v7x
topology: tpu7x:2x2x1
jax: 0.10.0
libtpu: 0.0.40
codegen_flags: <defaults>
</compile_context>

<pallas_src>
import functools

import jax
import jax.numpy as jnp
from jax.experimental import pallas as pl
from jax.experimental.pallas import tpu as pltpu


def _round_up(x, m):
    return (x + m - 1) // m * m


# --------------------------------------------------------------------------
# Fused bidirectional LSTM layer kernel
# --------------------------------------------------------------------------
def _bilstm_layer_kernel(lens_ref, x_ref, wih_ref, whh_ref, b_ref, out_ref,
                         h_sc, c_sc, gates_sc, *, Tc, Hp):
    # lens_ref: [Bp, 1] int32      x_ref:   [Tc, Bp, Din]
    # wih_ref:  [1, Din, 4Hp]      whh_ref: [1, Hp, 4Hp]     b_ref: [1, 1, 4Hp]
    # out_ref:  [Tc, Bp, Hp]  (direction-d lane block of the [.., 2Hp] output)
    # scratch:  h_sc/c_sc [Bp, Hp] f32, gates_sc [Tc, Bp, 4Hp] f32
    d = pl.program_id(0)            # 0 = forward, 1 = backward
    c = pl.program_id(1)            # chunk index in processing order
    nC = pl.num_programs(1)

    @pl.when(c == 0)
    def _():                        # fresh state at the start of each direction
        h_sc[...] = jnp.zeros_like(h_sc)
        c_sc[...] = jnp.zeros_like(c_sc)

    Bp = h_sc.shape[0]
    Din = x_ref.shape[-1]

    # ---- hoisted input projection: ONE MXU matmul for the whole chunk ------
    x_chunk = x_ref[...].reshape(Tc * Bp, Din)
    gates_in = jnp.dot(x_chunk, wih_ref[0], preferred_element_type=jnp.float32)
    gates_in = gates_in + b_ref[0]                       # bias folded here, once
    gates_sc[...] = gates_in.reshape(Tc, Bp, 4 * Hp)

    # absolute time of the first frame of this chunk
    chunk_idx = c + d * (nC - 1 - 2 * c)                 # fwd: c ; bwd: nC-1-c
    base_t = chunk_idx * Tc

    lens = lens_ref[...]                                 # [Bp, 1] int32 (1 vreg)

    # ---- serial recurrence over the chunk ----------------------------------
    def step(i, carry):
        tl = i + d * (Tc - 1 - 2 * i)                    # fwd: i ; bwd: Tc-1-i
        t = base_t + tl
        g = gates_sc[tl] + jnp.dot(h_sc[...], whh_ref[0],
                                   preferred_element_type=jnp.float32)
        # 128-lane-aligned gate slices (Hp is a multiple of 128)
        i_g = jax.nn.sigmoid(g[:, 0 * Hp:1 * Hp])
        f_g = jax.nn.sigmoid(g[:, 1 * Hp:2 * Hp])
        g_g = jnp.tanh(g[:, 2 * Hp:3 * Hp])
        o_g = jax.nn.sigmoid(g[:, 3 * Hp:4 * Hp])
        c_new = f_g * c_sc[...] + i_g * g_g
        h_new = o_g * jnp.tanh(c_new)
        valid = t < lens                                 # [Bp, 1] packed-seq mask
        c_sc[...] = jnp.where(valid, c_new, c_sc[...])
        h_sc[...] = jnp.where(valid, h_new, h_sc[...])
        out_ref[tl] = jnp.where(valid, h_new, 0.0)       # padded frames -> exact 0
        return carry

    unroll = True if Tc <= 16 else 4
    jax.lax.fori_loop(0, Tc, step, 0, unroll=unroll)


def _bilstm_layer(x_tm, lens_col, wih, whh, bias, *, Tc, Hp):
    """One bidirectional LSTM layer.

    x_tm:     [T_pad, Bp, Din]  f32 (time-major, zero-padded)
    lens_col: [Bp, 1]           int32 per-example valid lengths
    wih:      [2, Din, 4*Hp]    whh: [2, Hp, 4*Hp]    bias: [2, 1, 4*Hp]
    returns   [T_pad, Bp, 2*Hp] f32 (fwd lanes [0:Hp), bwd lanes [Hp:2Hp))
    """
    T_pad, Bp, Din = x_tm.shape
    nC = T_pad // Tc
    kernel = functools.partial(_bilstm_layer_kernel, Tc=Tc, Hp=Hp)

    def x_map(d, c):
        return (c + d * (nC - 1 - 2 * c), 0, 0)

    def out_map(d, c):
        return (c + d * (nC - 1 - 2 * c), 0, d)

    return pl.pallas_call(
        kernel,
        out_shape=jax.ShapeDtypeStruct((T_pad, Bp, 2 * Hp), jnp.float32),
        grid_spec=pltpu.PrefetchScalarGridSpec(
            num_scalar_prefetch=0,
            grid=(2, nC),
            in_specs=[
                pl.BlockSpec((Bp, 1), lambda d, c: (0, 0)),             # lengths
                pl.BlockSpec((Tc, Bp, Din), x_map),                      # x chunk
                pl.BlockSpec((1, Din, 4 * Hp), lambda d, c: (d, 0, 0)),  # W_ih[d]
                pl.BlockSpec((1, Hp, 4 * Hp), lambda d, c: (d, 0, 0)),   # W_hh[d]
                pl.BlockSpec((1, 1, 4 * Hp), lambda d, c: (d, 0, 0)),    # bias[d]
            ],
            out_specs=pl.BlockSpec((Tc, Bp, Hp), out_map),
            scratch_shapes=[
                pltpu.VMEM((Bp, Hp), jnp.float32),           # h state (carried)
                pltpu.VMEM((Bp, Hp), jnp.float32),           # c state (carried)
                pltpu.VMEM((Tc, Bp, 4 * Hp), jnp.float32),   # chunk input gates
            ],
        ),
        compiler_params=pltpu.CompilerParams(
            # direction axis parallel (v7x: fwd/bwd on the two TensorCores),
            # time-chunk axis arbitrary (state carried across chunks).
            dimension_semantics=("parallel", "arbitrary"),
            # Re-derive for large H / Tc; 32 MiB is safe on v5e/v6e/v7x.
            vmem_limit_bytes=32 * 1024 * 1024,
        ),
    )(lens_col, x_tm, wih, whh, bias)


# --------------------------------------------------------------------------
# Weight preparation: gate/lane padding + transpose, per direction
# --------------------------------------------------------------------------
def _prep_dir_weights(w_ih, w_hh, b_ih, b_hh, H, Hp, in_map, Din_pad):
    # PyTorch layout: w_ih [4H, Din], w_hh [4H, H], biases [4H]; gates i,f,g,o.
    w_ih = w_ih.astype(jnp.float32)
    w_hh = w_hh.astype(jnp.float32)
    row_idx = (jnp.arange(4)[:, None] * Hp + jnp.arange(H)[None, :]).reshape(-1)
    wih_p = jnp.zeros((4 * Hp, Din_pad), jnp.float32)
    wih_p = wih_p.at[row_idx[:, None], in_map[None, :]].set(w_ih)
    whh_p = jnp.zeros((4 * Hp, Hp), jnp.float32)
    whh_p = whh_p.at[row_idx[:, None], jnp.arange(H)[None, :]].set(w_hh)
    b_p = jnp.zeros((4 * Hp,), jnp.float32).at[row_idx].set(
        (b_ih + b_hh).astype(jnp.float32))
    # transposed for in-kernel x @ W layout
    return wih_p.T, whh_p.T, b_p.reshape(1, 4 * Hp)


def _prep_layer(layer_params, H, Hp, in_map, Din_pad):
    wih_l, whh_l, b_l = [], [], []
    for d in ("fwd", "bwd"):
        w_ih, w_hh, b_ih, b_hh = layer_params[d]
        wih_t, whh_t, b = _prep_dir_weights(w_ih, w_hh, b_ih, b_hh,
                                            H, Hp, in_map, Din_pad)
        wih_l.append(wih_t)
        whh_l.append(whh_t)
        b_l.append(b)
    return jnp.stack(wih_l), jnp.stack(whh_l), jnp.stack(b_l)


# --------------------------------------------------------------------------
# Public forward pass (matches Encoder.forward semantics, batch_first=True)
# --------------------------------------------------------------------------
def encoder_forward(params, x_batch, seq_lens, *, time_chunk=32):
    """x_batch: [B, T, input_size] f32; seq_lens: per-example lengths.
    Returns [B, max(seq_lens), 2*hidden_size] f32 (pad_packed_sequence output).
    """
    # TODO(synk): lengths are baked in at trace time (like pad_packed's max
    # length); distinct length sets recompile.
    seq_lens = [int(s) for s in seq_lens]
    B = x_batch.shape[0]
    H = params[0]["fwd"][1].shape[1]            # w_hh: [4H, H]
    Hp = _round_up(H, 128)
    T_max = max(seq_lens)
    Tc = min(time_chunk, T_max)
    T_pad = _round_up(T_max, Tc)
    Bp = _round_up(B, 8)

    x_tm = jnp.transpose(x_batch[:, :T_max, :], (1, 0, 2)).astype(jnp.float32)
    x_tm = jnp.pad(x_tm, ((0, T_pad - T_max), (0, Bp - B), (0, 0)))
    lens_col = jnp.zeros((Bp, 1), jnp.int32).at[:B, 0].set(
        jnp.asarray(seq_lens, jnp.int32))

    h = x_tm
    in_map = jnp.arange(x_tm.shape[-1])         # layer-0 input lanes: identity
    Din_pad = x_tm.shape[-1]
    for layer in params:
        wih, whh, bias = _prep_layer(layer, H, Hp, in_map, Din_pad)
        h = _bilstm_layer(h, lens_col, wih, whh, bias, Tc=Tc, Hp=Hp)
        # Next layer consumes the padded [.., 2*Hp] layout directly; its W_ih
        # columns are scattered onto the valid lanes (pad lanes hit zero weights).
        in_map = jnp.concatenate([jnp.arange(H), Hp + jnp.arange(H)])
        Din_pad = 2 * Hp
        # TODO(synk): nn.LSTM's inter-layer dropout=0.2 is train-mode only;
        # this implements the eval-mode forward (no dropout).

    out = jnp.concatenate([h[:T_max, :B, :H], h[:T_max, :B, Hp:Hp + H]], axis=-1)
    return jnp.transpose(out, (1, 0, 2))        # [B, T_max, 2H]


# --------------------------------------------------------------------------
# Pure-JAX reference (for correctness check) and parameter init
# --------------------------------------------------------------------------
def _ref_lstm_dir(x_tm, lens, w_ih, w_hh, b_ih, b_hh, reverse):
    T, B, _ = x_tm.shape
    H = w_hh.shape[1]
    b = b_ih + b_hh
    hi = jax.lax.Precision.HIGHEST

    def step(carry, t):
        h, c = carry
        xt = x_tm[t]
        g = (jnp.dot(xt, w_ih.T, precision=hi)
             + jnp.dot(h, w_hh.T, precision=hi) + b)
        i = jax.nn.sigmoid(g[:, 0 * H:1 * H])
        f = jax.nn.sigmoid(g[:, 1 * H:2 * H])
        gg = jnp.tanh(g[:, 2 * H:3 * H])
        o = jax.nn.sigmoid(g[:, 3 * H:4 * H])
        c_new = f * c + i * gg
        h_new = o * jnp.tanh(c_new)
        m = (t < lens)[:, None]
        c = jnp.where(m, c_new, c)
        h = jnp.where(m, h_new, h)
        return (h, c), jnp.where(m, h_new, 0.0)

    ts = jnp.arange(T)[::-1] if reverse else jnp.arange(T)
    init = (jnp.zeros((B, H), jnp.float32), jnp.zeros((B, H), jnp.float32))
    _, outs = jax.lax.scan(step, init, ts)
    return outs[::-1] if reverse else outs


def encoder_reference(params, x_batch, seq_lens):
    seq_lens = [int(s) for s in seq_lens]
    T = max(seq_lens)
    lens = jnp.asarray(seq_lens, jnp.int32)
    h = jnp.transpose(x_batch[:, :T, :], (1, 0, 2)).astype(jnp.float32)
    for layer in params:
        fwd = _ref_lstm_dir(h, lens, *layer["fwd"], reverse=False)
        bwd = _ref_lstm_dir(h, lens, *layer["bwd"], reverse=True)
        h = jnp.concatenate([fwd, bwd], axis=-1)
    return jnp.transpose(h, (1, 0, 2))


def init_params(key, input_size, hidden_size, num_layers):
    """nn.LSTM-shaped parameters, U(-k, k) with k = 1/sqrt(hidden_size)."""
    params = []
    k = 1.0 / float(hidden_size) ** 0.5
    in_sz = input_size
    for _ in range(num_layers):
        layer = {}
        for d in ("fwd", "bwd"):
            key, k1, k2, k3, k4 = jax.random.split(key, 5)
            w_ih = jax.random.uniform(k1, (4 * hidden_size, in_sz), jnp.float32, -k, k)
            w_hh = jax.random.uniform(k2, (4 * hidden_size, hidden_size), jnp.float32, -k, k)
            b_ih = jax.random.uniform(k3, (4 * hidden_size,), jnp.float32, -k, k)
            b_hh = jax.random.uniform(k4, (4 * hidden_size,), jnp.float32, -k, k)
            layer[d] = (w_ih, w_hh, b_ih, b_hh)
        params.append(layer)
        in_sz = 2 * hidden_size
    return params


if __name__ == "__main__":
    # Config the module would read: lmfb_dim=8, num_framestack=4 -> input 32.
    lmfb_dim, num_framestack = 8, 4
    input_size = lmfb_dim * num_framestack      # 32
    hidden_size = 32
    num_layers = 2
    B, T = 2, 8

    key = jax.random.PRNGKey(0)
    kx, kp = jax.random.split(key)
    x_batch = jax.random.normal(kx, (B, T, input_size), dtype=jnp.float32)
    seq_lens = [8, 5]

    params = init_params(kp, input_size, hidden_size, num_layers)
    out = encoder_forward(params, x_batch, seq_lens)
    out = jax.block_until_ready(out)

    assert out.shape == (B, max(seq_lens), 2 * hidden_size)
    assert bool(jnp.all(out[1, 5:, :] == 0.0))          # padded frames exactly 0

    ref = encoder_reference(params, x_batch, seq_lens)
    err = float(jnp.max(jnp.abs(out - ref)))
    assert err < 5e-2, f"max abs err vs reference: {err}"
    print("KERNEL_OK")
</pallas_src>

<mosaic_0001>
module attributes {stable_mosaic.version = 11 : i64} {
  func.func @_bilstm_layer_kernel(%arg0: i32, %arg1: i32, %arg2: memref<8x1xi32, #tpu.memory_space<vmem>>, %arg3: memref<8x8x32xf32, #tpu.memory_space<vmem>>, %arg4: memref<1x32x512xf32, #tpu.memory_space<vmem>>, %arg5: memref<1x128x512xf32, #tpu.memory_space<vmem>>, %arg6: memref<1x1x512xf32, #tpu.memory_space<vmem>>, %arg7: memref<8x8x128xf32, #tpu.memory_space<vmem>>, %arg8: memref<8x128xf32, #tpu.memory_space<vmem>>, %arg9: memref<8x128xf32, #tpu.memory_space<vmem>>, %arg10: memref<8x8x512xf32, #tpu.memory_space<vmem>>) attributes {dimension_semantics = [#tpu.dimension_semantics<parallel>, #tpu.dimension_semantics<arbitrary>], iteration_bounds = array<i64: 2, 1>, scalar_prefetch = 0 : i64, scratch_operands = 3 : i64, tpu.core_type = #tpu.core_type<tc>, window_params = [{pipeline_mode = #tpu.pipeline_mode<synchronous>, transform_indices = @transform_0, window_bounds = array<i64: 8, 1>}, {transform_indices = @transform_1, window_bounds = array<i64: 8, 8, 32>}, {transform_indices = @transform_2, window_bounds = array<i64: 1, 32, 512>}, {transform_indices = @transform_3, window_bounds = array<i64: 1, 128, 512>}, {transform_indices = @transform_4, window_bounds = array<i64: 1, 1, 512>}, {transform_indices = @transform_5, window_bounds = array<i64: 8, 8, 128>}]} {
    %c0_i32 = arith.constant 0 : i32
    %0 = arith.cmpi eq, %arg1, %c0_i32 : i32
    %1 = arith.extui %0 : i1 to i32
    %c0_i32_0 = arith.constant 0 : i32
    %2 = arith.cmpi ne, %1, %c0_i32_0 : i32
    scf.if %2 {
      %cst_226 = arith.constant 0.000000e+00 : f32
      %492 = vector.broadcast %cst_226 : f32 to vector<8x128xf32>
      %c0_227 = arith.constant 0 : index
      %c0_228 = arith.constant 0 : index
      %493 = vector.load %arg8[%c0_227, %c0_228] : memref<8x128xf32, #tpu.memory_space<vmem>>, vector<8x128xf32>
      tpu.vector_store %arg8[%c0_227, %c0_228], %492 {strides = array<i32>} : memref<8x128xf32, #tpu.memory_space<vmem>>, vector<8x128xf32>,
      %cst_229 = arith.constant 0.000000e+00 : f32
      %494 = vector.broadcast %cst_229 : f32 to vector<8x128xf32>
      %c0_230 = arith.constant 0 : index
      %c0_231 = arith.constant 0 : index
      %495 = vector.load %arg9[%c0_230, %c0_231] : memref<8x128xf32, #tpu.memory_space<vmem>>, vector<8x128xf32>
      tpu.vector_store %arg9[%c0_230, %c0_231], %494 {strides = array<i32>} : memref<8x128xf32, #tpu.memory_space<vmem>>, vector<8x128xf32>,
    } else {
    }
    %c0 = arith.constant 0 : index
    %c0_1 = arith.constant 0 : index
    %c0_2 = arith.constant 0 : index
    %3 = vector.load %arg3[%c0, %c0_1, %c0_2] : memref<8x8x32xf32, #tpu.memory_space<vmem>>, vector<8x8x32xf32>
    %4 = vector.shape_cast %3 : vector<8x8x32xf32> to vector<64x32xf32>
    %c0_3 = arith.constant 0 : index
    %c0_4 = arith.constant 0 : index
    %c0_5 = arith.constant 0 : index
    %5 = vector.load %arg4[%c0_3, %c0_4, %c0_5] : memref<1x32x512xf32, #tpu.memory_space<vmem>>, vector<1x32x512xf32>
    %6 = vector.shape_cast %5 : vector<1x32x512xf32> to vector<32x512xf32>
    %cst = arith.constant dense<0.000000e+00> : vector<64x512xf32>
    %7 = tpu.matmul %4, %6, %cst {dimension_numbers = #tpu.dot_dimension_numbers<[1], [0], [0], [1], [0, 0, 1, 1], [], []>} : vector<64x32xf32>, vector<32x512xf32>, vector<64x512xf32> -> vector<64x512xf32>
    %c0_6 = arith.constant 0 : index
    %c0_7 = arith.constant 0 : index
    %c0_8 = arith.constant 0 : index
    %8 = vector.load %arg6[%c0_6, %c0_7, %c0_8] : memref<1x1x512xf32, #tpu.memory_space<vmem>>, vector<1x1x512xf32>
    %9 = vector.shape_cast %8 : vector<1x1x512xf32> to vector<1x512xf32>
    %10 = vector.broadcast %9 : vector<1x512xf32> to vector<64x512xf32>
    %11 = arith.addf %7, %10 : vector<64x512xf32>
    %12 = vector.shape_cast %11 : vector<64x512xf32> to vector<8x8x512xf32>
    %c0_9 = arith.constant 0 : index
    %c0_10 = arith.constant 0 : index
    %c0_11 = arith.constant 0 : index
    %13 = vector.load %arg10[%c0_9, %c0_10, %c0_11] : memref<8x8x512xf32, #tpu.memory_space<vmem>>, vector<8x8x512xf32>
    tpu.vector_store %arg10[%c0_9, %c0_10, %c0_11], %12 {strides = array<i32>} : memref<8x8x512xf32, #tpu.memory_space<vmem>>, vector<8x8x512xf32>,
    %c2_i32 = arith.constant 2 : i32
    %14 = arith.muli %c2_i32, %arg1 : i32
    %c0_i32_12 = arith.constant 0 : i32
    %15 = arith.subi %c0_i32_12, %14 : i32
    %16 = arith.muli %arg0, %15 : i32
    %17 = arith.addi %arg1, %16 : i32
    %c8_i32 = arith.constant 8 : i32
    %18 = arith.muli %17, %c8_i32 : i32
    %c0_13 = arith.constant 0 : index
    %c0_14 = arith.constant 0 : index
    %19 = vector.load %arg2[%c0_13, %c0_14] : memref<8x1xi32, #tpu.memory_space<vmem>>, vector<8x1xi32>
    %c0_i32_15 = arith.constant 0 : i32
    %c2_i32_16 = arith.constant 2 : i32
    %20 = arith.muli %c2_i32_16, %c0_i32_15 : i32
    %c7_i32 = arith.constant 7 : i32
    %21 = arith.subi %c7_i32, %20 : i32
    %22 = arith.muli %arg0, %21 : i32
    %23 = arith.addi %c0_i32_15, %22 : i32
    %24 = arith.addi %18, %23 : i32
    %25 = arith.index_cast %23 : i32 to index
    %c0_17 = arith.constant 0 : index
    %c0_18 = arith.constant 0 : index
    %26 = vector.load %arg10[%25, %c0_17, %c0_18] : memref<8x8x512xf32, #tpu.memory_space<vmem>>, vector<1x8x512xf32>
    %27 = vector.shape_cast %26 : vector<1x8x512xf32> to vector<8x512xf32>
    %c0_19 = arith.constant 0 : index
    %c0_20 = arith.constant 0 : index
    %28 = vector.load %arg8[%c0_19, %c0_20] : memref<8x128xf32, #tpu.memory_space<vmem>>, vector<8x128xf32>
    %c0_21 = arith.constant 0 : index
    %c0_22 = arith.constant 0 : index
    %c0_23 = arith.constant 0 : index
    %29 = vector.load %arg5[%c0_21, %c0_22, %c0_23] : memref<1x128x512xf32, #tpu.memory_space<vmem>>, vector<1x128x512xf32>
    %30 = vector.shape_cast %29 : vector<1x128x512xf32> to vector<128x512xf32>
    %cst_24 = arith.constant dense<0.000000e+00> : vector<8x512xf32>
    %31 = tpu.matmul %28, %30, %cst_24 {dimension_numbers = #tpu.dot_dimension_numbers<[1], [0], [0], [1], [0, 0, 1, 1], [], []>} : vector<8x128xf32>, vector<128x512xf32>, vector<8x512xf32> -> vector<8x512xf32>
    %32 = arith.addf %27, %31 : vector<8x512xf32>
    %33 = vector.extract_strided_slice %32 {offsets = [0, 0], sizes = [8, 128], strides = [1, 1]} : vector<8x512xf32> to vector<8x128xf32>
    %34 = arith.negf %33 : vector<8x128xf32>
    %35 = math.exp %34 : vector<8x128xf32>
    %cst_25 = arith.constant 1.000000e+00 : f32
    %36 = vector.broadcast %cst_25 : f32 to vector<8x128xf32>
    %37 = arith.addf %36, %35 : vector<8x128xf32>
    %38 = arith.divf %36, %37 : vector<8x128xf32>
    %39 = vector.extract_strided_slice %32 {offsets = [0, 128], sizes = [8, 128], strides = [1, 1]} : vector<8x512xf32> to vector<8x128xf32>
    %40 = arith.negf %39 : vector<8x128xf32>
    %41 = math.exp %40 : vector<8x128xf32>
    %cst_26 = arith.constant 1.000000e+00 : f32
    %42 = vector.broadcast %cst_26 : f32 to vector<8x128xf32>
    %43 = arith.addf %42, %41 : vector<8x128xf32>
    %44 = arith.divf %42, %43 : vector<8x128xf32>
    %45 = vector.extract_strided_slice %32 {offsets = [0, 256], sizes = [8, 128], strides = [1, 1]} : vector<8x512xf32> to vector<8x128xf32>
    %46 = math.tanh %45 : vector<8x128xf32>
    %47 = vector.extract_strided_slice %32 {offsets = [0, 384], sizes = [8, 128], strides = [1, 1]} : vector<8x512xf32> to vector<8x128xf32>
    %48 = arith.negf %47 : vector<8x128xf32>
    %49 = math.exp %48 : vector<8x128xf32>
    %cst_27 = arith.constant 1.000000e+00 : f32
    %50 = vector.broadcast %cst_27 : f32 to vector<8x128xf32>
    %51 = arith.addf %50, %49 : vector<8x128xf32>
    %52 = arith.divf %50, %51 : vector<8x128xf32>
    %c0_28 = arith.constant 0 : index
    %c0_29 = arith.constant 0 : index
    %53 = vector.load %arg9[%c0_28, %c0_29] : memref<8x128xf32, #tpu.memory_space<vmem>>, vector<8x128xf32>
    %54 = arith.mulf %44, %53 : vector<8x128xf32>
    %55 = arith.mulf %38, %46 : vector<8x128xf32>
    %56 = arith.addf %54, %55 : vector<8x128xf32>
    %57 = math.tanh %56 : vector<8x128xf32>
    %58 = arith.mulf %52, %57 : vector<8x128xf32>
    %59 = vector.broadcast %24 : i32 to vector<8x1xi32>
    %60 = arith.cmpi slt, %59, %19 : vector<8x1xi32>
    %c0_30 = arith.constant 0 : index
    %c0_31 = arith.constant 0 : index
    %61 = vector.load %arg9[%c0_30, %c0_31] : memref<8x128xf32, #tpu.memory_space<vmem>>, vector<8x128xf32>
    %62 = vector.shape_cast %60 : vector<8x1xi1> to vector<8x1xi1>
    %63 = vector.broadcast %62 : vector<8x1xi1> to vector<8x128xi1>
    %64 = arith.select %63, %56, %61 : vector<8x128xi1>, vector<8x128xf32>
    %c0_32 = arith.constant 0 : index
    %c0_33 = arith.constant 0 : index
    %65 = vector.load %arg9[%c0_32, %c0_33] : memref<8x128xf32, #tpu.memory_space<vmem>>, vector<8x128xf32>
    tpu.vector_store %arg9[%c0_32, %c0_33], %64 {strides = array<i32>} : memref<8x128xf32, #tpu.memory_space<vmem>>, vector<8x128xf32>,
    %c0_34 = arith.constant 0 : index
    %c0_35 = arith.constant 0 : index
    %66 = vector.load %arg8[%c0_34, %c0_35] : memref<8x128xf32, #tpu.memory_space<vmem>>, vector<8x128xf32>
    %67 = vector.shape_cast %60 : vector<8x1xi1> to vector<8x1xi1>
    %68 = vector.broadcast %67 : vector<8x1xi1> to vector<8x128xi1>
    %69 = arith.select %68, %58, %66 : vector<8x128xi1>, vector<8x128xf32>
    %c0_36 = arith.constant 0 : index
    %c0_37 = arith.constant 0 : index
    %70 = vector.load %arg8[%c0_36, %c0_37] : memref<8x128xf32, #tpu.memory_space<vmem>>, vector<8x128xf32>
    tpu.vector_store %arg8[%c0_36, %c0_37], %69 {strides = array<i32>} : memref<8x128xf32, #tpu.memory_space<vmem>>, vector<8x128xf32>,
    %cst_38 = arith.constant 0.000000e+00 : f32
    %71 = vector.shape_cast %60 : vector<8x1xi1> to vector<8x1xi1>
    %72 = vector.broadcast %71 : vector<8x1xi1> to vector<8x128xi1>
    %73 = vector.broadcast %cst_38 : f32 to vector<8x128xf32>
    %74 = arith.select %72, %58, %73 : vector<8x128xi1>, vector<8x128xf32>
    %75 = arith.index_cast %23 : i32 to index
    %c0_39 = arith.constant 0 : index
    %c0_40 = arith.constant 0 : index
    %76 = vector.load %arg7[%75, %c0_39, %c0_40] : memref<8x8x128xf32, #tpu.memory_space<vmem>>, vector<1x8x128xf32>
    %77 = vector.shape_cast %76 : vector<1x8x128xf32> to vector<8x128xf32>
    %78 = vector.shape_cast %74 : vector<8x128xf32> to vector<1x8x128xf32>
    tpu.vector_store %arg7[%75, %c0_39, %c0_40], %78 {strides = array<i32>} : memref<8x8x128xf32, #tpu.memory_space<vmem>>, vector<1x8x128xf32>,
    %c1_i32 = arith.constant 1 : i32
    %c2_i32_41 = arith.constant 2 : i32
    %79 = arith.muli %c2_i32_41, %c1_i32 : i32
    %c7_i32_42 = arith.constant 7 : i32
    %80 = arith.subi %c7_i32_42, %79 : i32
    %81 = arith.muli %arg0, %80 : i32
    %82 = arith.addi %c1_i32, %81 : i32
    %83 = arith.addi %18, %82 : i32
    %84 = arith.index_cast %82 : i32 to index
    %c0_43 = arith.constant 0 : index
    %c0_44 = arith.constant 0 : index
    %85 = vector.load %arg10[%84, %c0_43, %c0_44] : memref<8x8x512xf32, #tpu.memory_space<vmem>>, vector<1x8x512xf32>
    %86 = vector.shape_cast %85 : vector<1x8x512xf32> to vector<8x512xf32>
    %c0_45 = arith.constant 0 : index
    %c0_46 = arith.constant 0 : index
    %87 = vector.load %arg8[%c0_45, %c0_46] : memref<8x128xf32, #tpu.memory_space<vmem>>, vector<8x128xf32>
    %c0_47 = arith.constant 0 : index
    %c0_48 = arith.constant 0 : index
    %c0_49 = arith.constant 0 : index
    %88 = vector.load %arg5[%c0_47, %c0_48, %c0_49] : memref<1x128x512xf32, #tpu.memory_space<vmem>>, vector<1x128x512xf32>
    %89 = vector.shape_cast %88 : vector<1x128x512xf32> to vector<128x512xf32>
    %cst_50 = arith.constant dense<0.000000e+00> : vector<8x512xf32>
    %90 = tpu.matmul %87, %89, %cst_50 {dimension_numbers = #tpu.dot_dimension_numbers<[1], [0], [0], [1], [0, 0, 1, 1], [], []>} : vector<8x128xf32>, vector<128x512xf32>, vector<8x512xf32> -> vector<8x512xf32>
    %91 = arith.addf %86, %90 : vector<8x512xf32>
    %92 = vector.extract_strided_slice %91 {offsets = [0, 0], sizes = [8, 128], strides = [1, 1]} : vector<8x512xf32> to vector<8x128xf32>
    %93 = arith.negf %92 : vector<8x128xf32>
    %94 = math.exp %93 : vector<8x128xf32>
    %cst_51 = arith.constant 1.000000e+00 : f32
    %95 = vector.broadcast %cst_51 : f32 to vector<8x128xf32>
    %96 = arith.addf %95, %94 : vector<8x128xf32>
    %97 = arith.divf %95, %96 : vector<8x128xf32>
    %98 = vector.extract_strided_slice %91 {offsets = [0, 128], sizes = [8, 128], strides = [1, 1]} : vector<8x512xf32> to vector<8x128xf32>
    %99 = arith.negf %98 : vector<8x128xf32>
    %100 = math.exp %99 : vector<8x128xf32>
    %cst_52 = arith.constant 1.000000e+00 : f32
    %101 = vector.broadcast %cst_52 : f32 to vector<8x128xf32>
    %102 = arith.addf %101, %100 : vector<8x128xf32>
    %103 = arith.divf %101, %102 : vector<8x128xf32>
    %104 = vector.extract_strided_slice %91 {offsets = [0, 256], sizes = [8, 128], strides = [1, 1]} : vector<8x512xf32> to vector<8x128xf32>
    %105 = math.tanh %104 : vector<8x128xf32>
    %106 = vector.extract_strided_slice %91 {offsets = [0, 384], sizes = [8, 128], strides = [1, 1]} : vector<8x512xf32> to vector<8x128xf32>
    %107 = arith.negf %106 : vector<8x128xf32>
    %108 = math.exp %107 : vector<8x128xf32>
    %cst_53 = arith.constant 1.000000e+00 : f32
    %109 = vector.broadcast %cst_53 : f32 to vector<8x128xf32>
    %110 = arith.addf %109, %108 : vector<8x128xf32>
    %111 = arith.divf %109, %110 : vector<8x128xf32>
    %c0_54 = arith.constant 0 : index
    %c0_55 = arith.constant 0 : index
    %112 = vector.load %arg9[%c0_54, %c0_55] : memref<8x128xf32, #tpu.memory_space<vmem>>, vector<8x128xf32>
    %113 = arith.mulf %103, %112 : vector<8x128xf32>
    %114 = arith.mulf %97, %105 : vector<8x128xf32>
    %115 = arith.addf %113, %114 : vector<8x128xf32>
    %116 = math.tanh %115 : vector<8x128xf32>
    %117 = arith.mulf %111, %116 : vector<8x128xf32>
    %118 = vector.broadcast %83 : i32 to vector<8x1xi32>
    %119 = arith.cmpi slt, %118, %19 : vector<8x1xi32>
    %c0_56 = arith.constant 0 : index
    %c0_57 = arith.constant 0 : index
    %120 = vector.load %arg9[%c0_56, %c0_57] : memref<8x128xf32, #tpu.memory_space<vmem>>, vector<8x128xf32>
    %121 = vector.shape_cast %119 : vector<8x1xi1> to vector<8x1xi1>
    %122 = vector.broadcast %121 : vector<8x1xi1> to vector<8x128xi1>
    %123 = arith.select %122, %115, %120 : vector<8x128xi1>, vector<8x128xf32>
    %c0_58 = arith.constant 0 : index
    %c0_59 = arith.constant 0 : index
    %124 = vector.load %arg9[%c0_58, %c0_59] : memref<8x128xf32, #tpu.memory_space<vmem>>, vector<8x128xf32>
    tpu.vector_store %arg9[%c0_58, %c0_59], %123 {strides = array<i32>} : memref<8x128xf32, #tpu.memory_space<vmem>>, vector<8x128xf32>,
    %c0_60 = arith.constant 0 : index
    %c0_61 = arith.constant 0 : index
    %125 = vector.load %arg8[%c0_60, %c0_61] : memref<8x128xf32, #tpu.memory_space<vmem>>, vector<8x128xf32>
    %126 = vector.shape_cast %119 : vector<8x1xi1> to vector<8x1xi1>
    %127 = vector.broadcast %126 : vector<8x1xi1> to vector<8x128xi1>
    %128 = arith.select %127, %117, %125 : vector<8x128xi1>, vector<8x128xf32>
    %c0_62 = arith.constant 0 : index
    %c0_63 = arith.constant 0 : index
    %129 = vector.load %arg8[%c0_62, %c0_63] : memref<8x128xf32, #tpu.memory_space<vmem>>, vector<8x128xf32>
    tpu.vector_store %arg8[%c0_62, %c0_63], %128 {strides = array<i32>} : memref<8x128xf32, #tpu.memory_space<vmem>>, vector<8x128xf32>,
    %cst_64 = arith.constant 0.000000e+00 : f32
    %130 = vector.shape_cast %119 : vector<8x1xi1> to vector<8x1xi1>
    %131 = vector.broadcast %130 : vector<8x1xi1> to vector<8x128xi1>
    %132 = vector.broadcast %cst_64 : f32 to vector<8x128xf32>
    %133 = arith.select %131, %117, %132 : vector<8x128xi1>, vector<8x128xf32>
    %134 = arith.index_cast %82 : i32 to index
    %c0_65 = arith.constant 0 : index
    %c0_66 = arith.constant 0 : index
    %135 = vector.load %arg7[%134, %c0_65, %c0_66] : memref<8x8x128xf32, #tpu.memory_space<vmem>>, vector<1x8x128xf32>
    %136 = vector.shape_cast %135 : vector<1x8x128xf32> to vector<8x128xf32>
    %137 = vector.shape_cast %133 : vector<8x128xf32> to vector<1x8x128xf32>
    tpu.vector_store %arg7[%134, %c0_65, %c0_66], %137 {strides = array<i32>} : memref<8x8x128xf32, #tpu.memory_space<vmem>>, vector<1x8x128xf32>,
    %c2_i32_67 = arith.constant 2 : i32
    %c2_i32_68 = arith.constant 2 : i32
    %138 = arith.muli %c2_i32_68, %c2_i32_67 : i32
    %c7_i32_69 = arith.constant 7 : i32
    %139 = arith.subi %c7_i32_69, %138 : i32
    %140 = arith.muli %arg0, %139 : i32
    %141 = arith.addi %c2_i32_67, %140 : i32
    %142 = arith.addi %18, %141 : i32
    %143 = arith.index_cast %141 : i32 to index
    %c0_70 = arith.constant 0 : index
    %c0_71 = arith.constant 0 : index
    %144 = vector.load %arg10[%143, %c0_70, %c0_71] : memref<8x8x512xf32, #tpu.memory_space<vmem>>, vector<1x8x512xf32>
    %145 = vector.shape_cast %144 : vector<1x8x512xf32> to vector<8x512xf32>
    %c0_72 = arith.constant 0 : index
    %c0_73 = arith.constant 0 : index
    %146 = vector.load %arg8[%c0_72, %c0_73] : memref<8x128xf32, #tpu.memory_space<vmem>>, vector<8x128xf32>
    %c0_74 = arith.constant 0 : index
    %c0_75 = arith.constant 0 : index
    %c0_76 = arith.constant 0 : index
    %147 = vector.load %arg5[%c0_74, %c0_75, %c0_76] : memref<1x128x512xf32, #tpu.memory_space<vmem>>, vector<1x128x512xf32>
    %148 = vector.shape_cast %147 : vector<1x128x512xf32> to vector<128x512xf32>
    %cst_77 = arith.constant dense<0.000000e+00> : vector<8x512xf32>
    %149 = tpu.matmul %146, %148, %cst_77 {dimension_numbers = #tpu.dot_dimension_numbers<[1], [0], [0], [1], [0, 0, 1, 1], [], []>} : vector<8x128xf32>, vector<128x512xf32>, vector<8x512xf32> -> vector<8x512xf32>
    %150 = arith.addf %145, %149 : vector<8x512xf32>
    %151 = vector.extract_strided_slice %150 {offsets = [0, 0], sizes = [8, 128], strides = [1, 1]} : vector<8x512xf32> to vector<8x128xf32>
    %152 = arith.negf %151 : vector<8x128xf32>
    %153 = math.exp %152 : vector<8x128xf32>
    %cst_78 = arith.constant 1.000000e+00 : f32
    %154 = vector.broadcast %cst_78 : f32 to vector<8x128xf32>
    %155 = arith.addf %154, %153 : vector<8x128xf32>
    %156 = arith.divf %154, %155 : vector<8x128xf32>
    %157 = vector.extract_strided_slice %150 {offsets = [0, 128], sizes = [8, 128], strides = [1, 1]} : vector<8x512xf32> to vector<8x128xf32>
    %158 = arith.negf %157 : vector<8x128xf32>
    %159 = math.exp %158 : vector<8x128xf32>
    %cst_79 = arith.constant 1.000000e+00 : f32
    %160 = vector.broadcast %cst_79 : f32 to vector<8x128xf32>
    %161 = arith.addf %160, %159 : vector<8x128xf32>
    %162 = arith.divf %160, %161 : vector<8x128xf32>
    %163 = vector.extract_strided_slice %150 {offsets = [0, 256], sizes = [8, 128], strides = [1, 1]} : vector<8x512xf32> to vector<8x128xf32>
    %164 = math.tanh %163 : vector<8x128xf32>
    %165 = vector.extract_strided_slice %150 {offsets = [0, 384], sizes = [8, 128], strides = [1, 1]} : vector<8x512xf32> to vector<8x128xf32>
    %166 = arith.negf %165 : vector<8x128xf32>
    %167 = math.exp %166 : vector<8x128xf32>
    %cst_80 = arith.constant 1.000000e+00 : f32
    %168 = vector.broadcast %cst_80 : f32 to vector<8x128xf32>
    %169 = arith.addf %168, %167 : vector<8x128xf32>
    %170 = arith.divf %168, %169 : vector<8x128xf32>
    %c0_81 = arith.constant 0 : index
    %c0_82 = arith.constant 0 : index
    %171 = vector.load %arg9[%c0_81, %c0_82] : memref<8x128xf32, #tpu.memory_space<vmem>>, vector<8x128xf32>
    %172 = arith.mulf %162, %171 : vector<8x128xf32>
    %173 = arith.mulf %156, %164 : vector<8x128xf32>
    %174 = arith.addf %172, %173 : vector<8x128xf32>
    %175 = math.tanh %174 : vector<8x128xf32>
    %176 = arith.mulf %170, %175 : vector<8x128xf32>
    %177 = vector.broadcast %142 : i32 to vector<8x1xi32>
    %178 = arith.cmpi slt, %177, %19 : vector<8x1xi32>
    %c0_83 = arith.constant 0 : index
    %c0_84 = arith.constant 0 : index
    %179 = vector.load %arg9[%c0_83, %c0_84] : memref<8x128xf32, #tpu.memory_space<vmem>>, vector<8x128xf32>
    %180 = vector.shape_cast %178 : vector<8x1xi1> to vector<8x1xi1>
    %181 = vector.broadcast %180 : vector<8x1xi1> to vector<8x128xi1>
    %182 = arith.select %181, %174, %179 : vector<8x128xi1>, vector<8x128xf32>
    %c0_85 = arith.constant 0 : index
    %c0_86 = arith.constant 0 : index
    %183 = vector.load %arg9[%c0_85, %c0_86] : memref<8x128xf32, #tpu.memory_space<vmem>>, vector<8x128xf32>
    tpu.vector_store %arg9[%c0_85, %c0_86], %182 {strides = array<i32>} : memref<8x128xf32, #tpu.memory_space<vmem>>, vector<8x128xf32>,
    %c0_87 = arith.constant 0 : index
    %c0_88 = arith.constant 0 : index
    %184 = vector.load %arg8[%c0_87, %c0_88] : memref<8x128xf32, #tpu.memory_space<vmem>>, vector<8x128xf32>
    %185 = vector.shape_cast %178 : vector<8x1xi1> to vector<8x1xi1>
    %186 = vector.broadcast %185 : vector<8x1xi1> to vector<8x128xi1>
    %187 = arith.select %186, %176, %184 : vector<8x128xi1>, vector<8x128xf32>
    %c0_89 = arith.constant 0 : index
    %c0_90 = arith.constant 0 : index
    %188 = vector.load %arg8[%c0_89, %c0_90] : memref<8x128xf32, #tpu.memory_space<vmem>>, vector<8x128xf32>
    tpu.vector_store %arg8[%c0_89, %c0_90], %187 {strides = array<i32>} : memref<8x128xf32, #tpu.memory_space<vmem>>, vector<8x128xf32>,
    %cst_91 = arith.constant 0.000000e+00 : f32
    %189 = vector.shape_cast %178 : vector<8x1xi1> to vector<8x1xi1>
    %190 = vector.broadcast %189 : vector<8x1xi1> to vector<8x128xi1>
    %191 = vector.broadcast %cst_91 : f32 to vector<8x128xf32>
    %192 = arith.select %190, %176, %191 : vector<8x128xi1>, vector<8x128xf32>
    %193 = arith.index_cast %141 : i32 to index
    %c0_92 = arith.constant 0 : index
    %c0_93 = arith.constant 0 : index
    %194 = vector.load %arg7[%193, %c0_92, %c0_93] : memref<8x8x128xf32, #tpu.memory_space<vmem>>, vector<1x8x128xf32>
    %195 = vector.shape_cast %194 : vector<1x8x128xf32> to vector<8x128xf32>
    %196 = vector.shape_cast %192 : vector<8x128xf32> to vector<1x8x128xf32>
    tpu.vector_store %arg7[%193, %c0_92, %c0_93], %196 {strides = array<i32>} : memref<8x8x128xf32, #tpu.memory_space<vmem>>, vector<1x8x128xf32>,
    %c3_i32 = arith.constant 3 : i32
    %c2_i32_94 = arith.constant 2 : i32
    %197 = arith.muli %c2_i32_94, %c3_i32 : i32
    %c7_i32_95 = arith.constant 7 : i32
    %198 = arith.subi %c7_i32_95, %197 : i32
    %199 = arith.muli %arg0, %198 : i32
    %200 = arith.addi %c3_i32, %199 : i32
    %201 = arith.addi %18, %200 : i32
    %202 = arith.index_cast %200 : i32 to index
    %c0_96 = arith.constant 0 : index
    %c0_97 = arith.constant 0 : index
    %203 = vector.load %arg10[%202, %c0_96, %c0_97] : memref<8x8x512xf32, #tpu.memory_space<vmem>>, vector<1x8x512xf32>
    %204 = vector.shape_cast %203 : vector<1x8x512xf32> to vector<8x512xf32>
    %c0_98 = arith.constant 0 : index
    %c0_99 = arith.constant 0 : index
    %205 = vector.load %arg8[%c0_98, %c0_99] : memref<8x128xf32, #tpu.memory_space<vmem>>, vector<8x128xf32>
    %c0_100 = arith.constant 0 : index
    %c0_101 = arith.constant 0 : index
    %c0_102 = arith.constant 0 : index
    %206 = vector.load %arg5[%c0_100, %c0_101, %c0_102] : memref<1x128x512xf32, #tpu.memory_space<vmem>>, vector<1x128x512xf32>
    %207 = vector.shape_cast %206 : vector<1x128x512xf32> to vector<128x512xf32>
    %cst_103 = arith.constant dense<0.000000e+00> : vector<8x512xf32>
    %208 = tpu.matmul %205, %207, %cst_103 {dimension_numbers = #tpu.dot_dimension_numbers<[1], [0], [0], [1], [0, 0, 1, 1], [], []>} : vector<8x128xf32>, vector<128x512xf32>, vector<8x512xf32> -> vector<8x512xf32>
    %209 = arith.addf %204, %208 : vector<8x512xf32>
    %210 = vector.extract_strided_slice %209 {offsets = [0, 0], sizes = [8, 128], strides = [1, 1]} : vector<8x512xf32> to vector<8x128xf32>
    %211 = arith.negf %210 : vector<8x128xf32>
    %212 = math.exp %211 : vector<8x128xf32>
    %cst_104 = arith.constant 1.000000e+00 : f32
    %213 = vector.broadcast %cst_104 : f32 to vector<8x128xf32>
    %214 = arith.addf %213, %212 : vector<8x128xf32>
    %215 = arith.divf %213, %214 : vector<8x128xf32>
    %216 = vector.extract_strided_slice %209 {offsets = [0, 128], sizes = [8, 128], strides = [1, 1]} : vector<8x512xf32> to vector<8x128xf32>
    %217 = arith.negf %216 : vector<8x128xf32>
    %218 = math.exp %217 : vector<8x128xf32>
    %cst_105 = arith.constant 1.000000e+00 : f32
    %219 = vector.broadcast %cst_105 : f32 to vector<8x128xf32>
    %220 = arith.addf %219, %218 : vector<8x128xf32>
    %221 = arith.divf %219, %220 : vector<8x128xf32>
    %222 = vector.extract_strided_slice %209 {offsets = [0, 256], sizes = [8, 128], strides = [1, 1]} : vector<8x512xf32> to vector<8x128xf32>
    %223 = math.tanh %222 : vector<8x128xf32>
    %224 = vector.extract_strided_slice %209 {offsets = [0, 384], sizes = [8, 128], strides = [1, 1]} : vector<8x512xf32> to vector<8x128xf32>
    %225 = arith.negf %224 : vector<8x128xf32>
    %226 = math.exp %225 : vector<8x128xf32>
    %cst_106 = arith.constant 1.000000e+00 : f32
    %227 = vector.broadcast %cst_106 : f32 to vector<8x128xf32>
    %228 = arith.addf %227, %226 : vector<8x128xf32>
    %229 = arith.divf %227, %228 : vector<8x128xf32>
    %c0_107 = arith.constant 0 : index
    %c0_108 = arith.constant 0 : index
    %230 = vector.load %arg9[%c0_107, %c0_108] : memref<8x128xf32, #tpu.memory_space<vmem>>, vector<8x128xf32>
    %231 = arith.mulf %221, %230 : vector<8x128xf32>
    %232 = arith.mulf %215, %223 : vector<8x128xf32>
    %233 = arith.addf %231, %232 : vector<8x128xf32>
    %234 = math.tanh %233 : vector<8x128xf32>
    %235 = arith.mulf %229, %234 : vector<8x128xf32>
    %236 = vector.broadcast %201 : i32 to vector<8x1xi32>
    %237 = arith.cmpi slt, %236, %19 : vector<8x1xi32>
    %c0_109 = arith.constant 0 : index
    %c0_110 = arith.constant 0 : index
    %238 = vector.load %arg9[%c0_109, %c0_110] : memref<8x128xf32, #tpu.memory_space<vmem>>, vector<8x128xf32>
    %239 = vector.shape_cast %237 : vector<8x1xi1> to vector<8x1xi1>
    %240 = vector.broadcast %239 : vector<8x1xi1> to vector<8x128xi1>
    %241 = arith.select %240, %233, %238 : vector<8x128xi1>, vector<8x128xf32>
    %c0_111 = arith.constant 0 : index
    %c0_112 = arith.constant 0 : index
    %242 = vector.load %arg9[%c0_111, %c0_112] : memref<8x128xf32, #tpu.memory_space<vmem>>, vector<8x128xf32>
    tpu.vector_store %arg9[%c0_111, %c0_112], %241 {strides = array<i32>} : memref<8x128xf32, #tpu.memory_space<vmem>>, vector<8x128xf32>,
    %c0_113 = arith.constant 0 : index
    %c0_114 = arith.constant 0 : index
    %243 = vector.load %arg8[%c0_113, %c0_114] : memref<8x128xf32, #tpu.memory_space<vmem>>, vector<8x128xf32>
    %244 = vector.shape_cast %237 : vector<8x1xi1> to vector<8x1xi1>
    %245 = vector.broadcast %244 : vector<8x1xi1> to vector<8x128xi1>
    %246 = arith.select %245, %235, %243 : vector<8x128xi1>, vector<8x128xf32>
    %c0_115 = arith.constant 0 : index
    %c0_116 = arith.constant 0 : index
    %247 = vector.load %arg8[%c0_115, %c0_116] : memref<8x128xf32, #tpu.memory_space<vmem>>, vector<8x128xf32>
    tpu.vector_store %arg8[%c0_115, %c0_116], %246 {strides = array<i32>} : memref<8x128xf32, #tpu.memory_space<vmem>>, vector<8x128xf32>,
    %cst_117 = arith.constant 0.000000e+00 : f32
    %248 = vector.shape_cast %237 : vector<8x1xi1> to vector<8x1xi1>
    %249 = vector.broadcast %248 : vector<8x1xi1> to vector<8x128xi1>
    %250 = vector.broadcast %cst_117 : f32 to vector<8x128xf32>
    %251 = arith.select %249, %235, %250 : vector<8x128xi1>, vector<8x128xf32>
    %252 = arith.index_cast %200 : i32 to index
    %c0_118 = arith.constant 0 : index
    %c0_119 = arith.constant 0 : index
    %253 = vector.load %arg7[%252, %c0_118, %c0_119] : memref<8x8x128xf32, #tpu.memory_space<vmem>>, vector<1x8x128xf32>
    %254 = vector.shape_cast %253 : vector<1x8x128xf32> to vector<8x128xf32>
    %255 = vector.shape_cast %251 : vector<8x128xf32> to vector<1x8x128xf32>
    tpu.vector_store %arg7[%252, %c0_118, %c0_119], %255 {strides = array<i32>} : memref<8x8x128xf32, #tpu.memory_space<vmem>>, vector<1x8x128xf32>,
    %c4_i32 = arith.constant 4 : i32
    %c2_i32_120 = arith.constant 2 : i32
    %256 = arith.muli %c2_i32_120, %c4_i32 : i32
    %c7_i32_121 = arith.constant 7 : i32
    %257 = arith.subi %c7_i32_121, %256 : i32
    %258 = arith.muli %arg0, %257 : i32
    %259 = arith.addi %c4_i32, %258 : i32
    %260 = arith.addi %18, %259 : i32
    %261 = arith.index_cast %259 : i32 to index
    %c0_122 = arith.constant 0 : index
    %c0_123 = arith.constant 0 : index
    %262 = vector.load %arg10[%261, %c0_122, %c0_123] : memref<8x8x512xf32, #tpu.memory_space<vmem>>, vector<1x8x512xf32>
    %263 = vector.shape_cast %262 : vector<1x8x512xf32> to vector<8x512xf32>
    %c0_124 = arith.constant 0 : index
    %c0_125 = arith.constant 0 : index
    %264 = vector.load %arg8[%c0_124, %c0_125] : memref<8x128xf32, #tpu.memory_space<vmem>>, vector<8x128xf32>
    %c0_126 = arith.constant 0 : index
    %c0_127 = arith.constant 0 : index
    %c0_128 = arith.constant 0 : index
    %265 = vector.load %arg5[%c0_126, %c0_127, %c0_128] : memref<1x128x512xf32, #tpu.memory_space<vmem>>, vector<1x128x512xf32>
    %266 = vector.shape_cast %265 : vector<1x128x512xf32> to vector<128x512xf32>
    %cst_129 = arith.constant dense<0.000000e+00> : vector<8x512xf32>
    %267 = tpu.matmul %264, %266, %cst_129 {dimension_numbers = #tpu.dot_dimension_numbers<[1], [0], [0], [1], [0, 0, 1, 1], [], []>} : vector<8x128xf32>, vector<128x512xf32>, vector<8x512xf32> -> vector<8x512xf32>
    %268 = arith.addf %263, %267 : vector<8x512xf32>
    %269 = vector.extract_strided_slice %268 {offsets = [0, 0], sizes = [8, 128], strides = [1, 1]} : vector<8x512xf32> to vector<8x128xf32>
    %270 = arith.negf %269 : vector<8x128xf32>
    %271 = math.exp %270 : vector<8x128xf32>
    %cst_130 = arith.constant 1.000000e+00 : f32
    %272 = vector.broadcast %cst_130 : f32 to vector<8x128xf32>
    %273 = arith.addf %272, %271 : vector<8x128xf32>
    %274 = arith.divf %272, %273 : vector<8x128xf32>
    %275 = vector.extract_strided_slice %268 {offsets = [0, 128], sizes = [8, 128], strides = [1, 1]} : vector<8x512xf32> to vector<8x128xf32>
    %276 = arith.negf %275 : vector<8x128xf32>
    %277 = math.exp %276 : vector<8x128xf32>
    %cst_131 = arith.constant 1.000000e+00 : f32
    %278 = vector.broadcast %cst_131 : f32 to vector<8x128xf32>
    %279 = arith.addf %278, %277 : vector<8x128xf32>
    %280 = arith.divf %278, %279 : vector<8x128xf32>
    %281 = vector.extract_strided_slice %268 {offsets = [0, 256], sizes = [8, 128], strides = [1, 1]} : vector<8x512xf32> to vector<8x128xf32>
    %282 = math.tanh %281 : vector<8x128xf32>
    %283 = vector.extract_strided_slice %268 {offsets = [0, 384], sizes = [8, 128], strides = [1, 1]} : vector<8x512xf32> to vector<8x128xf32>
    %284 = arith.negf %283 : vector<8x128xf32>
    %285 = math.exp %284 : vector<8x128xf32>
    %cst_132 = arith.constant 1.000000e+00 : f32
    %286 = vector.broadcast %cst_132 : f32 to vector<8x128xf32>
    %287 = arith.addf %286, %285 : vector<8x128xf32>
    %288 = arith.divf %286, %287 : vector<8x128xf32>
    %c0_133 = arith.constant 0 : index
    %c0_134 = arith.constant 0 : index
    %289 = vector.load %arg9[%c0_133, %c0_134] : memref<8x128xf32, #tpu.memory_space<vmem>>, vector<8x128xf32>
    %290 = arith.mulf %280, %289 : vector<8x128xf32>
    %291 = arith.mulf %274, %282 : vector<8x128xf32>
    %292 = arith.addf %290, %291 : vector<8x128xf32>
    %293 = math.tanh %292 : vector<8x128xf32>
    %294 = arith.mulf %288, %293 : vector<8x128xf32>
    %295 = vector.broadcast %260 : i32 to vector<8x1xi32>
    %296 = arith.cmpi slt, %295, %19 : vector<8x1xi32>
    %c0_135 = arith.constant 0 : index
    %c0_136 = arith.constant 0 : index
    %297 = vector.load %arg9[%c0_135, %c0_136] : memref<8x128xf32, #tpu.memory_space<vmem>>, vector<8x128xf32>
    %298 = vector.shape_cast %296 : vector<8x1xi1> to vector<8x1xi1>
    %299 = vector.broadcast %298 : vector<8x1xi1> to vector<8x128xi1>
    %300 = arith.select %299, %292, %297 : vector<8x128xi1>, vector<8x128xf32>
    %c0_137 = arith.constant 0 : index
    %c0_138 = arith.constant 0 : index
    %301 = vector.load %arg9[%c0_137, %c0_138] : memref<8x128xf32, #tpu.memory_space<vmem>>, vector<8x128xf32>
    tpu.vector_store %arg9[%c0_137, %c0_138], %300 {strides = array<i32>} : memref<8x128xf32, #tpu.memory_space<vmem>>, vector<8x128xf32>,
    %c0_139 = arith.constant 0 : index
    %c0_140 = arith.constant 0 : index
    %302 = vector.load %arg8[%c0_139, %c0_140] : memref<8x128xf32, #tpu.memory_space<vmem>>, vector<8x128xf32>
    %303 = vector.shape_cast %296 : vector<8x1xi1> to vector<8x1xi1>
    %304 = vector.broadcast %303 : vector<8x1xi1> to vector<8x128xi1>
    %305 = arith.select %304, %294, %302 : vector<8x128xi1>, vector<8x128xf32>
    %c0_141 = arith.constant 0 : index
    %c0_142 = arith.constant 0 : index
    %306 = vector.load %arg8[%c0_141, %c0_142] : memref<8x128xf32, #tpu.memory_space<vmem>>, vector<8x128xf32>
    tpu.vector_store %arg8[%c0_141, %c0_142], %305 {strides = array<i32>} : memref<8x128xf32, #tpu.memory_space<vmem>>, vector<8x128xf32>,
    %cst_143 = arith.constant 0.000000e+00 : f32
    %307 = vector.shape_cast %296 : vector<8x1xi1> to vector<8x1xi1>
    %308 = vector.broadcast %307 : vector<8x1xi1> to vector<8x128xi1>
    %309 = vector.broadcast %cst_143 : f32 to vector<8x128xf32>
    %310 = arith.select %308, %294, %309 : vector<8x128xi1>, vector<8x128xf32>
    %311 = arith.index_cast %259 : i32 to index
    %c0_144 = arith.constant 0 : index
    %c0_145 = arith.constant 0 : index
    %312 = vector.load %arg7[%311, %c0_144, %c0_145] : memref<8x8x128xf32, #tpu.memory_space<vmem>>, vector<1x8x128xf32>
    %313 = vector.shape_cast %312 : vector<1x8x128xf32> to vector<8x128xf32>
    %314 = vector.shape_cast %310 : vector<8x128xf32> to vector<1x8x128xf32>
    tpu.vector_store %arg7[%311, %c0_144, %c0_145], %314 {strides = array<i32>} : memref<8x8x128xf32, #tpu.memory_space<vmem>>, vector<1x8x128xf32>,
    %c5_i32 = arith.constant 5 : i32
    %c2_i32_146 = arith.constant 2 : i32
    %315 = arith.muli %c2_i32_146, %c5_i32 : i32
    %c7_i32_147 = arith.constant 7 : i32
    %316 = arith.subi %c7_i32_147, %315 : i32
    %317 = arith.muli %arg0, %316 : i32
    %318 = arith.addi %c5_i32, %317 : i32
    %319 = arith.addi %18, %318 : i32
    %320 = arith.index_cast %318 : i32 to index
    %c0_148 = arith.constant 0 : index
    %c0_149 = arith.constant 0 : index
    %321 = vector.load %arg10[%320, %c0_148, %c0_149] : memref<8x8x512xf32, #tpu.memory_space<vmem>>, vector<1x8x512xf32>
    %322 = vector.shape_cast %321 : vector<1x8x512xf32> to vector<8x512xf32>
    %c0_150 = arith.constant 0 : index
    %c0_151 = arith.constant 0 : index
    %323 = vector.load %arg8[%c0_150, %c0_151] : memref<8x128xf32, #tpu.memory_space<vmem>>, vector<8x128xf32>
    %c0_152 = arith.constant 0 : index
    %c0_153 = arith.constant 0 : index
    %c0_154 = arith.constant 0 : index
    %324 = vector.load %arg5[%c0_152, %c0_153, %c0_154] : memref<1x128x512xf32, #tpu.memory_space<vmem>>, vector<1x128x512xf32>
    %325 = vector.shape_cast %324 : vector<1x128x512xf32> to vector<128x512xf32>
    %cst_155 = arith.constant dense<0.000000e+00> : vector<8x512xf32>
    %326 = tpu.matmul %323, %325, %cst_155 {dimension_numbers = #tpu.dot_dimension_numbers<[1], [0], [0], [1], [0, 0, 1, 1], [], []>} : vector<8x128xf32>, vector<128x512xf32>, vector<8x512xf32> -> vector<8x512xf32>
    %327 = arith.addf %322, %326 : vector<8x512xf32>
    %328 = vector.extract_strided_slice %327 {offsets = [0, 0], sizes = [8, 128], strides = [1, 1]} : vector<8x512xf32> to vector<8x128xf32>
    %329 = arith.negf %328 : vector<8x128xf32>
    %330 = math.exp %329 : vector<8x128xf32>
    %cst_156 = arith.constant 1.000000e+00 : f32
    %331 = vector.broadcast %cst_156 : f32 to vector<8x128xf32>
    %332 = arith.addf %331, %330 : vector<8x128xf32>
    %333 = arith.divf %331, %332 : vector<8x128xf32>
    %334 = vector.extract_strided_slice %327 {offsets = [0, 128], sizes = [8, 128], strides = [1, 1]} : vector<8x512xf32> to vector<8x128xf32>
    %335 = arith.negf %334 : vector<8x128xf32>
    %336 = math.exp %335 : vector<8x128xf32>
    %cst_157 = arith.constant 1.000000e+00 : f32
    %337 = vector.broadcast %cst_157 : f32 to vector<8x128xf32>
    %338 = arith.addf %337, %336 : vector<8x128xf32>
    %339 = arith.divf %337, %338 : vector<8x128xf32>
    %340 = vector.extract_strided_slice %327 {offsets = [0, 256], sizes = [8, 128], strides = [1, 1]} : vector<8x512xf32> to vector<8x128xf32>
    %341 = math.tanh %340 : vector<8x128xf32>
    %342 = vector.extract_strided_slice %327 {offsets = [0, 384], sizes = [8, 128], strides = [1, 1]} : vector<8x512xf32> to vector<8x128xf32>
    %343 = arith.negf %342 : vector<8x128xf32>
    %344 = math.exp %343 : vector<8x128xf32>
    %cst_158 = arith.constant 1.000000e+00 : f32
    %345 = vector.broadcast %cst_158 : f32 to vector<8x128xf32>
    %346 = arith.addf %345, %344 : vector<8x128xf32>
    %347 = arith.divf %345, %346 : vector<8x128xf32>
    %c0_159 = arith.constant 0 : index
    %c0_160 = arith.constant 0 : index
    %348 = vector.load %arg9[%c0_159, %c0_160] : memref<8x128xf32, #tpu.memory_space<vmem>>, vector<8x128xf32>
    %349 = arith.mulf %339, %348 : vector<8x128xf32>
    %350 = arith.mulf %333, %341 : vector<8x128xf32>
    %351 = arith.addf %349, %350 : vector<8x128xf32>
    %352 = math.tanh %351 : vector<8x128xf32>
    %353 = arith.mulf %347, %352 : vector<8x128xf32>
    %354 = vector.broadcast %319 : i32 to vector<8x1xi32>
    %355 = arith.cmpi slt, %354, %19 : vector<8x1xi32>
    %c0_161 = arith.constant 0 : index
    %c0_162 = arith.constant 0 : index
    %356 = vector.load %arg9[%c0_161, %c0_162] : memref<8x128xf32, #tpu.memory_space<vmem>>, vector<8x128xf32>
    %357 = vector.shape_cast %355 : vector<8x1xi1> to vector<8x1xi1>
    %358 = vector.broadcast %357 : vector<8x1xi1> to vector<8x128xi1>
    %359 = arith.select %358, %351, %356 : vector<8x128xi1>, vector<8x128xf32>
    %c0_163 = arith.constant 0 : index
    %c0_164 = arith.constant 0 : index
    %360 = vector.load %arg9[%c0_163, %c0_164] : memref<8x128xf32, #tpu.memory_space<vmem>>, vector<8x128xf32>
    tpu.vector_store %arg9[%c0_163, %c0_164], %359 {strides = array<i32>} : memref<8x128xf32, #tpu.memory_space<vmem>>, vector<8x128xf32>,
    %c0_165 = arith.constant 0 : index
    %c0_166 = arith.constant 0 : index
    %361 = vector.load %arg8[%c0_165, %c0_166] : memref<8x128xf32, #tpu.memory_space<vmem>>, vector<8x128xf32>
    %362 = vector.shape_cast %355 : vector<8x1xi1> to vector<8x1xi1>
    %363 = vector.broadcast %362 : vector<8x1xi1> to vector<8x128xi1>
    %364 = arith.select %363, %353, %361 : vector<8x128xi1>, vector<8x128xf32>
    %c0_167 = arith.constant 0 : index
    %c0_168 = arith.constant 0 : index
    %365 = vector.load %arg8[%c0_167, %c0_168] : memref<8x128xf32, #tpu.memory_space<vmem>>, vector<8x128xf32>
    tpu.vector_store %arg8[%c0_167, %c0_168], %364 {strides = array<i32>} : memref<8x128xf32, #tpu.memory_space<vmem>>, vector<8x128xf32>,
    %cst_169 = arith.constant 0.000000e+00 : f32
    %366 = vector.shape_cast %355 : vector<8x1xi1> to vector<8x1xi1>
    %367 = vector.broadcast %366 : vector<8x1xi1> to vector<8x128xi1>
    %368 = vector.broadcast %cst_169 : f32 to vector<8x128xf32>
    %369 = arith.select %367, %353, %368 : vector<8x128xi1>, vector<8x128xf32>
    %370 = arith.index_cast %318 : i32 to index
    %c0_170 = arith.constant 0 : index
    %c0_171 = arith.constant 0 : index
    %371 = vector.load %arg7[%370, %c0_170, %c0_171] : memref<8x8x128xf32, #tpu.memory_space<vmem>>, vector<1x8x128xf32>
    %372 = vector.shape_cast %371 : vector<1x8x128xf32> to vector<8x128xf32>
    %373 = vector.shape_cast %369 : vector<8x128xf32> to vector<1x8x128xf32>
    tpu.vector_store %arg7[%370, %c0_170, %c0_171], %373 {strides = array<i32>} : memref<8x8x128xf32, #tpu.memory_space<vmem>>, vector<1x8x128xf32>,
    %c6_i32 = arith.constant 6 : i32
    %c2_i32_172 = arith.constant 2 : i32
    %374 = arith.muli %c2_i32_172, %c6_i32 : i32
    %c7_i32_173 = arith.constant 7 : i32
    %375 = arith.subi %c7_i32_173, %374 : i32
    %376 = arith.muli %arg0, %375 : i32
    %377 = arith.addi %c6_i32, %376 : i32
    %378 = arith.addi %18, %377 : i32
    %379 = arith.index_cast %377 : i32 to index
    %c0_174 = arith.constant 0 : index
    %c0_175 = arith.constant 0 : index
    %380 = vector.load %arg10[%379, %c0_174, %c0_175] : memref<8x8x512xf32, #tpu.memory_space<vmem>>, vector<1x8x512xf32>
    %381 = vector.shape_cast %380 : vector<1x8x512xf32> to vector<8x512xf32>
    %c0_176 = arith.constant 0 : index
    %c0_177 = arith.constant 0 : index
    %382 = vector.load %arg8[%c0_176, %c0_177] : memref<8x128xf32, #tpu.memory_space<vmem>>, vector<8x128xf32>
    %c0_178 = arith.constant 0 : index
    %c0_179 = arith.constant 0 : index
    %c0_180 = arith.constant 0 : index
    %383 = vector.load %arg5[%c0_178, %c0_179, %c0_180] : memref<1x128x512xf32, #tpu.memory_space<vmem>>, vector<1x128x512xf32>
    %384 = vector.shape_cast %383 : vector<1x128x512xf32> to vector<128x512xf32>
    %cst_181 = arith.constant dense<0.000000e+00> : vector<8x512xf32>
    %385 = tpu.matmul %382, %384, %cst_181 {dimension_numbers = #tpu.dot_dimension_numbers<[1], [0], [0], [1], [0, 0, 1, 1], [], []>} : vector<8x128xf32>, vector<128x512xf32>, vector<8x512xf32> -> vector<8x512xf32>
    %386 = arith.addf %381, %385 : vector<8x512xf32>
    %387 = vector.extract_strided_slice %386 {offsets = [0, 0], sizes = [8, 128], strides = [1, 1]} : vector<8x512xf32> to vector<8x128xf32>
    %388 = arith.negf %387 : vector<8x128xf32>
    %389 = math.exp %388 : vector<8x128xf32>
    %cst_182 = arith.constant 1.000000e+00 : f32
    %390 = vector.broadcast %cst_182 : f32 to vector<8x128xf32>
    %391 = arith.addf %390, %389 : vector<8x128xf32>
    %392 = arith.divf %390, %391 : vector<8x128xf32>
    %393 = vector.extract_strided_slice %386 {offsets = [0, 128], sizes = [8, 128], strides = [1, 1]} : vector<8x512xf32> to vector<8x128xf32>
    %394 = arith.negf %393 : vector<8x128xf32>
    %395 = math.exp %394 : vector<8x128xf32>
    %cst_183 = arith.constant 1.000000e+00 : f32
    %396 = vector.broadcast %cst_183 : f32 to vector<8x128xf32>
    %397 = arith.addf %396, %395 : vector<8x128xf32>
    %398 = arith.divf %396, %397 : vector<8x128xf32>
    %399 = vector.extract_strided_slice %386 {offsets = [0, 256], sizes = [8, 128], strides = [1, 1]} : vector<8x512xf32> to vector<8x128xf32>
    %400 = math.tanh %399 : vector<8x128xf32>
    %401 = vector.extract_strided_slice %386 {offsets = [0, 384], sizes = [8, 128], strides = [1, 1]} : vector<8x512xf32> to vector<8x128xf32>
    %402 = arith.negf %401 : vector<8x128xf32>
    %403 = math.exp %402 : vector<8x128xf32>
    %cst_184 = arith.constant 1.000000e+00 : f32
    %404 = vector.broadcast %cst_184 : f32 to vector<8x128xf32>
    %405 = arith.addf %404, %403 : vector<8x128xf32>
    %406 = arith.divf %404, %405 : vector<8x128xf32>
    %c0_185 = arith.constant 0 : index
    %c0_186 = arith.constant 0 : index
    %407 = vector.load %arg9[%c0_185, %c0_186] : memref<8x128xf32, #tpu.memory_space<vmem>>, vector<8x128xf32>
    %408 = arith.mulf %398, %407 : vector<8x128xf32>
    %409 = arith.mulf %392, %400 : vector<8x128xf32>
    %410 = arith.addf %408, %409 : vector<8x128xf32>
    %411 = math.tanh %410 : vector<8x128xf32>
    %412 = arith.mulf %406, %411 : vector<8x128xf32>
    %413 = vector.broadcast %378 : i32 to vector<8x1xi32>
    %414 = arith.cmpi slt, %413, %19 : vector<8x1xi32>
    %c0_187 = arith.constant 0 : index
    %c0_188 = arith.constant 0 : index
    %415 = vector.load %arg9[%c0_187, %c0_188] : memref<8x128xf32, #tpu.memory_space<vmem>>, vector<8x128xf32>
    %416 = vector.shape_cast %414 : vector<8x1xi1> to vector<8x1xi1>
    %417 = vector.broadcast %416 : vector<8x1xi1> to vector<8x128xi1>
    %418 = arith.select %417, %410, %415 : vector<8x128xi1>, vector<8x128xf32>
    %c0_189 = arith.constant 0 : index
    %c0_190 = arith.constant 0 : index
    %419 = vector.load %arg9[%c0_189, %c0_190] : memref<8x128xf32, #tpu.memory_space<vmem>>, vector<8x128xf32>
    tpu.vector_store %arg9[%c0_189, %c0_190], %418 {strides = array<i32>} : memref<8x128xf32, #tpu.memory_space<vmem>>, vector<8x128xf32>,
    %c0_191 = arith.constant 0 : index
    %c0_192 = arith.constant 0 : index
    %420 = vector.load %arg8[%c0_191, %c0_192] : memref<8x128xf32, #tpu.memory_space<vmem>>, vector<8x128xf32>
    %421 = vector.shape_cast %414 : vector<8x1xi1> to vector<8x1xi1>
    %422 = vector.broadcast %421 : vector<8x1xi1> to vector<8x128xi1>
    %423 = arith.select %422, %412, %420 : vector<8x128xi1>, vector<8x128xf32>
    %c0_193 = arith.constant 0 : index
    %c0_194 = arith.constant 0 : index
    %424 = vector.load %arg8[%c0_193, %c0_194] : memref<8x128xf32, #tpu.memory_space<vmem>>, vector<8x128xf32>
    tpu.vector_store %arg8[%c0_193, %c0_194], %423 {strides = array<i32>} : memref<8x128xf32, #tpu.memory_space<vmem>>, vector<8x128xf32>,
    %cst_195 = arith.constant 0.000000e+00 : f32
    %425 = vector.shape_cast %414 : vector<8x1xi1> to vector<8x1xi1>
    %426 = vector.broadcast %425 : vector<8x1xi1> to vector<8x128xi1>
    %427 = vector.broadcast %cst_195 : f32 to vector<8x128xf32>
    %428 = arith.select %426, %412, %427 : vector<8x128xi1>, vector<8x128xf32>
    %429 = arith.index_cast %377 : i32 to index
    %c0_196 = arith.constant 0 : index
    %c0_197 = arith.constant 0 : index
    %430 = vector.load %arg7[%429, %c0_196, %c0_197] : memref<8x8x128xf32, #tpu.memory_space<vmem>>, vector<1x8x128xf32>
    %431 = vector.shape_cast %430 : vector<1x8x128xf32> to vector<8x128xf32>
    %432 = vector.shape_cast %428 : vector<8x128xf32> to vector<1x8x128xf32>
    tpu.vector_store %arg7[%429, %c0_196, %c0_197], %432 {strides = array<i32>} : memref<8x8x128xf32, #tpu.memory_space<vmem>>, vector<1x8x128xf32>,
    %c7_i32_198 = arith.constant 7 : i32
    %c2_i32_199 = arith.constant 2 : i32
    %433 = arith.muli %c2_i32_199, %c7_i32_198 : i32
    %c7_i32_200 = arith.constant 7 : i32
    %434 = arith.subi %c7_i32_200, %433 : i32
    %435 = arith.muli %arg0, %434 : i32
    %436 = arith.addi %c7_i32_198, %435 : i32
    %437 = arith.addi %18, %436 : i32
    %438 = arith.index_cast %436 : i32 to index
    %c0_201 = arith.constant 0 : index
    %c0_202 = arith.constant 0 : index
    %439 = vector.load %arg10[%438, %c0_201, %c0_202] : memref<8x8x512xf32, #tpu.memory_space<vmem>>, vector<1x8x512xf32>
    %440 = vector.shape_cast %439 : vector<1x8x512xf32> to vector<8x512xf32>
    %c0_203 = arith.constant 0 : index
    %c0_204 = arith.constant 0 : index
    %441 = vector.load %arg8[%c0_203, %c0_204] : memref<8x128xf32, #tpu.memory_space<vmem>>, vector<8x128xf32>
    %c0_205 = arith.constant 0 : index
    %c0_206 = arith.constant 0 : index
    %c0_207 = arith.constant 0 : index
    %442 = vector.load %arg5[%c0_205, %c0_206, %c0_207] : memref<1x128x512xf32, #tpu.memory_space<vmem>>, vector<1x128x512xf32>
    %443 = vector.shape_cast %442 : vector<1x128x512xf32> to vector<128x512xf32>
    %cst_208 = arith.constant dense<0.000000e+00> : vector<8x512xf32>
    %444 = tpu.matmul %441, %443, %cst_208 {dimension_numbers = #tpu.dot_dimension_numbers<[1], [0], [0], [1], [0, 0, 1, 1], [], []>} : vector<8x128xf32>, vector<128x512xf32>, vector<8x512xf32> -> vector<8x512xf32>
    %445 = arith.addf %440, %444 : vector<8x512xf32>
    %446 = vector.extract_strided_slice %445 {offsets = [0, 0], sizes = [8, 128], strides = [1, 1]} : vector<8x512xf32> to vector<8x128xf32>
    %447 = arith.negf %446 : vector<8x128xf32>
    %448 = math.exp %447 : vector<8x128xf32>
    %cst_209 = arith.constant 1.000000e+00 : f32
    %449 = vector.broadcast %cst_209 : f32 to vector<8x128xf32>
    %450 = arith.addf %449, %448 : vector<8x128xf32>
    %451 = arith.divf %449, %450 : vector<8x128xf32>
    %452 = vector.extract_strided_slice %445 {offsets = [0, 128], sizes = [8, 128], strides = [1, 1]} : vector<8x512xf32> to vector<8x128xf32>
    %453 = arith.negf %452 : vector<8x128xf32>
    %454 = math.exp %453 : vector<8x128xf32>
    %cst_210 = arith.constant 1.000000e+00 : f32
    %455 = vector.broadcast %cst_210 : f32 to vector<8x128xf32>
    %456 = arith.addf %455, %454 : vector<8x128xf32>
    %457 = arith.divf %455, %456 : vector<8x128xf32>
    %458 = vector.extract_strided_slice %445 {offsets = [0, 256], sizes = [8, 128], strides = [1, 1]} : vector<8x512xf32> to vector<8x128xf32>
    %459 = math.tanh %458 : vector<8x128xf32>
    %460 = vector.extract_strided_slice %445 {offsets = [0, 384], sizes = [8, 128], strides = [1, 1]} : vector<8x512xf32> to vector<8x128xf32>
    %461 = arith.negf %460 : vector<8x128xf32>
    %462 = math.exp %461 : vector<8x128xf32>
    %cst_211 = arith.constant 1.000000e+00 : f32
    %463 = vector.broadcast %cst_211 : f32 to vector<8x128xf32>
    %464 = arith.addf %463, %462 : vector<8x128xf32>
    %465 = arith.divf %463, %464 : vector<8x128xf32>
    %c0_212 = arith.constant 0 : index
    %c0_213 = arith.constant 0 : index
    %466 = vector.load %arg9[%c0_212, %c0_213] : memref<8x128xf32, #tpu.memory_space<vmem>>, vector<8x128xf32>
    %467 = arith.mulf %457, %466 : vector<8x128xf32>
    %468 = arith.mulf %451, %459 : vector<8x128xf32>
    %469 = arith.addf %467, %468 : vector<8x128xf32>
    %470 = math.tanh %469 : vector<8x128xf32>
    %471 = arith.mulf %465, %470 : vector<8x128xf32>
    %472 = vector.broadcast %437 : i32 to vector<8x1xi32>
    %473 = arith.cmpi slt, %472, %19 : vector<8x1xi32>
    %c0_214 = arith.constant 0 : index
    %c0_215 = arith.constant 0 : index
    %474 = vector.load %arg9[%c0_214, %c0_215] : memref<8x128xf32, #tpu.memory_space<vmem>>, vector<8x128xf32>
    %475 = vector.shape_cast %473 : vector<8x1xi1> to vector<8x1xi1>
    %476 = vector.broadcast %475 : vector<8x1xi1> to vector<8x128xi1>
    %477 = arith.select %476, %469, %474 : vector<8x128xi1>, vector<8x128xf32>
    %c0_216 = arith.constant 0 : index
    %c0_217 = arith.constant 0 : index
    %478 = vector.load %arg9[%c0_216, %c0_217] : memref<8x128xf32, #tpu.memory_space<vmem>>, vector<8x128xf32>
    tpu.vector_store %arg9[%c0_216, %c0_217], %477 {strides = array<i32>} : memref<8x128xf32, #tpu.memory_space<vmem>>, vector<8x128xf32>,
    %c0_218 = arith.constant 0 : index
    %c0_219 = arith.constant 0 : index
    %479 = vector.load %arg8[%c0_218, %c0_219] : memref<8x128xf32, #tpu.memory_space<vmem>>, vector<8x128xf32>
    %480 = vector.shape_cast %473 : vector<8x1xi1> to vector<8x1xi1>
    %481 = vector.broadcast %480 : vector<8x1xi1> to vector<8x128xi1>
    %482 = arith.select %481, %471, %479 : vector<8x128xi1>, vector<8x128xf32>
    %c0_220 = arith.constant 0 : index
    %c0_221 = arith.constant 0 : index
    %483 = vector.load %arg8[%c0_220, %c0_221] : memref<8x128xf32, #tpu.memory_space<vmem>>, vector<8x128xf32>
    tpu.vector_store %arg8[%c0_220, %c0_221], %482 {strides = array<i32>} : memref<8x128xf32, #tpu.memory_space<vmem>>, vector<8x128xf32>,
    %cst_222 = arith.constant 0.000000e+00 : f32
    %484 = vector.shape_cast %473 : vector<8x1xi1> to vector<8x1xi1>
    %485 = vector.broadcast %484 : vector<8x1xi1> to vector<8x128xi1>
    %486 = vector.broadcast %cst_222 : f32 to vector<8x128xf32>
    %487 = arith.select %485, %471, %486 : vector<8x128xi1>, vector<8x128xf32>
    %488 = arith.index_cast %436 : i32 to index
    %c0_223 = arith.constant 0 : index
    %c0_224 = arith.constant 0 : index
    %489 = vector.load %arg7[%488, %c0_223, %c0_224] : memref<8x8x128xf32, #tpu.memory_space<vmem>>, vector<1x8x128xf32>
    %490 = vector.shape_cast %489 : vector<1x8x128xf32> to vector<8x128xf32>
    %491 = vector.shape_cast %487 : vector<8x128xf32> to vector<1x8x128xf32>
    tpu.vector_store %arg7[%488, %c0_223, %c0_224], %491 {strides = array<i32>} : memref<8x8x128xf32, #tpu.memory_space<vmem>>, vector<1x8x128xf32>,
    %c8_i32_225 = arith.constant 8 : i32
    return
  }
  func.func @transform_0(%arg0: i32, %arg1: i32) -> (i32, i32) {
    %c0_i32 = arith.constant 0 : i32
    %c0_i32_0 = arith.constant 0 : i32
    %c0_i32_1 = arith.constant 0 : i32
    return %c0_i32, %c0_i32_0 : i32, i32
  }
  func.func @transform_1(%arg0: i32, %arg1: i32) -> (i32, i32, i32) {
    %c2_i32 = arith.constant 2 : i32
    %0 = arith.muli %c2_i32, %arg1 : i32
    %c0_i32 = arith.constant 0 : i32
    %1 = arith.subi %c0_i32, %0 : i32
    %2 = arith.muli %arg0, %1 : i32
    %3 = arith.addi %arg1, %2 : i32
    %c0_i32_0 = arith.constant 0 : i32
    %c0_i32_1 = arith.constant 0 : i32
    %c0_i32_2 = arith.constant 0 : i32
    return %3, %c0_i32_0, %c0_i32_1 : i32, i32, i32
  }
  func.func @transform_2(%arg0: i32, %arg1: i32) -> (i32, i32, i32) {
    %c0_i32 = arith.constant 0 : i32
    %c0_i32_0 = arith.constant 0 : i32
    %c0_i32_1 = arith.constant 0 : i32
    return %arg0, %c0_i32, %c0_i32_0 : i32, i32, i32
  }
  func.func @transform_3(%arg0: i32, %arg1: i32) -> (i32, i32, i32) {
    %c0_i32 = arith.constant 0 : i32
    %c0_i32_0 = arith.constant 0 : i32
    %c0_i32_1 = arith.constant 0 : i32
    return %arg0, %c0_i32, %c0_i32_0 : i32, i32, i32
  }
  func.func @transform_4(%arg0: i32, %arg1: i32) -> (i32, i32, i32) {
    %c0_i32 = arith.constant 0 : i32
    %c0_i32_0 = arith.constant 0 : i32
    %c0_i32_1 = arith.constant 0 : i32
    return %arg0, %c0_i32, %c0_i32_0 : i32, i32, i32
  }
  func.func @transform_5(%arg0: i32, %arg1: i32) -> (i32, i32, i32) {
    %c2_i32 = arith.constant 2 : i32
    %0 = arith.muli %c2_i32, %arg1 : i32
    %c0_i32 = arith.constant 0 : i32
    %1 = arith.subi %c0_i32, %0 : i32
    %2 = arith.muli %arg0, %1 : i32
    %3 = arith.addi %arg1, %2 : i32
    %c0_i32_0 = arith.constant 0 : i32
    %c0_i32_1 = arith.constant 0 : i32
    return %3, %c0_i32_0, %arg0 : i32, i32, i32
  }
}

</mosaic_0001>

<llo_original>
// kernel: tpu_custom_call.1
$region0: #{tpu_custom_call.1}
  #allocation0 [shape = 'u32[]', space=smem, size = 0x4, offset = 0x4, fixed_abs, tag = 'smem constant byte address 0x4 - core index']
  #allocation1 [shape = 'u32[144,128]{1,0:T(1,128)}', space=vmem, size = 0x12000, scoped, tag = 'internal scratch']
  #allocation2 [shape = 'f32[8,128]{1,0:T(8,128)}', space=vmem, size = 0x1000, scoped, tag = 'scratch operand']
  #allocation3 [shape = 'f32[8,128]{1,0:T(8,128)}', space=vmem, size = 0x1000, scoped, tag = 'scratch operand']
  #allocation4 [shape = 'f32[8,8,512]{2,1,0:T(8,128)}', space=vmem, size = 0x20000, scoped, tag = 'scratch operand']
  %s0 = inlined_call_operand.vmem [shape: s32[8,1], index: 0, kind: input, shape index: {}]
  %s1 = inlined_call_operand.hbm [shape: f32[8,8,32], index: 1, kind: input, shape index: {}]
  %s2 = inlined_call_operand.hbm [shape: f32[2,32,512], index: 2, kind: input, shape index: {}]
  %s3 = inlined_call_operand.hbm [shape: f32[2,128,512], index: 3, kind: input, shape index: {}]
  %s4 = inlined_call_operand.vmem [shape: f32[2,1,512], index: 4, kind: input, shape index: {}]
  %s5 = inlined_call_operand.hbm [shape: f32[8,8,256], index: 5, kind: output, shape index: {}]
  %s6 = sld [smem:[#allocation0]]
  $region69: #{tpu_custom_call.1} parent=0
    _
  %s8 = ssub.s32 1, %s6
  %s9 = scalar_select 0, %s8, %s6
  $region1: #{tpu_custom_call.1} parent=0
    #allocation5 [shape = 'u8[65536]{0}', space=vmem, size = 0x10000, scoped, tag = 'input window, operand 1']
    #allocation6 [shape = 's32[2]{0}', space=sflag, size = 0x8, scoped, tag = 'scoped memory for tpu_custom_call.1']
    #allocation7 [shape = 's32[2]{0}', space=sflag, size = 0x8, scoped, tag = 'scoped memory for tpu_custom_call.1']
    #allocation8 [shape = 'u8[131072]{0}', space=vmem, size = 0x20000, scoped, tag = 'input window, operand 2']
    #allocation9 [shape = 's32[2]{0}', space=sflag, size = 0x8, scoped, tag = 'scoped memory for tpu_custom_call.1']
    #allocation10 [shape = 'u8[524288]{0}', space=vmem, size = 0x80000, scoped, tag = 'input window, operand 3']
    #allocation11 [shape = 'u8[65536]{0}', space=vmem, size = 0x10000, scoped, tag = 'output window, operand 0']
    %10 = vsyncpa [#allocation6], 0
    %s11 = scalar_lea.sflag [#allocation6], 1
    %12 = vsyncpa %s11, 0
    %13 = vsyncpa [#allocation9], 0
    %s14 = scalar_lea.sflag [#allocation9], 1
    %15 = vsyncpa %s14, 0
    %16 = vsyncpa [#allocation7], 0
    %s17 = scalar_lea.sflag [#allocation7], 1
    %18 = vsyncpa %s17, 0
    loop: start=0, step=1, limit=4
    $region2: #{tpu_custom_call.1} parent=1 // loop_pre_header
      _
    $region3: #{tpu_custom_call.1} parent=1 // loop_header
      %s20 = sphi 0, %s24
      %p21 = scmp.ge.s32.totalorder %s20, 4
      %s27 = sphi 0, %s39
      %s28 = sphi 0, %s35
      %s29 = sphi 0, %s27
      %s30 = sphi 0, %s28
      %s31 = sphi 0, %s29
      %s32 = sphi 0, %s30
      %s40 = sphi 0, %s40
      %s42 = sphi 0, %s40
      %s43 = sphi 0, %s42
      %s57 = sphi 0, %s43
      %s71 = sphi 0, %s73
      %s74 = sphi 0, %s71
      %s75 = sphi 0, %s74
      %s91 = sphi 0, %s75
      %s97 = sphi 0, %s99
      %s100 = sphi 0, %s97
      %s101 = sphi 0, %s100
      %s117 = sphi 0, %s101
      %s123 = sphi 0, %s125
      %s126 = sphi 0, %s123
      %s127 = sphi 0, %s126
      %s143 = sphi 0, %s127
      %s149 = sphi 0, %s151
      %s152 = sphi 0, %s149
      %s153 = sphi 0, %s152
      %s169 = sphi 0, %s153
      %s185 = sphi 0, %s187
      %s188 = sphi 0, %s185
      %s189 = sphi 0, %s188
      %s205 = sphi 0, %s189
    $region4: #{tpu_custom_call.1} parent=1 // loop_header_branch
      %23 = sbr.rel (%p21) target = $region8
    $region5: #{tpu_custom_call.1} parent=1 // loop_body
      %s25 = ssub.s32 %s20, 1
      %s26 = ssub.s32 %s20, 2
      %s33 = sadd.s32 1, %s28
      %p34 = scmp.ge.s32.totalorder %s33, 1
      %s35 = scalar_select %p34, 0, %s33
      %s36 = sadd.s32 1, %s27
      %s37 = scalar_select %p34, %s36, %s27
      %p38 = scmp.ge.s32.totalorder %s37, 2
      %s39 = scalar_select %p38, 0, %s37
      %s41 = sadd.s32 %s40, 1
      %p44 = scmp.eq.s32.totalorder %s20, 1
      %p45 = scmp.ne.s32.totalorder %s40, %s42
      %p46 = scmp.eq.s32.totalorder %s20, 0
      %p47 = por %p45, %p46
      %p48 = scmp.ne.s32.totalorder %s40, %s42
      %p49 = scmp.eq.s32.totalorder %s25, 1
      %p50 = por %p48, %p49
      %p51 = scmp.ne.s32.totalorder %s42, %s43
      %p52 = scmp.eq.s32.totalorder %s25, 0
      %p53 = por %p51, %p52
      %p54 = scmp.ne.s32.totalorder %s42, %s43
      %p55 = scmp.eq.s32.totalorder %s26, 1
      %p56 = por %p54, %p55
      %p58 = scmp.ne.s32.totalorder %s43, %s57
      %p59 = scmp.eq.s32.totalorder %s26, 0
      %p60 = por %p58, %p59
      %s61 = smul.u32 %s28, 2
      %s62 = ssub.s32 0, %s61
      %s63 = smul.u32 %s27, %s62
      %s64 = sadd.s32 %s28, %s63
      %s65 = smul.u32 %s35, 2
      %s66 = ssub.s32 0, %s65
      %s67 = smul.u32 %s39, %s66
      %s68 = sadd.s32 %s35, %s67
      %s69 = ssub.s32 %s64, %s68
      %p70 = scmp.eq.s32.totalorder %s69, 0
      %s72 = sadd.s32 %s71, 1
      %s73 = scalar_select %p70, %s71, %s72
      %p76 = pneg %p70
      %p77 = scmp.eq.s32.totalorder %s20, 1
      %p78 = por %p76, %p77
      %p79 = scmp.ne.s32.totalorder %s71, %s74
      %p80 = scmp.eq.s32.totalorder %s20, 0
      %p81 = por %p79, %p80
      %p82 = scmp.ne.s32.totalorder %s71, %s74
      %p83 = scmp.eq.s32.totalorder %s25, 1
      %p84 = por %p82, %p83
      %p85 = scmp.ne.s32.totalorder %s74, %s75
      %p86 = scmp.eq.s32.totalorder %s25, 0
      %p87 = por %p85, %p86
      %p88 = scmp.ne.s32.totalorder %s74, %s75
      %p89 = scmp.eq.s32.totalorder %s26, 1
      %p90 = por %p88, %p89
      %p92 = scmp.ne.s32.totalorder %s75, %s91
      %p93 = scmp.eq.s32.totalorder %s26, 0
      %p94 = por %p92, %p93
      %s95 = ssub.s32 %s27, %s39
      %p96 = scmp.eq.s32.totalorder %s95, 0
      %s98 = sadd.s32 %s97, 1
      %s99 = scalar_select %p96, %s97, %s98
      %p102 = pneg %p96
      %p103 = scmp.eq.s32.totalorder %s20, 1
      %p104 = por %p102, %p103
      %p105 = scmp.ne.s32.totalorder %s97, %s100
      %p106 = scmp.eq.s32.totalorder %s20, 0
      %p107 = por %p105, %p106
      %p108 = scmp.ne.s32.totalorder %s97, %s100
      %p109 = scmp.eq.s32.totalorder %s25, 1
      %p110 = por %p108, %p109
      %p111 = scmp.ne.s32.totalorder %s100, %s101
      %p112 = scmp.eq.s32.totalorder %s25, 0
      %p113 = por %p111, %p112
      %p114 = scmp.ne.s32.totalorder %s100, %s101
      %p115 = scmp.eq.s32.totalorder %s26, 1
      %p116 = por %p114, %p115
      %p118 = scmp.ne.s32.totalorder %s101, %s117
      %p119 = scmp.eq.s32.totalorder %s26, 0
      %p120 = por %p118, %p119
      %s121 = ssub.s32 %s27, %s39
      %p122 = scmp.eq.s32.totalorder %s121, 0
      %s124 = sadd.s32 %s123, 1
      %s125 = scalar_select %p122, %s123, %s124
      %p128 = pneg %p122
      %p129 = scmp.eq.s32.totalorder %s20, 1
      %p130 = por %p128, %p129
      %p131 = scmp.ne.s32.totalorder %s123, %s126
      %p132 = scmp.eq.s32.totalorder %s20, 0
      %p133 = por %p131, %p132
      %p134 = scmp.ne.s32.totalorder %s123, %s126
      %p135 = scmp.eq.s32.totalorder %s25, 1
      %p136 = por %p134, %p135
      %p137 = scmp.ne.s32.totalorder %s126, %s127
      %p138 = scmp.eq.s32.totalorder %s25, 0
      %p139 = por %p137, %p138
      %p140 = scmp.ne.s32.totalorder %s126, %s127
      %p141 = scmp.eq.s32.totalorder %s26, 1
      %p142 = por %p140, %p141
      %p144 = scmp.ne.s32.totalorder %s127, %s143
      %p145 = scmp.eq.s32.totalorder %s26, 0
      %p146 = por %p144, %p145
      %s147 = ssub.s32 %s27, %s39
      %p148 = scmp.eq.s32.totalorder %s147, 0
      %s150 = sadd.s32 %s149, 1
      %s151 = scalar_select %p148, %s149, %s150
      %p154 = pneg %p148
      %p155 = scmp.eq.s32.totalorder %s20, 1
      %p156 = por %p154, %p155
      %p157 = scmp.ne.s32.totalorder %s149, %s152
      %p158 = scmp.eq.s32.totalorder %s20, 0
      %p159 = por %p157, %p158
      %p160 = scmp.ne.s32.totalorder %s149, %s152
      %p161 = scmp.eq.s32.totalorder %s25, 1
      %p162 = por %p160, %p161
      %p163 = scmp.ne.s32.totalorder %s152, %s153
      %p164 = scmp.eq.s32.totalorder %s25, 0
      %p165 = por %p163, %p164
      %p166 = scmp.ne.s32.totalorder %s152, %s153
      %p167 = scmp.eq.s32.totalorder %s26, 1
      %p168 = por %p166, %p167
      %p170 = scmp.ne.s32.totalorder %s153, %s169
      %p171 = scmp.eq.s32.totalorder %s26, 0
      %p172 = por %p170, %p171
      %s173 = smul.u32 %s28, 2
      %s174 = ssub.s32 0, %s173
      %s175 = smul.u32 %s27, %s174
      %s176 = sadd.s32 %s28, %s175
      %s177 = smul.u32 %s35, 2
      %s178 = ssub.s32 0, %s177
      %s179 = smul.u32 %s39, %s178
      %s180 = sadd.s32 %s35, %s179
      %s181 = ssub.s32 %s176, %s180
      %s182 = ssub.s32 %s27, %s39
      %s183 = sor.u32 %s181, %s182
      %p184 = scmp.eq.s32.totalorder %s183, 0
      %s186 = sadd.s32 %s185, 1
      %s187 = scalar_select %p184, %s185, %s186
      %p190 = pneg %p184
      %p191 = scmp.eq.s32.totalorder %s20, 1
      %p192 = por %p190, %p191
      %p193 = scmp.ne.s32.totalorder %s185, %s188
      %p194 = scmp.eq.s32.totalorder %s20, 0
      %p195 = por %p193, %p194
      %p196 = scmp.ne.s32.totalorder %s185, %s188
      %p197 = scmp.eq.s32.totalorder %s25, 1
      %p198 = por %p196, %p197
      %p199 = scmp.ne.s32.totalorder %s188, %s189
      %p200 = scmp.eq.s32.totalorder %s25, 0
      %p201 = por %p199, %p200
      %p202 = scmp.ne.s32.totalorder %s188, %s189
      %p203 = scmp.eq.s32.totalorder %s26, 1
      %p204 = por %p202, %p203
      %p206 = scmp.ne.s32.totalorder %s189, %s205
      %p207 = scmp.eq.s32.totalorder %s26, 0
      %p208 = por %p206, %p207
      %p209 = scmp.le.s32.totalorder 1, %s20
      %p210 = scmp.lt.s32.totalorder %s20, 3
      %p211 = pnand %p209, %p210
      %p212 = pneg %p211
      // Predicated region
      $region9: #{tpu_custom_call.1} parent=5 // pred_check
        _
      $region10: #{tpu_custom_call.1} parent=5 // pred_check_branch
        %214 = sbr.rel (%p211) target = $region12
      $region11: #{tpu_custom_call.1} parent=5 // pred_region
        %s215 = ssub.s32 %s20, 1
        // Predicated region
        $region13: #{tpu_custom_call.1} parent=11 // pred_check
          %p216 = pneg %p53
        $region14: #{tpu_custom_call.1} parent=11 // pred_check_branch
          %218 = sbr.rel (%p216) target = $region16
        $region15: #{tpu_custom_call.1} parent=11 // pred_region
          _
        $region16: #{tpu_custom_call.1} parent=11 // pred_fallthru
          _
      $region12: #{tpu_custom_call.1} parent=5 // pred_fallthru
        _
      %p219 = scmp.lt.s32.totalorder %s20, 2
      // Predicated region
      $region17: #{tpu_custom_call.1} parent=5 // pred_check
        %p220 = pneg %p219
      $region18: #{tpu_custom_call.1} parent=5 // pred_check_branch
        %222 = sbr.rel (%p220) target = $region20
      $region19: #{tpu_custom_call.1} parent=5 // pred_region
        // Predicated region
        $region21: #{tpu_custom_call.1} parent=19 // pred_check
          %p223 = pneg %p81
        $region22: #{tpu_custom_call.1} parent=19 // pred_check_branch
          %225 = sbr.rel (%p223) target = $region24
        $region23: #{tpu_custom_call.1} parent=19 // pred_region
          %s226 = sand.u32 %s71, 1
          %s227 = scalar_lea.sflag [#allocation6], %s226
          %s228 = sand.u32 %s71, 1
          %s229 = smul.addr %s228, 64
          %s230 = scalar_lea.vmem [#allocation5], %s229
          %s231 = smul.u32 %s28, 2
          %s232 = ssub.s32 0, %s231
          %s233 = smul.u32 %s27, %s232
          %s234 = sadd.s32 %s28, %s233
          %s235 = smul.u32 8, %s234
          %s237 = ssub.s32 1024, 1024
          %238 = vsyncadd %s227, %s237
          %s239 = smul.addr %s235, 128
          %s240 = scalar_lea.hbm %s1, %s239
          %s241 = sshll.u32 %s230, 4
          %s242 = int_to_ptr.vmem [resolvable:$true] %s241
          %247 = dma.hbm_to_vmem [thread:$0]  %s240, 1024, %s242, %s227, 128, 128, 8
        $region24: #{tpu_custom_call.1} parent=19 // pred_fallthru
          _
        // Predicated region
        $region25: #{tpu_custom_call.1} parent=19 // pred_check
          %p248 = pneg %p107
        $region26: #{tpu_custom_call.1} parent=19 // pred_check_branch
          %250 = sbr.rel (%p248) target = $region28
        $region27: #{tpu_custom_call.1} parent=19 // pred_region
          %s251 = sand.u32 %s20, 1
          %s252 = scalar_lea.sflag [#allocation9], %s251
          %s253 = sand.u32 %s97, 1
          %s254 = smul.addr %s253, 128
          %s255 = scalar_lea.vmem [#allocation8], %s254
          %s257 = ssub.s32 2048, 2048
          %258 = vsyncadd %s252, %s257
          %s259 = smul.addr %s27, 16
          %s260 = smul.addr %s259, 128
          %s261 = scalar_lea.hbm %s2, %s260
          %s262 = sshll.u32 %s255, 4
          %s263 = int_to_ptr.vmem [resolvable:$true] %s262
          %268 = dma.hbm_to_vmem [thread:$0]  %s261, 2048, %s263, %s252, 512, 512, 32
        $region28: #{tpu_custom_call.1} parent=19 // pred_fallthru
          _
        // Predicated region
        $region29: #{tpu_custom_call.1} parent=19 // pred_check
          %p269 = pneg %p133
        $region30: #{tpu_custom_call.1} parent=19 // pred_check_branch
          %271 = sbr.rel (%p269) target = $region32
        $region31: #{tpu_custom_call.1} parent=19 // pred_region
          %s272 = sand.u32 %s20, 1
          %s273 = scalar_lea.sflag [#allocation9], %s272
          %s274 = sand.u32 %s123, 1
          %s275 = smul.addr %s274, 512
          %s276 = scalar_lea.vmem [#allocation10], %s275
          %s278 = ssub.s32 8192, 8192
          %279 = vsyncadd %s273, %s278
          %s280 = smul.addr %s27, 64
          %s281 = smul.addr %s280, 128
          %s282 = scalar_lea.hbm %s3, %s281
          %s283 = sshll.u32 %s276, 4
          %s284 = int_to_ptr.vmem [resolvable:$true] %s283
          %289 = dma.hbm_to_vmem [thread:$0]  %s282, 8192, %s284, %s273, 512, 512, 32
        $region32: #{tpu_custom_call.1} parent=19 // pred_fallthru
          _
        // Predicated region
        $region33: #{tpu_custom_call.1} parent=19 // pred_check
          %p290 = pneg %p159
        $region34: #{tpu_custom_call.1} parent=19 // pred_check_branch
          %292 = sbr.rel (%p290) target = $region36
        $region35: #{tpu_custom_call.1} parent=19 // pred_region
          %p293 = scmp.lt.s32.totalorder %s27, 1
          %s294 = scalar_select %p293, %s27, 1
          %s295 = smul.addr %s294, 4
          %s296 = scalar_lea.vmem %s4, %s295
        $region36: #{tpu_custom_call.1} parent=19 // pred_fallthru
          _
      $region20: #{tpu_custom_call.1} parent=5 // pred_fallthru
        _
      %p297 = scmp.le.s32.totalorder 1, %s20
      %p298 = scmp.lt.s32.totalorder %s20, 3
      %p299 = pnand %p297, %p298
      %p300 = pneg %p299
      // Predicated region
      $region37: #{tpu_custom_call.1} parent=5 // pred_check
        _
      $region38: #{tpu_custom_call.1} parent=5 // pred_check_branch
        %302 = sbr.rel (%p299) target = $region40
      $region39: #{tpu_custom_call.1} parent=5 // pred_region
        %s303 = ssub.s32 %s20, 1
        %s304 = sand.u32 %s74, 1
        %s305 = scalar_lea.sflag [#allocation6], %s304
        %s306 = sand.u32 %s74, 1
        %s307 = smul.addr %s306, 64
        %s308 = scalar_lea.vmem [#allocation5], %s307
        // Predicated region
        $region41: #{tpu_custom_call.1} parent=39 // pred_check
          %p309 = pneg %p87
        $region42: #{tpu_custom_call.1} parent=39 // pred_check_branch
          %311 = sbr.rel (%p309) target = $region44
        $region43: #{tpu_custom_call.1} parent=39 // pred_region
          %312 = dma.done %s305, 1024
        $region44: #{tpu_custom_call.1} parent=39 // pred_fallthru
          _
        %s313 = sand.u32 %s25, 1
        %s314 = scalar_lea.sflag [#allocation9], %s313
        %s315 = sand.u32 %s100, 1
        %s316 = smul.addr %s315, 128
        %s317 = scalar_lea.vmem [#allocation8], %s316
        // Predicated region
        $region45: #{tpu_custom_call.1} parent=39 // pred_check
          %p318 = pneg %p113
        $region46: #{tpu_custom_call.1} parent=39 // pred_check_branch
          %320 = sbr.rel (%p318) target = $region48
        $region47: #{tpu_custom_call.1} parent=39 // pred_region
          %321 = dma.done %s314, 2048
        $region48: #{tpu_custom_call.1} parent=39 // pred_fallthru
          _
        %s322 = sand.u32 %s25, 1
        %s323 = scalar_lea.sflag [#allocation9], %s322
        %s324 = sand.u32 %s126, 1
        %s325 = smul.addr %s324, 512
        %s326 = scalar_lea.vmem [#allocation10], %s325
        // Predicated region
        $region49: #{tpu_custom_call.1} parent=39 // pred_check
          %p327 = pneg %p139
        $region50: #{tpu_custom_call.1} parent=39 // pred_check_branch
          %329 = sbr.rel (%p327) target = $region52
        $region51: #{tpu_custom_call.1} parent=39 // pred_region
          %330 = dma.done %s323, 8192
        $region52: #{tpu_custom_call.1} parent=39 // pred_fallthru
          _
        %p331 = pneg %p53
        %p332 = pneg %p50
        %s333 = sand.u32 %s74, 1
        %s334 = scalar_lea.sflag [#allocation6], %s333
        %s335 = sand.u32 %s74, 1
        %s336 = smul.addr %s335, 64
        %s337 = scalar_lea.vmem [#allocation5], %s336
        %p338 = pneg %p87
        %p339 = pneg %p84
        %s340 = sand.u32 %s25, 1
        %s341 = scalar_lea.sflag [#allocation9], %s340
        %s342 = sand.u32 %s100, 1
        %s343 = smul.addr %s342, 128
        %s344 = scalar_lea.vmem [#allocation8], %s343
        %p345 = pneg %p113
        %p346 = pneg %p110
        %s347 = sand.u32 %s25, 1
        %s348 = scalar_lea.sflag [#allocation9], %s347
        %s349 = sand.u32 %s126, 1
        %s350 = smul.addr %s349, 512
        %s351 = scalar_lea.vmem [#allocation10], %s350
        %p352 = pneg %p139
        %p353 = pneg %p136
        %p354 = scmp.lt.s32.totalorder %s29, 1
        %s355 = scalar_select %p354, %s29, 1
        %s356 = smul.addr %s355, 4
        %s357 = scalar_lea.vmem %s4, %s356
        %p358 = pneg %p165
        %p359 = pneg %p162
        %p360 = pneg %p201
        %p361 = pneg %p198
        %s362 = sand.u32 %s188, 1
        %s363 = scalar_lea.sflag [#allocation7], %s362
        %s364 = sand.u32 %s188, 1
        %s365 = smul.addr %s364, 64
        %s366 = scalar_lea.vmem [#allocation11], %s365
        %s367 = smul.u32 %s30, 2
        %s368 = ssub.s32 0, %s367
        %s369 = smul.u32 %s29, %s368
        %s370 = sadd.s32 %s30, %s369
        %s371 = smul.u32 8, %s370
        %p372 = scmp.lt.s32.totalorder %s29, 1
        %s373 = scalar_select %p372, %s29, 1
        %s374 = smul.addr %s373, 4
        %s375 = scalar_lea.vmem %s4, %s374
        %s376 = smul.u32 %s30, 2
        %s377 = ssub.s32 0, %s376
        %s378 = smul.u32 %s29, %s377
        %s379 = sadd.s32 %s30, %s378
        %s380 = smul.u32 8, %s379
        %p381 = scmp.eq.s32.totalorder %s30, 0
        // Predicated region
        $region53: #{tpu_custom_call.1} parent=39 // pred_check
          %p382 = pneg %p381
        $region54: #{tpu_custom_call.1} parent=39 // pred_check_branch
          %384 = sbr.rel (%p382) target = $region56
        $region55: #{tpu_custom_call.1} parent=39 // pred_region
          %385 = vst [vmem:[#allocation2] sm:$0xff] 0.0
          %386 = vst [vmem:[#allocation3] sm:$0xff] 0.0
        $region56: #{tpu_custom_call.1} parent=39 // pred_fallthru
          _
        %v387 = vld [vmem:[%s308] sm:$0xff]
        %v388 = vld [vmem:[%s308 + $0x8] sm:$0xff]
        %v389 = vld [vmem:[%s308 + $0x10] sm:$0xff]
        %v390 = vld [vmem:[%s308 + $0x18] sm:$0xff]
        %v391 = vld [vmem:[%s308 + $0x20] sm:$0xff]
        %v392 = vld [vmem:[%s308 + $0x28] sm:$0xff]
        %v393 = vld [vmem:[%s308 + $0x30] sm:$0xff]
        %v394 = vld [vmem:[%s308 + $0x38] sm:$0xff]
        %v395 = vld [vmem:[%s317] sm:$0xff]
        %v396 = vld [vmem:[%s317 + $0x8] sm:$0xff]
        %v397 = vld [vmem:[%s317 + $0x10] sm:$0xff]
        %v398 = vld [vmem:[%s317 + $0x18] sm:$0xff]
        %v399 = vld [vmem:[%s317 + $0x20] sm:$0xff]
        %v400 = vld [vmem:[%s317 + $0x28] sm:$0xff]
        %v401 = vld [vmem:[%s317 + $0x30] sm:$0xff]
        %v402 = vld [vmem:[%s317 + $0x38] sm:$0xff]
        %v403 = vld [vmem:[%s317 + $0x40] sm:$0xff]
        %v404 = vld [vmem:[%s317 + $0x48] sm:$0xff]
        %v405 = vld [vmem:[%s317 + $0x50] sm:$0xff]
        %v406 = vld [vmem:[%s317 + $0x58] sm:$0xff]
        %v407 = vld [vmem:[%s317 + $0x60] sm:$0xff]
        %v408 = vld [vmem:[%s317 + $0x68] sm:$0xff]
        %v409 = vld [vmem:[%s317 + $0x70] sm:$0xff]
        %v410 = vld [vmem:[%s317 + $0x78] sm:$0xff]
        %v411 = vld [vmem:[%s375] sm:$0xf]
        %v413 = vlaneseq
        %v414 = vshrl.u32 %v413, 7
        %v415 = vsub.s32 0, %v414
        %v416 = vrot.slane %v411, %v415
        %v417 = vlaneseq
        %v418 = vshrl.u32 %v417, 7
        %v419 = vsub.s32 1, %v418
        %v420 = vrot.slane %v411, %v419
        %v421 = vlaneseq
        %v422 = vshrl.u32 %v421, 7
        %v423 = vsub.s32 2, %v422
        %v424 = vrot.slane %v411, %v423
        %v425 = vlaneseq
        %v426 = vshrl.u32 %v425, 7
        %v427 = vsub.s32 3, %v426
        %v428 = vrot.slane %v411, %v427
        %vm433 = vcmask 261120
        %v435 = vsel %vm433, %v387, 0
        %v438 = vsel %vm433, %v388, 0
        %v441 = vsel %vm433, %v389, 0
        %v444 = vsel %vm433, %v390, 0
        %v447 = vsel %vm433, %v391, 0
        %v450 = vsel %vm433, %v392, 0
        %v453 = vsel %vm433, %v393, 0
        %v456 = vsel %vm433, %v394, 0
        %458 = vmatprep.subr.mxu0 %v396
        %459 = vmatpush1.msra.mxu0 %v395
        %460 = vmatprep.subr.mxu0 %v400
        %461 = vmatpush1.msra.mxu0 %v399
        %462 = vmatprep.subr.mxu0 %v404
        %463 = vmatpush1.msra.mxu0 %v403
        %464 = vmatprep.subr.mxu0 %v408
        %465 = vmatpush1.msra.mxu0 %v407
        %466 = vmatprep.subr.mxu0 0.0
        %467 = vmatpush1.msra.mxu0 0.0
        %468 = vmatprep.subr.mxu0 0.0
        %469 = vmatpush1.msra.mxu0 0.0
        %470 = vmatprep.subr.mxu0 0.0
        %471 = vmatpush1.msra.mxu0 0.0
        %472 = vmatprep.subr.mxu0 0.0
        %473 = vmatpush1.msra.mxu0 0.0
        %474 = vmatprep.subr.mxu0 0.0
        %475 = vmatpush1.msra.mxu0 0.0
        %476 = vmatprep.subr.mxu0 0.0
        %477 = vmatpush1.msra.mxu0 0.0
        %478 = vmatprep.subr.mxu0 0.0
        %479 = vmatpush1.msra.mxu0 0.0
        %480 = vmatprep.subr.mxu0 0.0
        %481 = vmatpush1.msra.mxu0 0.0
        %482 = vmatprep.subr.mxu0 0.0
        %483 = vmatpush1.msra.mxu0 0.0
        %484 = vmatprep.subr.mxu0 0.0
        %485 = vmatpush1.msra.mxu0 0.0
        %486 = vmatprep.subr.mxu0 0.0
        %487 = vmatpush1.msra.mxu0 0.0
        %488 = vmatprep.subr.mxu0 0.0
        %489 = vmatpush1.msra.mxu0 0.0
        %490 = vmatprep.subr.mxu0 0.0
        %491 = vmatpush1.msra.mxu0 0.0
        %492 = vmatprep.subr.mxu0 0.0
        %493 = vmatpush1.msra.mxu0 0.0
        %494 = vmatprep.subr.mxu0 0.0
        %495 = vmatpush1.msra.mxu0 0.0
        %496 = vmatprep.subr.mxu0 0.0
        %497 = vmatpush1.msra.mxu0 0.0
        %498 = vmatprep.subr.mxu0 0.0
        %499 = vmatpush1.msra.mxu0 0.0
        %500 = vmatprep.subr.mxu0 0.0
        %501 = vmatpush1.msra.mxu0 0.0
        %502 = vmatprep.subr.mxu0 0.0
        %503 = vmatpush1.msra.mxu0 0.0
        %504 = vmatprep.subr.mxu0 0.0
        %505 = vmatpush1.msra.mxu0 0.0
        %506 = vmatprep.subr.mxu0 0.0
        %507 = vmatpush1.msra.mxu0 0.0
        %508 = vmatprep.subr.mxu0 0.0
        %509 = vmatpush1.msra.mxu0 0.0
        %510 = vmatprep.subr.mxu0 0.0
        %511 = vmatpush1.msra.mxu0 0.0
        %512 = vmatprep.subr.mxu0 0.0
        %513 = vmatpush1.msra.mxu0 0.0
        %514 = vmatprep.subr.mxu0 0.0
        %515 = vmatpush1.msra.mxu0 0.0
        %516 = vmatprep.subr.mxu0 0.0
        %517 = vmatpush1.msra.mxu0 0.0
        %518 = vmatprep.subr.mxu0 0.0
        %519 = vmatpush1.msra.mxu0 0.0
        %520 = vmatprep.subr.mxu0 0.0
        %521 = vmatpush1.msra.mxu0 0.0
        %522 = vmatprep.mubr.f32.mxu0 0.0
        %523 = vmatmul.mubr.f32.gmra.mrb[0].mxu0 %v435
        %v524 = vpop.f32.mrb[0].mxu0
        %v525 = vadd.f32 %v416, %v524
        %v526 = vpop.f32.mrb[0].mxu0
        %v527 = vadd.f32 %v420, %v526
        %528 = vmatprep.mubr.f32.mxu0 0.0
        %529 = vmatmul.mubr.f32.gmra.mrb[0].mxu0 %v438
        %v530 = vpop.f32.mrb[0].mxu0
        %v531 = vadd.f32 %v416, %v530
        %v532 = vpop.f32.mrb[0].mxu0
        %v533 = vadd.f32 %v420, %v532
        %534 = vmatprep.mubr.f32.mxu0 0.0
        %535 = vmatmul.mubr.f32.gmra.mrb[0].mxu0 %v441
        %v536 = vpop.f32.mrb[0].mxu0
        %v537 = vadd.f32 %v416, %v536
        %v538 = vpop.f32.mrb[0].mxu0
        %v539 = vadd.f32 %v420, %v538
        %540 = vmatprep.mubr.f32.mxu0 0.0
        %541 = vmatmul.mubr.f32.gmra.mrb[0].mxu0 %v444
        %v542 = vpop.f32.mrb[0].mxu0
        %v543 = vadd.f32 %v416, %v542
        %v544 = vpop.f32.mrb[0].mxu0
        %v545 = vadd.f32 %v420, %v544
        %546 = vmatprep.mubr.f32.mxu0 0.0
        %547 = vmatmul.mubr.f32.gmra.mrb[0].mxu0 %v447
        %v548 = vpop.f32.mrb[0].mxu0
        %v549 = vadd.f32 %v416, %v548
        %v550 = vpop.f32.mrb[0].mxu0
        %v551 = vadd.f32 %v420, %v550
        %552 = vmatprep.mubr.f32.mxu0 0.0
        %553 = vmatmul.mubr.f32.gmra.mrb[0].mxu0 %v450
        %v554 = vpop.f32.mrb[0].mxu0
        %v555 = vadd.f32 %v416, %v554
        %v556 = vpop.f32.mrb[0].mxu0
        %v557 = vadd.f32 %v420, %v556
        %558 = vmatprep.mubr.f32.mxu0 0.0
        %559 = vmatmul.mubr.f32.gmra.mrb[0].mxu0 %v453
        %v560 = vpop.f32.mrb[0].mxu0
        %v561 = vadd.f32 %v416, %v560
        %v562 = vpop.f32.mrb[0].mxu0
        %v563 = vadd.f32 %v420, %v562
        %564 = vmatprep.mubr.f32.mxu0 0.0
        %565 = vmatmul.mubr.f32.gmra.mrb[0].mxu0 %v456
        %v566 = vpop.f32.mrb[0].mxu0
        %v567 = vadd.f32 %v416, %v566
        %v568 = vpop.f32.mrb[0].mxu0
        %v569 = vadd.f32 %v420, %v568
        %570 = vdwg.mxu0
        %571 = vmatprep.subr.mxu0 %v398
        %572 = vmatpush1.msra.mxu0 %v397
        %573 = vmatprep.subr.mxu0 %v402
        %574 = vmatpush1.msra.mxu0 %v401
        %575 = vmatprep.subr.mxu0 %v406
        %576 = vmatpush1.msra.mxu0 %v405
        %577 = vmatprep.subr.mxu0 %v410
        %578 = vmatpush1.msra.mxu0 %v409
        %579 = vmatprep.subr.mxu0 0.0
        %580 = vmatpush1.msra.mxu0 0.0
        %581 = vmatprep.subr.mxu0 0.0
        %582 = vmatpush1.msra.mxu0 0.0
        %583 = vmatprep.subr.mxu0 0.0
        %584 = vmatpush1.msra.mxu0 0.0
        %585 = vmatprep.subr.mxu0 0.0
        %586 = vmatpush1.msra.mxu0 0.0
        %587 = vmatprep.subr.mxu0 0.0
        %588 = vmatpush1.msra.mxu0 0.0
        %589 = vmatprep.subr.mxu0 0.0
        %590 = vmatpush1.msra.mxu0 0.0
        %591 = vmatprep.subr.mxu0 0.0
        %592 = vmatpush1.msra.mxu0 0.0
        %593 = vmatprep.subr.mxu0 0.0
        %594 = vmatpush1.msra.mxu0 0.0
        %595 = vmatprep.subr.mxu0 0.0
        %596 = vmatpush1.msra.mxu0 0.0
        %597 = vmatprep.subr.mxu0 0.0
        %598 = vmatpush1.msra.mxu0 0.0
        %599 = vmatprep.subr.mxu0 0.0
        %600 = vmatpush1.msra.mxu0 0.0
        %601 = vmatprep.subr.mxu0 0.0
        %602 = vmatpush1.msra.mxu0 0.0
        %603 = vmatprep.subr.mxu0 0.0
        %604 = vmatpush1.msra.mxu0 0.0
        %605 = vmatprep.subr.mxu0 0.0
        %606 = vmatpush1.msra.mxu0 0.0
        %607 = vmatprep.subr.mxu0 0.0
        %608 = vmatpush1.msra.mxu0 0.0
        %609 = vmatprep.subr.mxu0 0.0
        %610 = vmatpush1.msra.mxu0 0.0
        %611 = vmatprep.subr.mxu0 0.0
        %612 = vmatpush1.msra.mxu0 0.0
        %613 = vmatprep.subr.mxu0 0.0
        %614 = vmatpush1.msra.mxu0 0.0
        %615 = vmatprep.subr.mxu0 0.0
        %616 = vmatpush1.msra.mxu0 0.0
        %617 = vmatprep.subr.mxu0 0.0
        %618 = vmatpush1.msra.mxu0 0.0
        %619 = vmatprep.subr.mxu0 0.0
        %620 = vmatpush1.msra.mxu0 0.0
        %621 = vmatprep.subr.mxu0 0.0
        %622 = vmatpush1.msra.mxu0 0.0
        %623 = vmatprep.subr.mxu0 0.0
        %624 = vmatpush1.msra.mxu0 0.0
        %625 = vmatprep.subr.mxu0 0.0
        %626 = vmatpush1.msra.mxu0 0.0
        %627 = vmatprep.subr.mxu0 0.0
        %628 = vmatpush1.msra.mxu0 0.0
        %629 = vmatprep.subr.mxu0 0.0
        %630 = vmatpush1.msra.mxu0 0.0
        %631 = vmatprep.subr.mxu0 0.0
        %632 = vmatpush1.msra.mxu0 0.0
        %633 = vmatprep.subr.mxu0 0.0
        %634 = vmatpush1.msra.mxu0 0.0
        %635 = vmatprep.mubr.f32.mxu0 0.0
        %636 = vmatmul.mubr.f32.gmra.mrb[0].mxu0 %v435
        %v637 = vpop.f32.mrb[0].mxu0
        %v638 = vadd.f32 %v424, %v637
        %v639 = vpop.f32.mrb[0].mxu0
        %v640 = vadd.f32 %v428, %v639
        %641 = vmatprep.mubr.f32.mxu0 0.0
        %642 = vmatmul.mubr.f32.gmra.mrb[0].mxu0 %v438
        %v643 = vpop.f32.mrb[0].mxu0
        %v644 = vadd.f32 %v424, %v643
        %v645 = vpop.f32.mrb[0].mxu0
        %v646 = vadd.f32 %v428, %v645
        %647 = vmatprep.mubr.f32.mxu0 0.0
        %648 = vmatmul.mubr.f32.gmra.mrb[0].mxu0 %v441
        %v649 = vpop.f32.mrb[0].mxu0
        %v650 = vadd.f32 %v424, %v649
        %v651 = vpop.f32.mrb[0].mxu0
        %v652 = vadd.f32 %v428, %v651
        %653 = vmatprep.mubr.f32.mxu0 0.0
        %654 = vmatmul.mubr.f32.gmra.mrb[0].mxu0 %v444
        %v655 = vpop.f32.mrb[0].mxu0
        %v656 = vadd.f32 %v424, %v655
        %v657 = vpop.f32.mrb[0].mxu0
        %v658 = vadd.f32 %v428, %v657
        %659 = vmatprep.mubr.f32.mxu0 0.0
        %660 = vmatmul.mubr.f32.gmra.mrb[0].mxu0 %v447
        %v661 = vpop.f32.mrb[0].mxu0
        %v662 = vadd.f32 %v424, %v661
        %v663 = vpop.f32.mrb[0].mxu0
        %v664 = vadd.f32 %v428, %v663
        %665 = vmatprep.mubr.f32.mxu0 0.0
        %666 = vmatmul.mubr.f32.gmra.mrb[0].mxu0 %v450
        %v667 = vpop.f32.mrb[0].mxu0
        %v668 = vadd.f32 %v424, %v667
        %v669 = vpop.f32.mrb[0].mxu0
        %v670 = vadd.f32 %v428, %v669
        %671 = vmatprep.mubr.f32.mxu0 0.0
        %672 = vmatmul.mubr.f32.gmra.mrb[0].mxu0 %v453
        %v673 = vpop.f32.mrb[0].mxu0
        %v674 = vadd.f32 %v424, %v673
        %v675 = vpop.f32.mrb[0].mxu0
        %v676 = vadd.f32 %v428, %v675
        %677 = vmatprep.mubr.f32.mxu0 0.0
        %678 = vmatmul.mubr.f32.gmra.mrb[0].mxu0 %v456
        %v679 = vpop.f32.mrb[0].mxu0
        %v680 = vadd.f32 %v424, %v679
        %v681 = vpop.f32.mrb[0].mxu0
        %v682 = vadd.f32 %v428, %v681
        %683 = vdwg.mxu0
        %684 = vst [vmem:[#allocation4] sm:$0xff] %v525
        %685 = vst [vmem:[#allocation4 + $0x8] sm:$0xff] %v527
        %686 = vst [vmem:[#allocation4 + $0x10] sm:$0xff] %v638
        %687 = vst [vmem:[#allocation4 + $0x18] sm:$0xff] %v640
        %688 = vst [vmem:[#allocation4 + $0x20] sm:$0xff] %v531
        %689 = vst [vmem:[#allocation4 + $0x28] sm:$0xff] %v533
        %690 = vst [vmem:[#allocation4 + $0x30] sm:$0xff] %v644
        %691 = vst [vmem:[#allocation4 + $0x38] sm:$0xff] %v646
        %692 = vst [vmem:[#allocation4 + $0x40] sm:$0xff] %v537
        %693 = vst [vmem:[#allocation4 + $0x48] sm:$0xff] %v539
        %694 = vst [vmem:[#allocation4 + $0x50] sm:$0xff] %v650
        %695 = vst [vmem:[#allocation4 + $0x58] sm:$0xff] %v652
        %696 = vst [vmem:[#allocation4 + $0x60] sm:$0xff] %v543
        %697 = vst [vmem:[#allocation4 + $0x68] sm:$0xff] %v545
        %698 = vst [vmem:[#allocation4 + $0x70] sm:$0xff] %v656
        %699 = vst [vmem:[#allocation4 + $0x78] sm:$0xff] %v658
        %700 = vst [vmem:[#allocation4 + $0x80] sm:$0xff] %v549
        %701 = vst [vmem:[#allocation4 + $0x88] sm:$0xff] %v551
        %702 = vst [vmem:[#allocation4 + $0x90] sm:$0xff] %v662
        %703 = vst [vmem:[#allocation4 + $0x98] sm:$0xff] %v664
        %704 = vst [vmem:[#allocation4 + $0xa0] sm:$0xff] %v555
        %705 = vst [vmem:[#allocation4 + $0xa8] sm:$0xff] %v557
        %706 = vst [vmem:[#allocation4 + $0xb0] sm:$0xff] %v668
        %707 = vst [vmem:[#allocation4 + $0xb8] sm:$0xff] %v670
        %708 = vst [vmem:[#allocation4 + $0xc0] sm:$0xff] %v561
        %709 = vst [vmem:[#allocation4 + $0xc8] sm:$0xff] %v563
        %710 = vst [vmem:[#allocation4 + $0xd0] sm:$0xff] %v674
        %711 = vst [vmem:[#allocation4 + $0xd8] sm:$0xff] %v676
        %712 = vst [vmem:[#allocation4 + $0xe0] sm:$0xff] %v567
        %713 = vst [vmem:[#allocation4 + $0xe8] sm:$0xff] %v569
        %714 = vst [vmem:[#allocation4 + $0xf0] sm:$0xff] %v680
        %715 = vst [vmem:[#allocation4 + $0xf8] sm:$0xff] %v682
        %s716 = smul.u32 %s30, 2
        %s717 = ssub.s32 0, %s716
        %s718 = smul.u32 %s29, %s717
        %s719 = sadd.s32 %s30, %s718
        %s720 = smul.u32 %s719, 8
        %v721 = vld [vmem:[%s0] sm:$0xff]
        %s722 = smul.u32 %s29, 7
        %s723 = sadd.s32 %s720, %s722
        %s724 = smul.u32 %s722, 4
        %s725 = smul.addr %s724, 8
        %s726 = scalar_lea.vmem [#allocation4], %s725
        %v727 = vld [vmem:[%s726] sm:$0xff]
        %v728 = vld [vmem:[%s726 + $0x8] sm:$0xff]
        %v729 = vld [vmem:[%s726 + $0x10] sm:$0xff]
        %v730 = vld [vmem:[%s726 + $0x18] sm:$0xff]
        %v731 = vld [vmem:[#allocation2] sm:$0xff]
        %v732 = vld [vmem:[%s326] sm:$0xff]
        %v733 = vld [vmem:[%s326 + $0x8] sm:$0xff]
        %v734 = vld [vmem:[%s326 + $0x10] sm:$0xff]
        %v735 = vld [vmem:[%s326 + $0x18] sm:$0xff]
        %v736 = vld [vmem:[%s326 + $0x20] sm:$0xff]
        %v737 = vld [vmem:[%s326 + $0x28] sm:$0xff]
        %v738 = vld [vmem:[%s326 + $0x30] sm:$0xff]
        %v739 = vld [vmem:[%s326 + $0x38] sm:$0xff]
        %v740 = vld [vmem:[%s326 + $0x40] sm:$0xff]
        %v741 = vld [vmem:[%s326 + $0x48] sm:$0xff]
        %v742 = vld [vmem:[%s326 + $0x50] sm:$0xff]
        %v743 = vld [vmem:[%s326 + $0x58] sm:$0xff]
        %v744 = vld [vmem:[%s326 + $0x60] sm:$0xff]
        %v745 = vld [vmem:[%s326 + $0x68] sm:$0xff]
        %v746 = vld [vmem:[%s326 + $0x70] sm:$0xff]
        %v747 = vld [vmem:[%s326 + $0x78] sm:$0xff]
        %v748 = vld [vmem:[%s326 + $0x80] sm:$0xff]
        %v749 = vld [vmem:[%s326 + $0x88] sm:$0xff]
        %v750 = vld [vmem:[%s326 + $0x90] sm:$0xff]
        %v751 = vld [vmem:[%s326 + $0x98] sm:$0xff]
        %v752 = vld [vmem:[%s326 + $0xa0] sm:$0xff]
        %v753 = vld [vmem:[%s326 + $0xa8] sm:$0xff]
        %v754 = vld [vmem:[%s326 + $0xb0] sm:$0xff]
        %v755 = vld [vmem:[%s326 + $0xb8] sm:$0xff]
        %v756 = vld [vmem:[%s326 + $0xc0] sm:$0xff]
        %v757 = vld [vmem:[%s326 + $0xc8] sm:$0xff]
        %v758 = vld [vmem:[%s326 + $0xd0] sm:$0xff]
        %v759 = vld [vmem:[%s326 + $0xd8] sm:$0xff]
        %v760 = vld [vmem:[%s326 + $0xe0] sm:$0xff]
        %v761 = vld [vmem:[%s326 + $0xe8] sm:$0xff]
        %v762 = vld [vmem:[%s326 + $0xf0] sm:$0xff]
        %v763 = vld [vmem:[%s326 + $0xf8] sm:$0xff]
        %v764 = vld [vmem:[%s326 + $0x100] sm:$0xff]
        %v765 = vld [vmem:[%s326 + $0x108] sm:$0xff]
        %v766 = vld [vmem:[%s326 + $0x110] sm:$0xff]
        %v767 = vld [vmem:[%s326 + $0x118] sm:$0xff]
        %v768 = vld [vmem:[%s326 + $0x120] sm:$0xff]
        %v769 = vld [vmem:[%s326 + $0x128] sm:$0xff]
        %v770 = vld [vmem:[%s326 + $0x130] sm:$0xff]
        %v771 = vld [vmem:[%s326 + $0x138] sm:$0xff]
        %v772 = vld [vmem:[%s326 + $0x140] sm:$0xff]
        %v773 = vld [vmem:[%s326 + $0x148] sm:$0xff]
        %v774 = vld [vmem:[%s326 + $0x150] sm:$0xff]
        %v775 = vld [vmem:[%s326 + $0x158] sm:$0xff]
        %v776 = vld [vmem:[%s326 + $0x160] sm:$0xff]
        %v777 = vld [vmem:[%s326 + $0x168] sm:$0xff]
        %v778 = vld [vmem:[%s326 + $0x170] sm:$0xff]
        %v779 = vld [vmem:[%s326 + $0x178] sm:$0xff]
        %v780 = vld [vmem:[%s326 + $0x180] sm:$0xff]
        %v781 = vld [vmem:[%s326 + $0x188] sm:$0xff]
        %v782 = vld [vmem:[%s326 + $0x190] sm:$0xff]
        %v783 = vld [vmem:[%s326 + $0x198] sm:$0xff]
        %v784 = vld [vmem:[%s326 + $0x1a0] sm:$0xff]
        %v785 = vld [vmem:[%s326 + $0x1a8] sm:$0xff]
        %v786 = vld [vmem:[%s326 + $0x1b0] sm:$0xff]
        %v787 = vld [vmem:[%s326 + $0x1b8] sm:$0xff]
        %v788 = vld [vmem:[%s326 + $0x1c0] sm:$0xff]
        %v789 = vld [vmem:[%s326 + $0x1c8] sm:$0xff]
        %v790 = vld [vmem:[%s326 + $0x1d0] sm:$0xff]
        %v791 = vld [vmem:[%s326 + $0x1d8] sm:$0xff]
        %v792 = vld [vmem:[%s326 + $0x1e0] sm:$0xff]
        %v793 = vld [vmem:[%s326 + $0x1e8] sm:$0xff]
        %v794 = vld [vmem:[%s326 + $0x1f0] sm:$0xff]
        %v795 = vld [vmem:[%s326 + $0x1f8] sm:$0xff]
        %796 = vmatprep.subr.mxu0 %v733
        %797 = vmatpush1.msra.mxu0 %v732
        %798 = vmatprep.subr.mxu0 %v737
        %799 = vmatpush1.msra.mxu0 %v736
        %800 = vmatprep.subr.mxu0 %v741
        %801 = vmatpush1.msra.mxu0 %v740
        %802 = vmatprep.subr.mxu0 %v745
        %803 = vmatpush1.msra.mxu0 %v744
        %804 = vmatprep.subr.mxu0 %v749
        %805 = vmatpush1.msra.mxu0 %v748
        %806 = vmatprep.subr.mxu0 %v753
        %807 = vmatpush1.msra.mxu0 %v752
        %808 = vmatprep.subr.mxu0 %v757
        %809 = vmatpush1.msra.mxu0 %v756
        %810 = vmatprep.subr.mxu0 %v761
        %811 = vmatpush1.msra.mxu0 %v760
        %812 = vmatprep.subr.mxu0 %v765
        %813 = vmatpush1.msra.mxu0 %v764
        %814 = vmatprep.subr.mxu0 %v769
        %815 = vmatpush1.msra.mxu0 %v768
        %816 = vmatprep.subr.mxu0 %v773
        %817 = vmatpush1.msra.mxu0 %v772
        %818 = vmatprep.subr.mxu0 %v777
        %819 = vmatpush1.msra.mxu0 %v776
        %820 = vmatprep.subr.mxu0 %v781
        %821 = vmatpush1.msra.mxu0 %v780
        %822 = vmatprep.subr.mxu0 %v785
        %823 = vmatpush1.msra.mxu0 %v784
        %824 = vmatprep.subr.mxu0 %v789
        %825 = vmatpush1.msra.mxu0 %v788
        %826 = vmatprep.subr.mxu0 %v793
        %827 = vmatpush1.msra.mxu0 %v792
        %828 = vmatprep.subr.mxu0 0.0
        %829 = vmatpush1.msra.mxu0 0.0
        %830 = vmatprep.subr.mxu0 0.0
        %831 = vmatpush1.msra.mxu0 0.0
        %832 = vmatprep.subr.mxu0 0.0
        %833 = vmatpush1.msra.mxu0 0.0
        %834 = vmatprep.subr.mxu0 0.0
        %835 = vmatpush1.msra.mxu0 0.0
        %836 = vmatprep.subr.mxu0 0.0
        %837 = vmatpush1.msra.mxu0 0.0
        %838 = vmatprep.subr.mxu0 0.0
        %839 = vmatpush1.msra.mxu0 0.0
        %840 = vmatprep.subr.mxu0 0.0
        %841 = vmatpush1.msra.mxu0 0.0
        %842 = vmatprep.subr.mxu0 0.0
        %843 = vmatpush1.msra.mxu0 0.0
        %844 = vmatprep.subr.mxu0 0.0
        %845 = vmatpush1.msra.mxu0 0.0
        %846 = vmatprep.subr.mxu0 0.0
        %847 = vmatpush1.msra.mxu0 0.0
        %848 = vmatprep.subr.mxu0 0.0
        %849 = vmatpush1.msra.mxu0 0.0
        %850 = vmatprep.subr.mxu0 0.0
        %851 = vmatpush1.msra.mxu0 0.0
        %852 = vmatprep.subr.mxu0 0.0
        %853 = vmatpush1.msra.mxu0 0.0
        %854 = vmatprep.subr.mxu0 0.0
        %855 = vmatpush1.msra.mxu0 0.0
        %856 = vmatprep.subr.mxu0 0.0
        %857 = vmatpush1.msra.mxu0 0.0
        %858 = vmatprep.subr.mxu0 0.0
        %859 = vmatpush1.msra.mxu0 0.0
        %860 = vmatprep.mubr.f32.mxu0 0.0
        %861 = vmatmul.mubr.f32.gmra.mrb[0].mxu0 %v731
        %v862 = vpop.f32.mrb[0].mxu0
        %v863 = vadd.f32 0.0, %v862
        %v864 = vpop.f32.mrb[0].mxu0
        %v865 = vadd.f32 0.0, %v864
        %866 = vdwg.mxu0
        %867 = vmatprep.subr.mxu0 %v735
        %868 = vmatpush1.msra.mxu0 %v734
        %869 = vmatprep.subr.mxu0 %v739
        %870 = vmatpush1.msra.mxu0 %v738
        %871 = vmatprep.subr.mxu0 %v743
        %872 = vmatpush1.msra.mxu0 %v742
        %873 = vmatprep.subr.mxu0 %v747
        %874 = vmatpush1.msra.mxu0 %v746
        %875 = vmatprep.subr.mxu0 %v751
        %876 = vmatpush1.msra.mxu0 %v750
        %877 = vmatprep.subr.mxu0 %v755
        %878 = vmatpush1.msra.mxu0 %v754
        %879 = vmatprep.subr.mxu0 %v759
        %880 = vmatpush1.msra.mxu0 %v758
        %881 = vmatprep.subr.mxu0 %v763
        %882 = vmatpush1.msra.mxu0 %v762
        %883 = vmatprep.subr.mxu0 %v767
        %884 = vmatpush1.msra.mxu0 %v766
        %885 = vmatprep.subr.mxu0 %v771
        %886 = vmatpush1.msra.mxu0 %v770
        %887 = vmatprep.subr.mxu0 %v775
        %888 = vmatpush1.msra.mxu0 %v774
        %889 = vmatprep.subr.mxu0 %v779
        %890 = vmatpush1.msra.mxu0 %v778
        %891 = vmatprep.subr.mxu0 %v783
        %892 = vmatpush1.msra.mxu0 %v782
        %893 = vmatprep.subr.mxu0 %v787
        %894 = vmatpush1.msra.mxu0 %v786
        %895 = vmatprep.subr.mxu0 %v791
        %896 = vmatpush1.msra.mxu0 %v790
        %897 = vmatprep.subr.mxu0 %v795
        %898 = vmatpush1.msra.mxu0 %v794
        %899 = vmatprep.subr.mxu0 0.0
        %900 = vmatpush1.msra.mxu0 0.0
        %901 = vmatprep.subr.mxu0 0.0
        %902 = vmatpush1.msra.mxu0 0.0
        %903 = vmatprep.subr.mxu0 0.0
        %904 = vmatpush1.msra.mxu0 0.0
        %905 = vmatprep.subr.mxu0 0.0
        %906 = vmatpush1.msra.mxu0 0.0
        %907 = vmatprep.subr.mxu0 0.0
        %908 = vmatpush1.msra.mxu0 0.0
        %909 = vmatprep.subr.mxu0 0.0
        %910 = vmatpush1.msra.mxu0 0.0
        %911 = vmatprep.subr.mxu0 0.0
        %912 = vmatpush1.msra.mxu0 0.0
        %913 = vmatprep.subr.mxu0 0.0
        %914 = vmatpush1.msra.mxu0 0.0
        %915 = vmatprep.subr.mxu0 0.0
        %916 = vmatpush1.msra.mxu0 0.0
        %917 = vmatprep.subr.mxu0 0.0
        %918 = vmatpush1.msra.mxu0 0.0
        %919 = vmatprep.subr.mxu0 0.0
        %920 = vmatpush1.msra.mxu0 0.0
        %921 = vmatprep.subr.mxu0 0.0
        %922 = vmatpush1.msra.mxu0 0.0
        %923 = vmatprep.subr.mxu0 0.0
        %924 = vmatpush1.msra.mxu0 0.0
        %925 = vmatprep.subr.mxu0 0.0
        %926 = vmatpush1.msra.mxu0 0.0
        %927 = vmatprep.subr.mxu0 0.0
        %928 = vmatpush1.msra.mxu0 0.0
        %929 = vmatprep.subr.mxu0 0.0
        %930 = vmatpush1.msra.mxu0 0.0
        %931 = vmatprep.mubr.f32.mxu0 0.0
        %932 = vmatmul.mubr.f32.gmra.mrb[0].mxu0 %v731
        %v933 = vpop.f32.mrb[0].mxu0
        %v934 = vadd.f32 0.0, %v933
        %v935 = vpop.f32.mrb[0].mxu0
        %v936 = vadd.f32 0.0, %v935
        %937 = vdwg.mxu0
        %v938 = vadd.f32 %v727, %v863
        %v939 = vadd.f32 %v728, %v865
        %v940 = vadd.f32 %v729, %v934
        %v941 = vadd.f32 %v730, %v936
        %v942 = vxor.u32 %v938, 2147483648
        %v943 = vmul.f32 %v942, 1.442695
        %v944 = vpow.pop %v943
        %v945 = vadd.f32 %v944, 1.0
        %v946 = vrcp.pop %v945
        %v947 = vmul.f32 1.0, %v946
        %v948 = vxor.u32 %v939, 2147483648
        %v949 = vmul.f32 %v948, 1.442695
        %v950 = vpow.pop %v949
        %v951 = vadd.f32 %v950, 1.0
        %v952 = vrcp.pop %v951
        %v953 = vmul.f32 1.0, %v952
        %v954 = vtanh.pop %v940
        %v955 = vxor.u32 %v941, 2147483648
        %v956 = vmul.f32 %v955, 1.442695
        %v957 = vpow.pop %v956
        %v958 = vadd.f32 %v957, 1.0
        %v959 = vrcp.pop %v958
        %v960 = vmul.f32 1.0, %v959
        %v961 = vld [vmem:[#allocation3] sm:$0xff]
        %v962 = vmul.f32 %v953, %v961
        %v963 = vmul.f32 %v947, %v954
        %v964 = vadd.f32 %v962, %v963
        %v965 = vtanh.pop %v964
        %v966 = vmul.f32 %v960, %v965
        %v967 = vstv %s723
        %vm968 = vcmp.lt.s32.totalorder %v967, %v721
        %v969 = vsel %vm968, 1, 0
        %970 = vset.pattern.permute.xlu0 0
        %971 = vperm.xlu0 %970, %v969
        %v972 = vpop.permute.xlu0 %971
        %vm973 = vcmp.eq.s32.totalorder %v972, 1
        %v974 = vsel %vm973, %v964, %v961
        %975 = vst [vmem:[#allocation3] sm:$0xff] %v974
        %v976 = vld [vmem:[#allocation2] sm:$0xff]
        %v977 = vsel %vm973, %v966, %v976
        %978 = vst [vmem:[#allocation2] sm:$0xff] %v977
        %v979 = vsel %vm973, %v966, 0.0
        %s980 = smul.u32 %s722, 8
        %s981 = scalar_lea.vmem %s366, %s980 [#allocation11]
        %982 = vst [vmem:[%s981] sm:$0xff] %v979
        %s983 = smul.u32 %s29, 5
        %s984 = sadd.s32 %s983, 1
        %s985 = sadd.s32 %s720, %s984
        %s986 = smul.u32 %s984, 4
        %s987 = smul.addr %s986, 8
        %s988 = scalar_lea.vmem [#allocation4], %s987
        %v989 = vld [vmem:[%s988] sm:$0xff]
        %v990 = vld [vmem:[%s988 + $0x8] sm:$0xff]
        %v991 = vld [vmem:[%s988 + $0x10] sm:$0xff]
        %v992 = vld [vmem:[%s988 + $0x18] sm:$0xff]
        %v993 = vld [vmem:[#allocation2] sm:$0xff]
        %v994 = vld [vmem:[%s326] sm:$0xff]
        %v995 = vld [vmem:[%s326 + $0x8] sm:$0xff]
        %v996 = vld [vmem:[%s326 + $0x10] sm:$0xff]
        %v997 = vld [vmem:[%s326 + $0x18] sm:$0xff]
        %v998 = vld [vmem:[%s326 + $0x20] sm:$0xff]
        %v999 = vld [vmem:[%s326 + $0x28] sm:$0xff]
        %v1000 = vld [vmem:[%s326 + $0x30] sm:$0xff]
        %v1001 = vld [vmem:[%s326 + $0x38] sm:$0xff]
        %v1002 = vld [vmem:[%s326 + $0x40] sm:$0xff]
        %v1003 = vld [vmem:[%s326 + $0x48] sm:$0xff]
        %v1004 = vld [vmem:[%s326 + $0x50] sm:$0xff]
        %v1005 = vld [vmem:[%s326 + $0x58] sm:$0xff]
        %v1006 = vld [vmem:[%s326 + $0x60] sm:$0xff]
        %v1007 = vld [vmem:[%s326 + $0x68] sm:$0xff]
        %v1008 = vld [vmem:[%s326 + $0x70] sm:$0xff]
        %v1009 = vld [vmem:[%s326 + $0x78] sm:$0xff]
        %v1010 = vld [vmem:[%s326 + $0x80] sm:$0xff]
        %v1011 = vld [vmem:[%s326 + $0x88] sm:$0xff]
        %v1012 = vld [vmem:[%s326 + $0x90] sm:$0xff]
        %v1013 = vld [vmem:[%s326 + $0x98] sm:$0xff]
        %v1014 = vld [vmem:[%s326 + $0xa0] sm:$0xff]
        %v1015 = vld [vmem:[%s326 + $0xa8] sm:$0xff]
        %v1016 = vld [vmem:[%s326 + $0xb0] sm:$0xff]
        %v1017 = vld [vmem:[%s326 + $0xb8] sm:$0xff]
        %v1018 = vld [vmem:[%s326 + $0xc0] sm:$0xff]
        %v1019 = vld [vmem:[%s326 + $0xc8] sm:$0xff]
        %v1020 = vld [vmem:[%s326 + $0xd0] sm:$0xff]
        %v1021 = vld [vmem:[%s326 + $0xd8] sm:$0xff]
        %v1022 = vld [vmem:[%s326 + $0xe0] sm:$0xff]
        %v1023 = vld [vmem:[%s326 + $0xe8] sm:$0xff]
        %v1024 = vld [vmem:[%s326 + $0xf0] sm:$0xff]
        %v1025 = vld [vmem:[%s326 + $0xf8] sm:$0xff]
        %v1026 = vld [vmem:[%s326 + $0x100] sm:$0xff]
        %v1027 = vld [vmem:[%s326 + $0x108] sm:$0xff]
        %v1028 = vld [vmem:[%s326 + $0x110] sm:$0xff]
        %v1029 = vld [vmem:[%s326 + $0x118] sm:$0xff]
        %v1030 = vld [vmem:[%s326 + $0x120] sm:$0xff]
        %v1031 = vld [vmem:[%s326 + $0x128] sm:$0xff]
        %v1032 = vld [vmem:[%s326 + $0x130] sm:$0xff]
        %v1033 = vld [vmem:[%s326 + $0x138] sm:$0xff]
        %v1034 = vld [vmem:[%s326 + $0x140] sm:$0xff]
        %v1035 = vld [vmem:[%s326 + $0x148] sm:$0xff]
        %v1036 = vld [vmem:[%s326 + $0x150] sm:$0xff]
        %v1037 = vld [vmem:[%s326 + $0x158] sm:$0xff]
        %v1038 = vld [vmem:[%s326 + $0x160] sm:$0xff]
        %v1039 = vld [vmem:[%s326 + $0x168] sm:$0xff]
        %v1040 = vld [vmem:[%s326 + $0x170] sm:$0xff]
        %v1041 = vld [vmem:[%s326 + $0x178] sm:$0xff]
        %v1042 = vld [vmem:[%s326 + $0x180] sm:$0xff]
        %v1043 = vld [vmem:[%s326 + $0x188] sm:$0xff]
        %v1044 = vld [vmem:[%s326 + $0x190] sm:$0xff]
        %v1045 = vld [vmem:[%s326 + $0x198] sm:$0xff]
        %v1046 = vld [vmem:[%s326 + $0x1a0] sm:$0xff]
        %v1047 = vld [vmem:[%s326 + $0x1a8] sm:$0xff]
        %v1048 = vld [vmem:[%s326 + $0x1b0] sm:$0xff]
        %v1049 = vld [vmem:[%s326 + $0x1b8] sm:$0xff]
        %v1050 = vld [vmem:[%s326 + $0x1c0] sm:$0xff]
        %v1051 = vld [vmem:[%s326 + $0x1c8] sm:$0xff]
        %v1052 = vld [vmem:[%s326 + $0x1d0] sm:$0xff]
        %v1053 = vld [vmem:[%s326 + $0x1d8] sm:$0xff]
        %v1054 = vld [vmem:[%s326 + $0x1e0] sm:$0xff]
        %v1055 = vld [vmem:[%s326 + $0x1e8] sm:$0xff]
        %v1056 = vld [vmem:[%s326 + $0x1f0] sm:$0xff]
        %v1057 = vld [vmem:[%s326 + $0x1f8] sm:$0xff]
        %1058 = vmatprep.subr.mxu0 %v995
        %1059 = vmatpush1.msra.mxu0 %v994
        %1060 = vmatprep.subr.mxu0 %v999
        %1061 = vmatpush1.msra.mxu0 %v998
        %1062 = vmatprep.subr.mxu0 %v1003
        %1063 = vmatpush1.msra.mxu0 %v1002
        %1064 = vmatprep.subr.mxu0 %v1007
        %1065 = vmatpush1.msra.mxu0 %v1006
        %1066 = vmatprep.subr.mxu0 %v1011
        %1067 = vmatpush1.msra.mxu0 %v1010
        %1068 = vmatprep.subr.mxu0 %v1015
        %1069 = vmatpush1.msra.mxu0 %v1014
        %1070 = vmatprep.subr.mxu0 %v1019
        %1071 = vmatpush1.msra.mxu0 %v1018
        %1072 = vmatprep.subr.mxu0 %v1023
        %1073 = vmatpush1.msra.mxu0 %v1022
        %1074 = vmatprep.subr.mxu0 %v1027
        %1075 = vmatpush1.msra.mxu0 %v1026
        %1076 = vmatprep.subr.mxu0 %v1031
        %1077 = vmatpush1.msra.mxu0 %v1030
        %1078 = vmatprep.subr.mxu0 %v1035
        %1079 = vmatpush1.msra.mxu0 %v1034
        %1080 = vmatprep.subr.mxu0 %v1039
        %1081 = vmatpush1.msra.mxu0 %v1038
        %1082 = vmatprep.subr.mxu0 %v1043
        %1083 = vmatpush1.msra.mxu0 %v1042
        %1084 = vmatprep.subr.mxu0 %v1047
        %1085 = vmatpush1.msra.mxu0 %v1046
        %1086 = vmatprep.subr.mxu0 %v1051
        %1087 = vmatpush1.msra.mxu0 %v1050
        %1088 = vmatprep.subr.mxu0 %v1055
        %1089 = vmatpush1.msra.mxu0 %v1054
        %1090 = vmatprep.subr.mxu0 0.0
        %1091 = vmatpush1.msra.mxu0 0.0
        %1092 = vmatprep.subr.mxu0 0.0
        %1093 = vmatpush1.msra.mxu0 0.0
        %1094 = vmatprep.subr.mxu0 0.0
        %1095 = vmatpush1.msra.mxu0 0.0
        %1096 = vmatprep.subr.mxu0 0.0
        %1097 = vmatpush1.msra.mxu0 0.0
        %1098 = vmatprep.subr.mxu0 0.0
        %1099 = vmatpush1.msra.mxu0 0.0
        %1100 = vmatprep.subr.mxu0 0.0
        %1101 = vmatpush1.msra.mxu0 0.0
        %1102 = vmatprep.subr.mxu0 0.0
        %1103 = vmatpush1.msra.mxu0 0.0
        %1104 = vmatprep.subr.mxu0 0.0
        %1105 = vmatpush1.msra.mxu0 0.0
        %1106 = vmatprep.subr.mxu0 0.0
        %1107 = vmatpush1.msra.mxu0 0.0
        %1108 = vmatprep.subr.mxu0 0.0
        %1109 = vmatpush1.msra.mxu0 0.0
        %1110 = vmatprep.subr.mxu0 0.0
        %1111 = vmatpush1.msra.mxu0 0.0
        %1112 = vmatprep.subr.mxu0 0.0
        %1113 = vmatpush1.msra.mxu0 0.0
        %1114 = vmatprep.subr.mxu0 0.0
        %1115 = vmatpush1.msra.mxu0 0.0
        %1116 = vmatprep.subr.mxu0 0.0
        %1117 = vmatpush1.msra.mxu0 0.0
        %1118 = vmatprep.subr.mxu0 0.0
        %1119 = vmatpush1.msra.mxu0 0.0
        %1120 = vmatprep.subr.mxu0 0.0
        %1121 = vmatpush1.msra.mxu0 0.0
        %1122 = vmatprep.mubr.f32.mxu0 0.0
        %1123 = vmatmul.mubr.f32.gmra.mrb[0].mxu0 %v993
        %v1124 = vpop.f32.mrb[0].mxu0
        %v1125 = vadd.f32 0.0, %v1124
        %v1126 = vpop.f32.mrb[0].mxu0
        %v1127 = vadd.f32 0.0, %v1126
        %1128 = vdwg.mxu0
        %1129 = vmatprep.subr.mxu0 %v997
        %1130 = vmatpush1.msra.mxu0 %v996
        %1131 = vmatprep.subr.mxu0 %v1001
        %1132 = vmatpush1.msra.mxu0 %v1000
        %1133 = vmatprep.subr.mxu0 %v1005
        %1134 = vmatpush1.msra.mxu0 %v1004
        %1135 = vmatprep.subr.mxu0 %v1009
        %1136 = vmatpush1.msra.mxu0 %v1008
        %1137 = vmatprep.subr.mxu0 %v1013
        %1138 = vmatpush1.msra.mxu0 %v1012
        %1139 = vmatprep.subr.mxu0 %v1017
        %1140 = vmatpush1.msra.mxu0 %v1016
        %1141 = vmatprep.subr.mxu0 %v1021
        %1142 = vmatpush1.msra.mxu0 %v1020
        %1143 = vmatprep.subr.mxu0 %v1025
        %1144 = vmatpush1.msra.mxu0 %v1024
        %1145 = vmatprep.subr.mxu0 %v1029
        %1146 = vmatpush1.msra.mxu0 %v1028
        %1147 = vmatprep.subr.mxu0 %v1033
        %1148 = vmatpush1.msra.mxu0 %v1032
        %1149 = vmatprep.subr.mxu0 %v1037
        %1150 = vmatpush1.msra.mxu0 %v1036
        %1151 = vmatprep.subr.mxu0 %v1041
        %1152 = vmatpush1.msra.mxu0 %v1040
        %1153 = vmatprep.subr.mxu0 %v1045
        %1154 = vmatpush1.msra.mxu0 %v1044
        %1155 = vmatprep.subr.mxu0 %v1049
        %1156 = vmatpush1.msra.mxu0 %v1048
        %1157 = vmatprep.subr.mxu0 %v1053
        %1158 = vmatpush1.msra.mxu0 %v1052
        %1159 = vmatprep.subr.mxu0 %v1057
        %1160 = vmatpush1.msra.mxu0 %v1056
        %1161 = vmatprep.subr.mxu0 0.0
        %1162 = vmatpush1.msra.mxu0 0.0
        %1163 = vmatprep.subr.mxu0 0.0
        %1164 = vmatpush1.msra.mxu0 0.0
        %1165 = vmatprep.subr.mxu0 0.0
        %1166 = vmatpush1.msra.mxu0 0.0
        %1167 = vmatprep.subr.mxu0 0.0
        %1168 = vmatpush1.msra.mxu0 0.0
        %1169 = vmatprep.subr.mxu0 0.0
        %1170 = vmatpush1.msra.mxu0 0.0
        %1171 = vmatprep.subr.mxu0 0.0
        %1172 = vmatpush1.msra.mxu0 0.0
        %1173 = vmatprep.subr.mxu0 0.0
        %1174 = vmatpush1.msra.mxu0 0.0
        %1175 = vmatprep.subr.mxu0 0.0
        %1176 = vmatpush1.msra.mxu0 0.0
        %1177 = vmatprep.subr.mxu0 0.0
        %1178 = vmatpush1.msra.mxu0 0.0
        %1179 = vmatprep.subr.mxu0 0.0
        %1180 = vmatpush1.msra.mxu0 0.0
        %1181 = vmatprep.subr.mxu0 0.0
        %1182 = vmatpush1.msra.mxu0 0.0
        %1183 = vmatprep.subr.mxu0 0.0
        %1184 = vmatpush1.msra.mxu0 0.0
        %1185 = vmatprep.subr.mxu0 0.0
        %1186 = vmatpush1.msra.mxu0 0.0
        %1187 = vmatprep.subr.mxu0 0.0
        %1188 = vmatpush1.msra.mxu0 0.0
        %1189 = vmatprep.subr.mxu0 0.0
        %1190 = vmatpush1.msra.mxu0 0.0
        %1191 = vmatprep.subr.mxu0 0.0
        %1192 = vmatpush1.msra.mxu0 0.0
        %1193 = vmatprep.mubr.f32.mxu0 0.0
        %1194 = vmatmul.mubr.f32.gmra.mrb[0].mxu0 %v993
        %v1195 = vpop.f32.mrb[0].mxu0
        %v1196 = vadd.f32 0.0, %v1195
        %v1197 = vpop.f32.mrb[0].mxu0
        %v1198 = vadd.f32 0.0, %v1197
        %1199 = vdwg.mxu0
        %v1200 = vadd.f32 %v989, %v1125
        %v1201 = vadd.f32 %v990, %v1127
        %v1202 = vadd.f32 %v991, %v1196
        %v1203 = vadd.f32 %v992, %v1198
        %v1204 = vxor.u32 %v1200, 2147483648
        %v1205 = vmul.f32 %v1204, 1.442695
        %v1206 = vpow.pop %v1205
        %v1207 = vadd.f32 %v1206, 1.0
        %v1208 = vrcp.pop %v1207
        %v1209 = vmul.f32 1.0, %v1208
        %v1210 = vxor.u32 %v1201, 2147483648
        %v1211 = vmul.f32 %v1210, 1.442695
        %v1212 = vpow.pop %v1211
        %v1213 = vadd.f32 %v1212, 1.0
        %v1214 = vrcp.pop %v1213
        %v1215 = vmul.f32 1.0, %v1214
        %v1216 = vtanh.pop %v1202
        %v1217 = vxor.u32 %v1203, 2147483648
        %v1218 = vmul.f32 %v1217, 1.442695
        %v1219 = vpow.pop %v1218
        %v1220 = vadd.f32 %v1219, 1.0
        %v1221 = vrcp.pop %v1220
        %v1222 = vmul.f32 1.0, %v1221
        %v1223 = vld [vmem:[#allocation3] sm:$0xff]
        %v1224 = vmul.f32 %v1215, %v1223
        %v1225 = vmul.f32 %v1209, %v1216
        %v1226 = vadd.f32 %v1224, %v1225
        %v1227 = vtanh.pop %v1226
        %v1228 = vmul.f32 %v1222, %v1227
        %v1229 = vstv %s985
        %vm1230 = vcmp.lt.s32.totalorder %v1229, %v721
        %v1231 = vsel %vm1230, 1, 0
        %1232 = vset.pattern.permute.xlu0 0
        %1233 = vperm.xlu0 %1232, %v1231
        %v1234 = vpop.permute.xlu0 %1233
        %vm1235 = vcmp.eq.s32.totalorder %v1234, 1
        %v1236 = vsel %vm1235, %v1226, %v1223
        %1237 = vst [vmem:[#allocation3] sm:$0xff] %v1236
        %v1238 = vld [vmem:[#allocation2] sm:$0xff]
        %v1239 = vsel %vm1235, %v1228, %v1238
        %1240 = vst [vmem:[#allocation2] sm:$0xff] %v1239
        %v1241 = vsel %vm1235, %v1228, 0.0
        %s1242 = smul.u32 %s984, 8
        %s1243 = scalar_lea.vmem %s366, %s1242 [#allocation11]
        %1244 = vst [vmem:[%s1243] sm:$0xff] %v1241
        %s1245 = smul.u32 %s29, 3
        %s1246 = sadd.s32 %s1245, 2
        %s1247 = sadd.s32 %s720, %s1246
        %s1248 = smul.u32 %s1246, 4
        %s1249 = smul.addr %s1248, 8
        %s1250 = scalar_lea.vmem [#allocation4], %s1249
        %v1251 = vld [vmem:[%s1250] sm:$0xff]
        %v1252 = vld [vmem:[%s1250 + $0x8] sm:$0xff]
        %v1253 = vld [vmem:[%s1250 + $0x10] sm:$0xff]
        %v1254 = vld [vmem:[%s1250 + $0x18] sm:$0xff]
        %v1255 = vld [vmem:[#allocation2] sm:$0xff]
        %v1256 = vld [vmem:[%s326] sm:$0xff]
        %v1257 = vld [vmem:[%s326 + $0x8] sm:$0xff]
        %v1258 = vld [vmem:[%s326 + $0x10] sm:$0xff]
        %v1259 = vld [vmem:[%s326 + $0x18] sm:$0xff]
        %v1260 = vld [vmem:[%s326 + $0x20] sm:$0xff]
        %v1261 = vld [vmem:[%s326 + $0x28] sm:$0xff]
        %v1262 = vld [vmem:[%s326 + $0x30] sm:$0xff]
        %v1263 = vld [vmem:[%s326 + $0x38] sm:$0xff]
        %v1264 = vld [vmem:[%s326 + $0x40] sm:$0xff]
        %v1265 = vld [vmem:[%s326 + $0x48] sm:$0xff]
        %v1266 = vld [vmem:[%s326 + $0x50] sm:$0xff]
        %v1267 = vld [vmem:[%s326 + $0x58] sm:$0xff]
        %v1268 = vld [vmem:[%s326 + $0x60] sm:$0xff]
        %v1269 = vld [vmem:[%s326 + $0x68] sm:$0xff]
        %v1270 = vld [vmem:[%s326 + $0x70] sm:$0xff]
        %v1271 = vld [vmem:[%s326 + $0x78] sm:$0xff]
        %v1272 = vld [vmem:[%s326 + $0x80] sm:$0xff]
        %v1273 = vld [vmem:[%s326 + $0x88] sm:$0xff]
        %v1274 = vld [vmem:[%s326 + $0x90] sm:$0xff]
        %v1275 = vld [vmem:[%s326 + $0x98] sm:$0xff]
        %v1276 = vld [vmem:[%s326 + $0xa0] sm:$0xff]
        %v1277 = vld [vmem:[%s326 + $0xa8] sm:$0xff]
        %v1278 = vld [vmem:[%s326 + $0xb0] sm:$0xff]
        %v1279 = vld [vmem:[%s326 + $0xb8] sm:$0xff]
        %v1280 = vld [vmem:[%s326 + $0xc0] sm:$0xff]
        %v1281 = vld [vmem:[%s326 + $0xc8] sm:$0xff]
        %v1282 = vld [vmem:[%s326 + $0xd0] sm:$0xff]
        %v1283 = vld [vmem:[%s326 + $0xd8] sm:$0xff]
        %v1284 = vld [vmem:[%s326 + $0xe0] sm:$0xff]
        %v1285 = vld [vmem:[%s326 + $0xe8] sm:$0xff]
        %v1286 = vld [vmem:[%s326 + $0xf0] sm:$0xff]
        %v1287 = vld [vmem:[%s326 + $0xf8] sm:$0xff]
        %v1288 = vld [vmem:[%s326 + $0x100] sm:$0xff]
        %v1289 = vld [vmem:[%s326 + $0x108] sm:$0xff]
        %v1290 = vld [vmem:[%s326 + $0x110] sm:$0xff]
        %v1291 = vld [vmem:[%s326 + $0x118] sm:$0xff]
        %v1292 = vld [vmem:[%s326 + $0x120] sm:$0xff]
        %v1293 = vld [vmem:[%s326 + $0x128] sm:$0xff]
        %v1294 = vld [vmem:[%s326 + $0x130] sm:$0xff]
        %v1295 = vld [vmem:[%s326 + $0x138] sm:$0xff]
        %v1296 = vld [vmem:[%s326 + $0x140] sm:$0xff]
        %v1297 = vld [vmem:[%s326 + $0x148] sm:$0xff]
        %v1298 = vld [vmem:[%s326 + $0x150] sm:$0xff]
        %v1299 = vld [vmem:[%s326 + $0x158] sm:$0xff]
        %v1300 = vld [vmem:[%s326 + $0x160] sm:$0xff]
        %v1301 = vld [vmem:[%s326 + $0x168] sm:$0xff]
        %v1302 = vld [vmem:[%s326 + $0x170] sm:$0xff]
        %v1303 = vld [vmem:[%s326 + $0x178] sm:$0xff]
        %v1304 = vld [vmem:[%s326 + $0x180] sm:$0xff]
        %v1305 = vld [vmem:[%s326 + $0x188] sm:$0xff]
        %v1306 = vld [vmem:[%s326 + $0x190] sm:$0xff]
        %v1307 = vld [vmem:[%s326 + $0x198] sm:$0xff]
        %v1308 = vld [vmem:[%s326 + $0x1a0] sm:$0xff]
        %v1309 = vld [vmem:[%s326 + $0x1a8] sm:$0xff]
        %v1310 = vld [vmem:[%s326 + $0x1b0] sm:$0xff]
        %v1311 = vld [vmem:[%s326 + $0x1b8] sm:$0xff]
        %v1312 = vld [vmem:[%s326 + $0x1c0] sm:$0xff]
        %v1313 = vld [vmem:[%s326 + $0x1c8] sm:$0xff]
        %v1314 = vld [vmem:[%s326 + $0x1d0] sm:$0xff]
        %v1315 = vld [vmem:[%s326 + $0x1d8] sm:$0xff]
        %v1316 = vld [vmem:[%s326 + $0x1e0] sm:$0xff]
        %v1317 = vld [vmem:[%s326 + $0x1e8] sm:$0xff]
        %v1318 = vld [vmem:[%s326 + $0x1f0] sm:$0xff]
        %v1319 = vld [vmem:[%s326 + $0x1f8] sm:$0xff]
        %1320 = vmatprep.subr.mxu0 %v1257
        %1321 = vmatpush1.msra.mxu0 %v1256
        %1322 = vmatprep.subr.mxu0 %v1261
        %1323 = vmatpush1.msra.mxu0 %v1260
        %1324 = vmatprep.subr.mxu0 %v1265
        %1325 = vmatpush1.msra.mxu0 %v1264
        %1326 = vmatprep.subr.mxu0 %v1269
        %1327 = vmatpush1.msra.mxu0 %v1268
        %1328 = vmatprep.subr.mxu0 %v1273
        %1329 = vmatpush1.msra.mxu0 %v1272
        %1330 = vmatprep.subr.mxu0 %v1277
        %1331 = vmatpush1.msra.mxu0 %v1276
        %1332 = vmatprep.subr.mxu0 %v1281
        %1333 = vmatpush1.msra.mxu0 %v1280
        %1334 = vmatprep.subr.mxu0 %v1285
        %1335 = vmatpush1.msra.mxu0 %v1284
        %1336 = vmatprep.subr.mxu0 %v1289
        %1337 = vmatpush1.msra.mxu0 %v1288
        %1338 = vmatprep.subr.mxu0 %v1293
        %1339 = vmatpush1.msra.mxu0 %v1292
        %1340 = vmatprep.subr.mxu0 %v1297
        %1341 = vmatpush1.msra.mxu0 %v1296
        %1342 = vmatprep.subr.mxu0 %v1301
        %1343 = vmatpush1.msra.mxu0 %v1300
        %1344 = vmatprep.subr.mxu0 %v1305
        %1345 = vmatpush1.msra.mxu0 %v1304
        %1346 = vmatprep.subr.mxu0 %v1309
        %1347 = vmatpush1.msra.mxu0 %v1308
        %1348 = vmatprep.subr.mxu0 %v1313
        %1349 = vmatpush1.msra.mxu0 %v1312
        %1350 = vmatprep.subr.mxu0 %v1317
        %1351 = vmatpush1.msra.mxu0 %v1316
        %1352 = vmatprep.subr.mxu0 0.0
        %1353 = vmatpush1.msra.mxu0 0.0
        %1354 = vmatprep.subr.mxu0 0.0
        %1355 = vmatpush1.msra.mxu0 0.0
        %1356 = vmatprep.subr.mxu0 0.0
        %1357 = vmatpush1.msra.mxu0 0.0
        %1358 = vmatprep.subr.mxu0 0.0
        %1359 = vmatpush1.msra.mxu0 0.0
        %1360 = vmatprep.subr.mxu0 0.0
        %1361 = vmatpush1.msra.mxu0 0.0
        %1362 = vmatprep.subr.mxu0 0.0
        %1363 = vmatpush1.msra.mxu0 0.0
        %1364 = vmatprep.subr.mxu0 0.0
        %1365 = vmatpush1.msra.mxu0 0.0
        %1366 = vmatprep.subr.mxu0 0.0
        %1367 = vmatpush1.msra.mxu0 0.0
        %1368 = vmatprep.subr.mxu0 0.0
        %1369 = vmatpush1.msra.mxu0 0.0
        %1370 = vmatprep.subr.mxu0 0.0
        %1371 = vmatpush1.msra.mxu0 0.0
        %1372 = vmatprep.subr.mxu0 0.0
        %1373 = vmatpush1.msra.mxu0 0.0
        %1374 = vmatprep.subr.mxu0 0.0
        %1375 = vmatpush1.msra.mxu0 0.0
        %1376 = vmatprep.subr.mxu0 0.0
        %1377 = vmatpush1.msra.mxu0 0.0
        %1378 = vmatprep.subr.mxu0 0.0
        %1379 = vmatpush1.msra.mxu0 0.0
        %1380 = vmatprep.subr.mxu0 0.0
        %1381 = vmatpush1.msra.mxu0 0.0
        %1382 = vmatprep.subr.mxu0 0.0
        %1383 = vmatpush1.msra.mxu0 0.0
        %1384 = vmatprep.mubr.f32.mxu0 0.0
        %1385 = vmatmul.mubr.f32.gmra.mrb[0].mxu0 %v1255
        %v1386 = vpop.f32.mrb[0].mxu0
        %v1387 = vadd.f32 0.0, %v1386
        %v1388 = vpop.f32.mrb[0].mxu0
        %v1389 = vadd.f32 0.0, %v1388
        %1390 = vdwg.mxu0
        %1391 = vmatprep.subr.mxu0 %v1259
        %1392 = vmatpush1.msra.mxu0 %v1258
        %1393 = vmatprep.subr.mxu0 %v1263
        %1394 = vmatpush1.msra.mxu0 %v1262
        %1395 = vmatprep.subr.mxu0 %v1267
        %1396 = vmatpush1.msra.mxu0 %v1266
        %1397 = vmatprep.subr.mxu0 %v1271
        %1398 = vmatpush1.msra.mxu0 %v1270
        %1399 = vmatprep.subr.mxu0 %v1275
        %1400 = vmatpush1.msra.mxu0 %v1274
        %1401 = vmatprep.subr.mxu0 %v1279
        %1402 = vmatpush1.msra.mxu0 %v1278
        %1403 = vmatprep.subr.mxu0 %v1283
        %1404 = vmatpush1.msra.mxu0 %v1282
        %1405 = vmatprep.subr.mxu0 %v1287
        %1406 = vmatpush1.msra.mxu0 %v1286
        %1407 = vmatprep.subr.mxu0 %v1291
        %1408 = vmatpush1.msra.mxu0 %v1290
        %1409 = vmatprep.subr.mxu0 %v1295
        %1410 = vmatpush1.msra.mxu0 %v1294
        %1411 = vmatprep.subr.mxu0 %v1299
        %1412 = vmatpush1.msra.mxu0 %v1298
        %1413 = vmatprep.subr.mxu0 %v1303
        %1414 = vmatpush1.msra.mxu0 %v1302
        %1415 = vmatprep.subr.mxu0 %v1307
        %1416 = vmatpush1.msra.mxu0 %v1306
        %1417 = vmatprep.subr.mxu0 %v1311
        %1418 = vmatpush1.msra.mxu0 %v1310
        %1419 = vmatprep.subr.mxu0 %v1315
        %1420 = vmatpush1.msra.mxu0 %v1314
        %1421 = vmatprep.subr.mxu0 %v1319
        %1422 = vmatpush1.msra.mxu0 %v1318
        %1423 = vmatprep.subr.mxu0 0.0
        %1424 = vmatpush1.msra.mxu0 0.0
        %1425 = vmatprep.subr.mxu0 0.0
        %1426 = vmatpush1.msra.mxu0 0.0
        %1427 = vmatprep.subr.mxu0 0.0
        %1428 = vmatpush1.msra.mxu0 0.0
        %1429 = vmatprep.subr.mxu0 0.0
        %1430 = vmatpush1.msra.mxu0 0.0
        %1431 = vmatprep.subr.mxu0 0.0
        %1432 = vmatpush1.msra.mxu0 0.0
        %1433 = vmatprep.subr.mxu0 0.0
        %1434 = vmatpush1.msra.mxu0 0.0
        %1435 = vmatprep.subr.mxu0 0.0
        %1436 = vmatpush1.msra.mxu0 0.0
        %1437 = vmatprep.subr.mxu0 0.0
        %1438 = vmatpush1.msra.mxu0 0.0
        %1439 = vmatprep.subr.mxu0 0.0
        %1440 = vmatpush1.msra.mxu0 0.0
        %1441 = vmatprep.subr.mxu0 0.0
        %1442 = vmatpush1.msra.mxu0 0.0
        %1443 = vmatprep.subr.mxu0 0.0
        %1444 = vmatpush1.msra.mxu0 0.0
        %1445 = vmatprep.subr.mxu0 0.0
        %1446 = vmatpush1.msra.mxu0 0.0
        %1447 = vmatprep.subr.mxu0 0.0
        %1448 = vmatpush1.msra.mxu0 0.0
        %1449 = vmatprep.subr.mxu0 0.0
        %1450 = vmatpush1.msra.mxu0 0.0
        %1451 = vmatprep.subr.mxu0 0.0
        %1452 = vmatpush1.msra.mxu0 0.0
        %1453 = vmatprep.subr.mxu0 0.0
        %1454 = vmatpush1.msra.mxu0 0.0
        %1455 = vmatprep.mubr.f32.mxu0 0.0
        %1456 = vmatmul.mubr.f32.gmra.mrb[0].mxu0 %v1255
        %v1457 = vpop.f32.mrb[0].mxu0
        %v1458 = vadd.f32 0.0, %v1457
        %v1459 = vpop.f32.mrb[0].mxu0
        %v1460 = vadd.f32 0.0, %v1459
        %1461 = vdwg.mxu0
        %v1462 = vadd.f32 %v1251, %v1387
        %v1463 = vadd.f32 %v1252, %v1389
        %v1464 = vadd.f32 %v1253, %v1458
        %v1465 = vadd.f32 %v1254, %v1460
        %v1466 = vxor.u32 %v1462, 2147483648
        %v1467 = vmul.f32 %v1466, 1.442695
        %v1468 = vpow.pop %v1467
        %v1469 = vadd.f32 %v1468, 1.0
        %v1470 = vrcp.pop %v1469
        %v1471 = vmul.f32 1.0, %v1470
        %v1472 = vxor.u32 %v1463, 2147483648
        %v1473 = vmul.f32 %v1472, 1.442695
        %v1474 = vpow.pop %v1473
        %v1475 = vadd.f32 %v1474, 1.0
        %v1476 = vrcp.pop %v1475
        %v1477 = vmul.f32 1.0, %v1476
        %v1478 = vtanh.pop %v1464
        %v1479 = vxor.u32 %v1465, 2147483648
        %v1480 = vmul.f32 %v1479, 1.442695
        %v1481 = vpow.pop %v1480
        %v1482 = vadd.f32 %v1481, 1.0
        %v1483 = vrcp.pop %v1482
        %v1484 = vmul.f32 1.0, %v1483
        %v1485 = vld [vmem:[#allocation3] sm:$0xff]
        %v1486 = vmul.f32 %v1477, %v1485
        %v1487 = vmul.f32 %v1471, %v1478
        %v1488 = vadd.f32 %v1486, %v1487
        %v1489 = vtanh.pop %v1488
        %v1490 = vmul.f32 %v1484, %v1489
        %v1491 = vstv %s1247
        %vm1492 = vcmp.lt.s32.totalorder %v1491, %v721
        %v1493 = vsel %vm1492, 1, 0
        %1494 = vset.pattern.permute.xlu0 0
        %1495 = vperm.xlu0 %1494, %v1493
        %v1496 = vpop.permute.xlu0 %1495
        %vm1497 = vcmp.eq.s32.totalorder %v1496, 1
        %v1498 = vsel %vm1497, %v1488, %v1485
        %1499 = vst [vmem:[#allocation3] sm:$0xff] %v1498
        %v1500 = vld [vmem:[#allocation2] sm:$0xff]
        %v1501 = vsel %vm1497, %v1490, %v1500
        %1502 = vst [vmem:[#allocation2] sm:$0xff] %v1501
        %v1503 = vsel %vm1497, %v1490, 0.0
        %s1504 = smul.u32 %s1246, 8
        %s1505 = scalar_lea.vmem %s366, %s1504 [#allocation11]
        %1506 = vst [vmem:[%s1505] sm:$0xff] %v1503
        %s1507 = sadd.s32 %s29, 3
        %s1508 = sadd.s32 %s720, %s1507
        %s1509 = smul.u32 %s1507, 4
        %s1510 = smul.addr %s1509, 8
        %s1511 = scalar_lea.vmem [#allocation4], %s1510
        %v1512 = vld [vmem:[%s1511] sm:$0xff]
        %v1513 = vld [vmem:[%s1511 + $0x8] sm:$0xff]
        %v1514 = vld [vmem:[%s1511 + $0x10] sm:$0xff]
        %v1515 = vld [vmem:[%s1511 + $0x18] sm:$0xff]
        %v1516 = vld [vmem:[#allocation2] sm:$0xff]
        %v1517 = vld [vmem:[%s326] sm:$0xff]
        %v1518 = vld [vmem:[%s326 + $0x8] sm:$0xff]
        %v1519 = vld [vmem:[%s326 + $0x10] sm:$0xff]
        %v1520 = vld [vmem:[%s326 + $0x18] sm:$0xff]
        %v1521 = vld [vmem:[%s326 + $0x20] sm:$0xff]
        %v1522 = vld [vmem:[%s326 + $0x28] sm:$0xff]
        %v1523 = vld [vmem:[%s326 + $0x30] sm:$0xff]
        %v1524 = vld [vmem:[%s326 + $0x38] sm:$0xff]
        %v1525 = vld [vmem:[%s326 + $0x40] sm:$0xff]
        %v1526 = vld [vmem:[%s326 + $0x48] sm:$0xff]
        %v1527 = vld [vmem:[%s326 + $0x50] sm:$0xff]
        %v1528 = vld [vmem:[%s326 + $0x58] sm:$0xff]
        %v1529 = vld [vmem:[%s326 + $0x60] sm:$0xff]
        %v1530 = vld [vmem:[%s326 + $0x68] sm:$0xff]
        %v1531 = vld [vmem:[%s326 + $0x70] sm:$0xff]
        %v1532 = vld [vmem:[%s326 + $0x78] sm:$0xff]
        %v1533 = vld [vmem:[%s326 + $0x80] sm:$0xff]
        %v1534 = vld [vmem:[%s326 + $0x88] sm:$0xff]
        %v1535 = vld [vmem:[%s326 + $0x90] sm:$0xff]
        %v1536 = vld [vmem:[%s326 + $0x98] sm:$0xff]
        %v1537 = vld [vmem:[%s326 + $0xa0] sm:$0xff]
        %v1538 = vld [vmem:[%s326 + $0xa8] sm:$0xff]
        %v1539 = vld [vmem:[%s326 + $0xb0] sm:$0xff]
        %v1540 = vld [vmem:[%s326 + $0xb8] sm:$0xff]
        %v1541 = vld [vmem:[%s326 + $0xc0] sm:$0xff]
        %v1542 = vld [vmem:[%s326 + $0xc8] sm:$0xff]
        %v1543 = vld [vmem:[%s326 + $0xd0] sm:$0xff]
        %v1544 = vld [vmem:[%s326 + $0xd8] sm:$0xff]
        %v1545 = vld [vmem:[%s326 + $0xe0] sm:$0xff]
        %v1546 = vld [vmem:[%s326 + $0xe8] sm:$0xff]
        %v1547 = vld [vmem:[%s326 + $0xf0] sm:$0xff]
        %v1548 = vld [vmem:[%s326 + $0xf8] sm:$0xff]
        %v1549 = vld [vmem:[%s326 + $0x100] sm:$0xff]
        %v1550 = vld [vmem:[%s326 + $0x108] sm:$0xff]
        %v1551 = vld [vmem:[%s326 + $0x110] sm:$0xff]
        %v1552 = vld [vmem:[%s326 + $0x118] sm:$0xff]
        %v1553 = vld [vmem:[%s326 + $0x120] sm:$0xff]
        %v1554 = vld [vmem:[%s326 + $0x128] sm:$0xff]
        %v1555 = vld [vmem:[%s326 + $0x130] sm:$0xff]
        %v1556 = vld [vmem:[%s326 + $0x138] sm:$0xff]
        %v1557 = vld [vmem:[%s326 + $0x140] sm:$0xff]
        %v1558 = vld [vmem:[%s326 + $0x148] sm:$0xff]
        %v1559 = vld [vmem:[%s326 + $0x150] sm:$0xff]
        %v1560 = vld [vmem:[%s326 + $0x158] sm:$0xff]
        %v1561 = vld [vmem:[%s326 + $0x160] sm:$0xff]
        %v1562 = vld [vmem:[%s326 + $0x168] sm:$0xff]
        %v1563 = vld [vmem:[%s326 + $0x170] sm:$0xff]
        %v1564 = vld [vmem:[%s326 + $0x178] sm:$0xff]
        %v1565 = vld [vmem:[%s326 + $0x180] sm:$0xff]
        %v1566 = vld [vmem:[%s326 + $0x188] sm:$0xff]
        %v1567 = vld [vmem:[%s326 + $0x190] sm:$0xff]
        %v1568 = vld [vmem:[%s326 + $0x198] sm:$0xff]
        %v1569 = vld [vmem:[%s326 + $0x1a0] sm:$0xff]
        %v1570 = vld [vmem:[%s326 + $0x1a8] sm:$0xff]
        %v1571 = vld [vmem:[%s326 + $0x1b0] sm:$0xff]
        %v1572 = vld [vmem:[%s326 + $0x1b8] sm:$0xff]
        %v1573 = vld [vmem:[%s326 + $0x1c0] sm:$0xff]
        %v1574 = vld [vmem:[%s326 + $0x1c8] sm:$0xff]
        %v1575 = vld [vmem:[%s326 + $0x1d0] sm:$0xff]
        %v1576 = vld [vmem:[%s326 + $0x1d8] sm:$0xff]
        %v1577 = vld [vmem:[%s326 + $0x1e0] sm:$0xff]
        %v1578 = vld [vmem:[%s326 + $0x1e8] sm:$0xff]
        %v1579 = vld [vmem:[%s326 + $0x1f0] sm:$0xff]
        %v1580 = vld [vmem:[%s326 + $0x1f8] sm:$0xff]
        %1581 = vmatprep.subr.mxu0 %v1518
        %1582 = vmatpush1.msra.mxu0 %v1517
        %1583 = vmatprep.subr.mxu0 %v1522
        %1584 = vmatpush1.msra.mxu0 %v1521
        %1585 = vmatprep.subr.mxu0 %v1526
        %1586 = vmatpush1.msra.mxu0 %v1525
        %1587 = vmatprep.subr.mxu0 %v1530
        %1588 = vmatpush1.msra.mxu0 %v1529
        %1589 = vmatprep.subr.mxu0 %v1534
        %1590 = vmatpush1.msra.mxu0 %v1533
        %1591 = vmatprep.subr.mxu0 %v1538
        %1592 = vmatpush1.msra.mxu0 %v1537
        %1593 = vmatprep.subr.mxu0 %v1542
        %1594 = vmatpush1.msra.mxu0 %v1541
        %1595 = vmatprep.subr.mxu0 %v1546
        %1596 = vmatpush1.msra.mxu0 %v1545
        %1597 = vmatprep.subr.mxu0 %v1550
        %1598 = vmatpush1.msra.mxu0 %v1549
        %1599 = vmatprep.subr.mxu0 %v1554
        %1600 = vmatpush1.msra.mxu0 %v1553
        %1601 = vmatprep.subr.mxu0 %v1558
        %1602 = vmatpush1.msra.mxu0 %v1557
        %1603 = vmatprep.subr.mxu0 %v1562
        %1604 = vmatpush1.msra.mxu0 %v1561
        %1605 = vmatprep.subr.mxu0 %v1566
        %1606 = vmatpush1.msra.mxu0 %v1565
        %1607 = vmatprep.subr.mxu0 %v1570
        %1608 = vmatpush1.msra.mxu0 %v1569
        %1609 = vmatprep.subr.mxu0 %v1574
        %1610 = vmatpush1.msra.mxu0 %v1573
        %1611 = vmatprep.subr.mxu0 %v1578
        %1612 = vmatpush1.msra.mxu0 %v1577
        %1613 = vmatprep.subr.mxu0 0.0
        %1614 = vmatpush1.msra.mxu0 0.0
        %1615 = vmatprep.subr.mxu0 0.0
        %1616 = vmatpush1.msra.mxu0 0.0
        %1617 = vmatprep.subr.mxu0 0.0
        %1618 = vmatpush1.msra.mxu0 0.0
        %1619 = vmatprep.subr.mxu0 0.0
        %1620 = vmatpush1.msra.mxu0 0.0
        %1621 = vmatprep.subr.mxu0 0.0
        %1622 = vmatpush1.msra.mxu0 0.0
        %1623 = vmatprep.subr.mxu0 0.0
        %1624 = vmatpush1.msra.mxu0 0.0
        %1625 = vmatprep.subr.mxu0 0.0
        %1626 = vmatpush1.msra.mxu0 0.0
        %1627 = vmatprep.subr.mxu0 0.0
        %1628 = vmatpush1.msra.mxu0 0.0
        %1629 = vmatprep.subr.mxu0 0.0
        %1630 = vmatpush1.msra.mxu0 0.0
        %1631 = vmatprep.subr.mxu0 0.0
        %1632 = vmatpush1.msra.mxu0 0.0
        %1633 = vmatprep.subr.mxu0 0.0
        %1634 = vmatpush1.msra.mxu0 0.0
        %1635 = vmatprep.subr.mxu0 0.0
        %1636 = vmatpush1.msra.mxu0 0.0
        %1637 = vmatprep.subr.mxu0 0.0
        %1638 = vmatpush1.msra.mxu0 0.0
        %1639 = vmatprep.subr.mxu0 0.0
        %1640 = vmatpush1.msra.mxu0 0.0
        %1641 = vmatprep.subr.mxu0 0.0
        %1642 = vmatpush1.msra.mxu0 0.0
        %1643 = vmatprep.subr.mxu0 0.0
        %1644 = vmatpush1.msra.mxu0 0.0
        %1645 = vmatprep.mubr.f32.mxu0 0.0
        %1646 = vmatmul.mubr.f32.gmra.mrb[0].mxu0 %v1516
        %v1647 = vpop.f32.mrb[0].mxu0
        %v1648 = vadd.f32 0.0, %v1647
        %v1649 = vpop.f32.mrb[0].mxu0
        %v1650 = vadd.f32 0.0, %v1649
        %1651 = vdwg.mxu0
        %1652 = vmatprep.subr.mxu0 %v1520
        %1653 = vmatpush1.msra.mxu0 %v1519
        %1654 = vmatprep.subr.mxu0 %v1524
        %1655 = vmatpush1.msra.mxu0 %v1523
        %1656 = vmatprep.subr.mxu0 %v1528
        %1657 = vmatpush1.msra.mxu0 %v1527
        %1658 = vmatprep.subr.mxu0 %v1532
        %1659 = vmatpush1.msra.mxu0 %v1531
        %1660 = vmatprep.subr.mxu0 %v1536
        %1661 = vmatpush1.msra.mxu0 %v1535
        %1662 = vmatprep.subr.mxu0 %v1540
        %1663 = vmatpush1.msra.mxu0 %v1539
        %1664 = vmatprep.subr.mxu0 %v1544
        %1665 = vmatpush1.msra.mxu0 %v1543
        %1666 = vmatprep.subr.mxu0 %v1548
        %1667 = vmatpush1.msra.mxu0 %v1547
        %1668 = vmatprep.subr.mxu0 %v1552
        %1669 = vmatpush1.msra.mxu0 %v1551
        %1670 = vmatprep.subr.mxu0 %v1556
        %1671 = vmatpush1.msra.mxu0 %v1555
        %1672 = vmatprep.subr.mxu0 %v1560
        %1673 = vmatpush1.msra.mxu0 %v1559
        %1674 = vmatprep.subr.mxu0 %v1564
        %1675 = vmatpush1.msra.mxu0 %v1563
        %1676 = vmatprep.subr.mxu0 %v1568
        %1677 = vmatpush1.msra.mxu0 %v1567
        %1678 = vmatprep.subr.mxu0 %v1572
        %1679 = vmatpush1.msra.mxu0 %v1571
        %1680 = vmatprep.subr.mxu0 %v1576
        %1681 = vmatpush1.msra.mxu0 %v1575
        %1682 = vmatprep.subr.mxu0 %v1580
        %1683 = vmatpush1.msra.mxu0 %v1579
        %1684 = vmatprep.subr.mxu0 0.0
        %1685 = vmatpush1.msra.mxu0 0.0
        %1686 = vmatprep.subr.mxu0 0.0
        %1687 = vmatpush1.msra.mxu0 0.0
        %1688 = vmatprep.subr.mxu0 0.0
        %1689 = vmatpush1.msra.mxu0 0.0
        %1690 = vmatprep.subr.mxu0 0.0
        %1691 = vmatpush1.msra.mxu0 0.0
        %1692 = vmatprep.subr.mxu0 0.0
        %1693 = vmatpush1.msra.mxu0 0.0
        %1694 = vmatprep.subr.mxu0 0.0
        %1695 = vmatpush1.msra.mxu0 0.0
        %1696 = vmatprep.subr.mxu0 0.0
        %1697 = vmatpush1.msra.mxu0 0.0
        %1698 = vmatprep.subr.mxu0 0.0
        %1699 = vmatpush1.msra.mxu0 0.0
        %1700 = vmatprep.subr.mxu0 0.0
        %1701 = vmatpush1.msra.mxu0 0.0
        %1702 = vmatprep.subr.mxu0 0.0
        %1703 = vmatpush1.msra.mxu0 0.0
        %1704 = vmatprep.subr.mxu0 0.0
        %1705 = vmatpush1.msra.mxu0 0.0
        %1706 = vmatprep.subr.mxu0 0.0
        %1707 = vmatpush1.msra.mxu0 0.0
        %1708 = vmatprep.subr.mxu0 0.0
        %1709 = vmatpush1.msra.mxu0 0.0
        %1710 = vmatprep.subr.mxu0 0.0
        %1711 = vmatpush1.msra.mxu0 0.0
        %1712 = vmatprep.subr.mxu0 0.0
        %1713 = vmatpush1.msra.mxu0 0.0
        %1714 = vmatprep.subr.mxu0 0.0
        %1715 = vmatpush1.msra.mxu0 0.0
        %1716 = vmatprep.mubr.f32.mxu0 0.0
        %1717 = vmatmul.mubr.f32.gmra.mrb[0].mxu0 %v1516
        %v1718 = vpop.f32.mrb[0].mxu0
        %v1719 = vadd.f32 0.0, %v1718
        %v1720 = vpop.f32.mrb[0].mxu0
        %v1721 = vadd.f32 0.0, %v1720
        %1722 = vdwg.mxu0
        %v1723 = vadd.f32 %v1512, %v1648
        %v1724 = vadd.f32 %v1513, %v1650
        %v1725 = vadd.f32 %v1514, %v1719
        %v1726 = vadd.f32 %v1515, %v1721
        %v1727 = vxor.u32 %v1723, 2147483648
        %v1728 = vmul.f32 %v1727, 1.442695
        %v1729 = vpow.pop %v1728
        %v1730 = vadd.f32 %v1729, 1.0
        %v1731 = vrcp.pop %v1730
        %v1732 = vmul.f32 1.0, %v1731
        %v1733 = vxor.u32 %v1724, 2147483648
        %v1734 = vmul.f32 %v1733, 1.442695
        %v1735 = vpow.pop %v1734
        %v1736 = vadd.f32 %v1735, 1.0
        %v1737 = vrcp.pop %v1736
        %v1738 = vmul.f32 1.0, %v1737
        %v1739 = vtanh.pop %v1725
        %v1740 = vxor.u32 %v1726, 2147483648
        %v1741 = vmul.f32 %v1740, 1.442695
        %v1742 = vpow.pop %v1741
        %v1743 = vadd.f32 %v1742, 1.0
        %v1744 = vrcp.pop %v1743
        %v1745 = vmul.f32 1.0, %v1744
        %v1746 = vld [vmem:[#allocation3] sm:$0xff]
        %v1747 = vmul.f32 %v1738, %v1746
        %v1748 = vmul.f32 %v1732, %v1739
        %v1749 = vadd.f32 %v1747, %v1748
        %v1750 = vtanh.pop %v1749
        %v1751 = vmul.f32 %v1745, %v1750
        %v1752 = vstv %s1508
        %vm1753 = vcmp.lt.s32.totalorder %v1752, %v721
        %v1754 = vsel %vm1753, 1, 0
        %1755 = vset.pattern.permute.xlu0 0
        %1756 = vperm.xlu0 %1755, %v1754
        %v1757 = vpop.permute.xlu0 %1756
        %vm1758 = vcmp.eq.s32.totalorder %v1757, 1
        %v1759 = vsel %vm1758, %v1749, %v1746
        %1760 = vst [vmem:[#allocation3] sm:$0xff] %v1759
        %v1761 = vld [vmem:[#allocation2] sm:$0xff]
        %v1762 = vsel %vm1758, %v1751, %v1761
        %1763 = vst [vmem:[#allocation2] sm:$0xff] %v1762
        %v1764 = vsel %vm1758, %v1751, 0.0
        %s1765 = smul.u32 %s1507, 8
        %s1766 = scalar_lea.vmem %s366, %s1765 [#allocation11]
        %1767 = vst [vmem:[%s1766] sm:$0xff] %v1764
        %s1768 = ssub.s32 4, %s29
        %s1769 = sadd.s32 %s720, %s1768
        %s1770 = smul.u32 %s1768, 4
        %s1771 = smul.addr %s1770, 8
        %s1772 = scalar_lea.vmem [#allocation4], %s1771
        %v1773 = vld [vmem:[%s1772] sm:$0xff]
        %v1774 = vld [vmem:[%s1772 + $0x8] sm:$0xff]
        %v1775 = vld [vmem:[%s1772 + $0x10] sm:$0xff]
        %v1776 = vld [vmem:[%s1772 + $0x18] sm:$0xff]
        %v1777 = vld [vmem:[#allocation2] sm:$0xff]
        %v1778 = vld [vmem:[%s326] sm:$0xff]
        %v1779 = vld [vmem:[%s326 + $0x8] sm:$0xff]
        %v1780 = vld [vmem:[%s326 + $0x10] sm:$0xff]
        %v1781 = vld [vmem:[%s326 + $0x18] sm:$0xff]
        %v1782 = vld [vmem:[%s326 + $0x20] sm:$0xff]
        %v1783 = vld [vmem:[%s326 + $0x28] sm:$0xff]
        %v1784 = vld [vmem:[%s326 + $0x30] sm:$0xff]
        %v1785 = vld [vmem:[%s326 + $0x38] sm:$0xff]
        %v1786 = vld [vmem:[%s326 + $0x40] sm:$0xff]
        %v1787 = vld [vmem:[%s326 + $0x48] sm:$0xff]
        %v1788 = vld [vmem:[%s326 + $0x50] sm:$0xff]
        %v1789 = vld [vmem:[%s326 + $0x58] sm:$0xff]
        %v1790 = vld [vmem:[%s326 + $0x60] sm:$0xff]
        %v1791 = vld [vmem:[%s326 + $0x68] sm:$0xff]
        %v1792 = vld [vmem:[%s326 + $0x70] sm:$0xff]
        %v1793 = vld [vmem:[%s326 + $0x78] sm:$0xff]
        %v1794 = vld [vmem:[%s326 + $0x80] sm:$0xff]
        %v1795 = vld [vmem:[%s326 + $0x88] sm:$0xff]
        %v1796 = vld [vmem:[%s326 + $0x90] sm:$0xff]
        %v1797 = vld [vmem:[%s326 + $0x98] sm:$0xff]
        %v1798 = vld [vmem:[%s326 + $0xa0] sm:$0xff]
        %v1799 = vld [vmem:[%s326 + $0xa8] sm:$0xff]
        %v1800 = vld [vmem:[%s326 + $0xb0] sm:$0xff]
        %v1801 = vld [vmem:[%s326 + $0xb8] sm:$0xff]
        %v1802 = vld [vmem:[%s326 + $0xc0] sm:$0xff]
        %v1803 = vld [vmem:[%s326 + $0xc8] sm:$0xff]
        %v1804 = vld [vmem:[%s326 + $0xd0] sm:$0xff]
        %v1805 = vld [vmem:[%s326 + $0xd8] sm:$0xff]
        %v1806 = vld [vmem:[%s326 + $0xe0] sm:$0xff]
        %v1807 = vld [vmem:[%s326 + $0xe8] sm:$0xff]
        %v1808 = vld [vmem:[%s326 + $0xf0] sm:$0xff]
        %v1809 = vld [vmem:[%s326 + $0xf8] sm:$0xff]
        %v1810 = vld [vmem:[%s326 + $0x100] sm:$0xff]
        %v1811 = vld [vmem:[%s326 + $0x108] sm:$0xff]
        %v1812 = vld [vmem:[%s326 + $0x110] sm:$0xff]
        %v1813 = vld [vmem:[%s326 + $0x118] sm:$0xff]
        %v1814 = vld [vmem:[%s326 + $0x120] sm:$0xff]
        %v1815 = vld [vmem:[%s326 + $0x128] sm:$0xff]
        %v1816 = vld [vmem:[%s326 + $0x130] sm:$0xff]
        %v1817 = vld [vmem:[%s326 + $0x138] sm:$0xff]
        %v1818 = vld [vmem:[%s326 + $0x140] sm:$0xff]
        %v1819 = vld [vmem:[%s326 + $0x148] sm:$0xff]
        %v1820 = vld [vmem:[%s326 + $0x150] sm:$0xff]
        %v1821 = vld [vmem:[%s326 + $0x158] sm:$0xff]
        %v1822 = vld [vmem:[%s326 + $0x160] sm:$0xff]
        %v1823 = vld [vmem:[%s326 + $0x168] sm:$0xff]
        %v1824 = vld [vmem:[%s326 + $0x170] sm:$0xff]
        %v1825 = vld [vmem:[%s326 + $0x178] sm:$0xff]
        %v1826 = vld [vmem:[%s326 + $0x180] sm:$0xff]
        %v1827 = vld [vmem:[%s326 + $0x188] sm:$0xff]
        %v1828 = vld [vmem:[%s326 + $0x190] sm:$0xff]
        %v1829 = vld [vmem:[%s326 + $0x198] sm:$0xff]
        %v1830 = vld [vmem:[%s326 + $0x1a0] sm:$0xff]
        %v1831 = vld [vmem:[%s326 + $0x1a8] sm:$0xff]
        %v1832 = vld [vmem:[%s326 + $0x1b0] sm:$0xff]
        %v1833 = vld [vmem:[%s326 + $0x1b8] sm:$0xff]
        %v1834 = vld [vmem:[%s326 + $0x1c0] sm:$0xff]
        %v1835 = vld [vmem:[%s326 + $0x1c8] sm:$0xff]
        %v1836 = vld [vmem:[%s326 + $0x1d0] sm:$0xff]
        %v1837 = vld [vmem:[%s326 + $0x1d8] sm:$0xff]
        %v1838 = vld [vmem:[%s326 + $0x1e0] sm:$0xff]
        %v1839 = vld [vmem:[%s326 + $0x1e8] sm:$0xff]
        %v1840 = vld [vmem:[%s326 + $0x1f0] sm:$0xff]
        %v1841 = vld [vmem:[%s326 + $0x1f8] sm:$0xff]
        %1842 = vmatprep.subr.mxu0 %v1779
        %1843 = vmatpush1.msra.mxu0 %v1778
        %1844 = vmatprep.subr.mxu0 %v1783
        %1845 = vmatpush1.msra.mxu0 %v1782
        %1846 = vmatprep.subr.mxu0 %v1787
        %1847 = vmatpush1.msra.mxu0 %v1786
        %1848 = vmatprep.subr.mxu0 %v1791
        %1849 = vmatpush1.msra.mxu0 %v1790
        %1850 = vmatprep.subr.mxu0 %v1795
        %1851 = vmatpush1.msra.mxu0 %v1794
        %1852 = vmatprep.subr.mxu0 %v1799
        %1853 = vmatpush1.msra.mxu0 %v1798
        %1854 = vmatprep.subr.mxu0 %v1803
        %1855 = vmatpush1.msra.mxu0 %v1802
        %1856 = vmatprep.subr.mxu0 %v1807
        %1857 = vmatpush1.msra.mxu0 %v1806
        %1858 = vmatprep.subr.mxu0 %v1811
        %1859 = vmatpush1.msra.mxu0 %v1810
        %1860 = vmatprep.subr.mxu0 %v1815
        %1861 = vmatpush1.msra.mxu0 %v1814
        %1862 = vmatprep.subr.mxu0 %v1819
        %1863 = vmatpush1.msra.mxu0 %v1818
        %1864 = vmatprep.subr.mxu0 %v1823
        %1865 = vmatpush1.msra.mxu0 %v1822
        %1866 = vmatprep.subr.mxu0 %v1827
        %1867 = vmatpush1.msra.mxu0 %v1826
        %1868 = vmatprep.subr.mxu0 %v1831
        %1869 = vmatpush1.msra.mxu0 %v1830
        %1870 = vmatprep.subr.mxu0 %v1835
        %1871 = vmatpush1.msra.mxu0 %v1834
        %1872 = vmatprep.subr.mxu0 %v1839
        %1873 = vmatpush1.msra.mxu0 %v1838
        %1874 = vmatprep.subr.mxu0 0.0
        %1875 = vmatpush1.msra.mxu0 0.0
        %1876 = vmatprep.subr.mxu0 0.0
        %1877 = vmatpush1.msra.mxu0 0.0
        %1878 = vmatprep.subr.mxu0 0.0
        %1879 = vmatpush1.msra.mxu0 0.0
        %1880 = vmatprep.subr.mxu0 0.0
        %1881 = vmatpush1.msra.mxu0 0.0
        %1882 = vmatprep.subr.mxu0 0.0
        %1883 = vmatpush1.msra.mxu0 0.0
        %1884 = vmatprep.subr.mxu0 0.0
        %1885 = vmatpush1.msra.mxu0 0.0
        %1886 = vmatprep.subr.mxu0 0.0
        %1887 = vmatpush1.msra.mxu0 0.0
        %1888 = vmatprep.subr.mxu0 0.0
        %1889 = vmatpush1.msra.mxu0 0.0
        %1890 = vmatprep.subr.mxu0 0.0
        %1891 = vmatpush1.msra.mxu0 0.0
        %1892 = vmatprep.subr.mxu0 0.0
        %1893 = vmatpush1.msra.mxu0 0.0
        %1894 = vmatprep.subr.mxu0 0.0
        %1895 = vmatpush1.msra.mxu0 0.0
        %1896 = vmatprep.subr.mxu0 0.0
        %1897 = vmatpush1.msra.mxu0 0.0
        %1898 = vmatprep.subr.mxu0 0.0
        %1899 = vmatpush1.msra.mxu0 0.0
        %1900 = vmatprep.subr.mxu0 0.0
        %1901 = vmatpush1.msra.mxu0 0.0
        %1902 = vmatprep.subr.mxu0 0.0
        %1903 = vmatpush1.msra.mxu0 0.0
        %1904 = vmatprep.subr.mxu0 0.0
        %1905 = vmatpush1.msra.mxu0 0.0
        %1906 = vmatprep.mubr.f32.mxu0 0.0
        %1907 = vmatmul.mubr.f32.gmra.mrb[0].mxu0 %v1777
        %v1908 = vpop.f32.mrb[0].mxu0
        %v1909 = vadd.f32 0.0, %v1908
        %v1910 = vpop.f32.mrb[0].mxu0
        %v1911 = vadd.f32 0.0, %v1910
        %1912 = vdwg.mxu0
        %1913 = vmatprep.subr.mxu0 %v1781
        %1914 = vmatpush1.msra.mxu0 %v1780
        %1915 = vmatprep.subr.mxu0 %v1785
        %1916 = vmatpush1.msra.mxu0 %v1784
        %1917 = vmatprep.subr.mxu0 %v1789
        %1918 = vmatpush1.msra.mxu0 %v1788
        %1919 = vmatprep.subr.mxu0 %v1793
        %1920 = vmatpush1.msra.mxu0 %v1792
        %1921 = vmatprep.subr.mxu0 %v1797
        %1922 = vmatpush1.msra.mxu0 %v1796
        %1923 = vmatprep.subr.mxu0 %v1801
        %1924 = vmatpush1.msra.mxu0 %v1800
        %1925 = vmatprep.subr.mxu0 %v1805
        %1926 = vmatpush1.msra.mxu0 %v1804
        %1927 = vmatprep.subr.mxu0 %v1809
        %1928 = vmatpush1.msra.mxu0 %v1808
        %1929 = vmatprep.subr.mxu0 %v1813
        %1930 = vmatpush1.msra.mxu0 %v1812
        %1931 = vmatprep.subr.mxu0 %v1817
        %1932 = vmatpush1.msra.mxu0 %v1816
        %1933 = vmatprep.subr.mxu0 %v1821
        %1934 = vmatpush1.msra.mxu0 %v1820
        %1935 = vmatprep.subr.mxu0 %v1825
        %1936 = vmatpush1.msra.mxu0 %v1824
        %1937 = vmatprep.subr.mxu0 %v1829
        %1938 = vmatpush1.msra.mxu0 %v1828
        %1939 = vmatprep.subr.mxu0 %v1833
        %1940 = vmatpush1.msra.mxu0 %v1832
        %1941 = vmatprep.subr.mxu0 %v1837
        %1942 = vmatpush1.msra.mxu0 %v1836
        %1943 = vmatprep.subr.mxu0 %v1841
        %1944 = vmatpush1.msra.mxu0 %v1840
        %1945 = vmatprep.subr.mxu0 0.0
        %1946 = vmatpush1.msra.mxu0 0.0
        %1947 = vmatprep.subr.mxu0 0.0
        %1948 = vmatpush1.msra.mxu0 0.0
        %1949 = vmatprep.subr.mxu0 0.0
        %1950 = vmatpush1.msra.mxu0 0.0
        %1951 = vmatprep.subr.mxu0 0.0
        %1952 = vmatpush1.msra.mxu0 0.0
        %1953 = vmatprep.subr.mxu0 0.0
        %1954 = vmatpush1.msra.mxu0 0.0
        %1955 = vmatprep.subr.mxu0 0.0
        %1956 = vmatpush1.msra.mxu0 0.0
        %1957 = vmatprep.subr.mxu0 0.0
        %1958 = vmatpush1.msra.mxu0 0.0
        %1959 = vmatprep.subr.mxu0 0.0
        %1960 = vmatpush1.msra.mxu0 0.0
        %1961 = vmatprep.subr.mxu0 0.0
        %1962 = vmatpush1.msra.mxu0 0.0
        %1963 = vmatprep.subr.mxu0 0.0
        %1964 = vmatpush1.msra.mxu0 0.0
        %1965 = vmatprep.subr.mxu0 0.0
        %1966 = vmatpush1.msra.mxu0 0.0
        %1967 = vmatprep.subr.mxu0 0.0
        %1968 = vmatpush1.msra.mxu0 0.0
        %1969 = vmatprep.subr.mxu0 0.0
        %1970 = vmatpush1.msra.mxu0 0.0
        %1971 = vmatprep.subr.mxu0 0.0
        %1972 = vmatpush1.msra.mxu0 0.0
        %1973 = vmatprep.subr.mxu0 0.0
        %1974 = vmatpush1.msra.mxu0 0.0
        %1975 = vmatprep.subr.mxu0 0.0
        %1976 = vmatpush1.msra.mxu0 0.0
        %1977 = vmatprep.mubr.f32.mxu0 0.0
        %1978 = vmatmul.mubr.f32.gmra.mrb[0].mxu0 %v1777
        %v1979 = vpop.f32.mrb[0].mxu0
        %v1980 = vadd.f32 0.0, %v1979
        %v1981 = vpop.f32.mrb[0].mxu0
        %v1982 = vadd.f32 0.0, %v1981
        %1983 = vdwg.mxu0
        %v1984 = vadd.f32 %v1773, %v1909
        %v1985 = vadd.f32 %v1774, %v1911
        %v1986 = vadd.f32 %v1775, %v1980
        %v1987 = vadd.f32 %v1776, %v1982
        %v1988 = vxor.u32 %v1984, 2147483648
        %v1989 = vmul.f32 %v1988, 1.442695
        %v1990 = vpow.pop %v1989
        %v1991 = vadd.f32 %v1990, 1.0
        %v1992 = vrcp.pop %v1991
        %v1993 = vmul.f32 1.0, %v1992
        %v1994 = vxor.u32 %v1985, 2147483648
        %v1995 = vmul.f32 %v1994, 1.442695
        %v1996 = vpow.pop %v1995
        %v1997 = vadd.f32 %v1996, 1.0
        %v1998 = vrcp.pop %v1997
        %v1999 = vmul.f32 1.0, %v1998
        %v2000 = vtanh.pop %v1986
        %v2001 = vxor.u32 %v1987, 2147483648
        %v2002 = vmul.f32 %v2001, 1.442695
        %v2003 = vpow.pop %v2002
        %v2004 = vadd.f32 %v2003, 1.0
        %v2005 = vrcp.pop %v2004
        %v2006 = vmul.f32 1.0, %v2005
        %v2007 = vld [vmem:[#allocation3] sm:$0xff]
        %v2008 = vmul.f32 %v1999, %v2007
        %v2009 = vmul.f32 %v1993, %v2000
        %v2010 = vadd.f32 %v2008, %v2009
        %v2011 = vtanh.pop %v2010
        %v2012 = vmul.f32 %v2006, %v2011
        %v2013 = vstv %s1769
        %vm2014 = vcmp.lt.s32.totalorder %v2013, %v721
        %v2015 = vsel %vm2014, 1, 0
        %2016 = vset.pattern.permute.xlu0 0
        %2017 = vperm.xlu0 %2016, %v2015
        %v2018 = vpop.permute.xlu0 %2017
        %vm2019 = vcmp.eq.s32.totalorder %v2018, 1
        %v2020 = vsel %vm2019, %v2010, %v2007
        %2021 = vst [vmem:[#allocation3] sm:$0xff] %v2020
        %v2022 = vld [vmem:[#allocation2] sm:$0xff]
        %v2023 = vsel %vm2019, %v2012, %v2022
        %2024 = vst [vmem:[#allocation2] sm:$0xff] %v2023
        %v2025 = vsel %vm2019, %v2012, 0.0
        %s2026 = smul.u32 %s1768, 8
        %s2027 = scalar_lea.vmem %s366, %s2026 [#allocation11]
        %2028 = vst [vmem:[%s2027] sm:$0xff] %v2025
        %s2029 = smul.u32 %s29, 4294967293
        %s2030 = sadd.s32 %s2029, 5
        %s2031 = sadd.s32 %s720, %s2030
        %s2032 = smul.u32 %s2030, 4
        %s2033 = smul.addr %s2032, 8
        %s2034 = scalar_lea.vmem [#allocation4], %s2033
        %v2035 = vld [vmem:[%s2034] sm:$0xff]
        %v2036 = vld [vmem:[%s2034 + $0x8] sm:$0xff]
        %v2037 = vld [vmem:[%s2034 + $0x10] sm:$0xff]
        %v2038 = vld [vmem:[%s2034 + $0x18] sm:$0xff]
        %v2039 = vld [vmem:[#allocation2] sm:$0xff]
        %v2040 = vld [vmem:[%s326] sm:$0xff]
        %v2041 = vld [vmem:[%s326 + $0x8] sm:$0xff]
        %v2042 = vld [vmem:[%s326 + $0x10] sm:$0xff]
        %v2043 = vld [vmem:[%s326 + $0x18] sm:$0xff]
        %v2044 = vld [vmem:[%s326 + $0x20] sm:$0xff]
        %v2045 = vld [vmem:[%s326 + $0x28] sm:$0xff]
        %v2046 = vld [vmem:[%s326 + $0x30] sm:$0xff]
        %v2047 = vld [vmem:[%s326 + $0x38] sm:$0xff]
        %v2048 = vld [vmem:[%s326 + $0x40] sm:$0xff]
        %v2049 = vld [vmem:[%s326 + $0x48] sm:$0xff]
        %v2050 = vld [vmem:[%s326 + $0x50] sm:$0xff]
        %v2051 = vld [vmem:[%s326 + $0x58] sm:$0xff]
        %v2052 = vld [vmem:[%s326 + $0x60] sm:$0xff]
        %v2053 = vld [vmem:[%s326 + $0x68] sm:$0xff]
        %v2054 = vld [vmem:[%s326 + $0x70] sm:$0xff]
        %v2055 = vld [vmem:[%s326 + $0x78] sm:$0xff]
        %v2056 = vld [vmem:[%s326 + $0x80] sm:$0xff]
        %v2057 = vld [vmem:[%s326 + $0x88] sm:$0xff]
        %v2058 = vld [vmem:[%s326 + $0x90] sm:$0xff]
        %v2059 = vld [vmem:[%s326 + $0x98] sm:$0xff]
        %v2060 = vld [vmem:[%s326 + $0xa0] sm:$0xff]
        %v2061 = vld [vmem:[%s326 + $0xa8] sm:$0xff]
        %v2062 = vld [vmem:[%s326 + $0xb0] sm:$0xff]
        %v2063 = vld [vmem:[%s326 + $0xb8] sm:$0xff]
        %v2064 = vld [vmem:[%s326 + $0xc0] sm:$0xff]
        %v2065 = vld [vmem:[%s326 + $0xc8] sm:$0xff]
        %v2066 = vld [vmem:[%s326 + $0xd0] sm:$0xff]
        %v2067 = vld [vmem:[%s326 + $0xd8] sm:$0xff]
        %v2068 = vld [vmem:[%s326 + $0xe0] sm:$0xff]
        %v2069 = vld [vmem:[%s326 + $0xe8] sm:$0xff]
        %v2070 = vld [vmem:[%s326 + $0xf0] sm:$0xff]
        %v2071 = vld [vmem:[%s326 + $0xf8] sm:$0xff]
        %v2072 = vld [vmem:[%s326 + $0x100] sm:$0xff]
        %v2073 = vld [vmem:[%s326 + $0x108] sm:$0xff]
        %v2074 = vld [vmem:[%s326 + $0x110] sm:$0xff]
        %v2075 = vld [vmem:[%s326 + $0x118] sm:$0xff]
        %v2076 = vld [vmem:[%s326 + $0x120] sm:$0xff]
        %v2077 = vld [vmem:[%s326 + $0x128] sm:$0xff]
        %v2078 = vld [vmem:[%s326 + $0x130] sm:$0xff]
        %v2079 = vld [vmem:[%s326 + $0x138] sm:$0xff]
        %v2080 = vld [vmem:[%s326 + $0x140] sm:$0xff]
        %v2081 = vld [vmem:[%s326 + $0x148] sm:$0xff]
        %v2082 = vld [vmem:[%s326 + $0x150] sm:$0xff]
        %v2083 = vld [vmem:[%s326 + $0x158] sm:$0xff]
        %v2084 = vld [vmem:[%s326 + $0x160] sm:$0xff]
        %v2085 = vld [vmem:[%s326 + $0x168] sm:$0xff]
        %v2086 = vld [vmem:[%s326 + $0x170] sm:$0xff]
        %v2087 = vld [vmem:[%s326 + $0x178] sm:$0xff]
        %v2088 = vld [vmem:[%s326 + $0x180] sm:$0xff]
        %v2089 = vld [vmem:[%s326 + $0x188] sm:$0xff]
        %v2090 = vld [vmem:[%s326 + $0x190] sm:$0xff]
        %v2091 = vld [vmem:[%s326 + $0x198] sm:$0xff]
        %v2092 = vld [vmem:[%s326 + $0x1a0] sm:$0xff]
        %v2093 = vld [vmem:[%s326 + $0x1a8] sm:$0xff]
        %v2094 = vld [vmem:[%s326 + $0x1b0] sm:$0xff]
        %v2095 = vld [vmem:[%s326 + $0x1b8] sm:$0xff]
        %v2096 = vld [vmem:[%s326 + $0x1c0] sm:$0xff]
        %v2097 = vld [vmem:[%s326 + $0x1c8] sm:$0xff]
        %v2098 = vld [vmem:[%s326 + $0x1d0] sm:$0xff]
        %v2099 = vld [vmem:[%s326 + $0x1d8] sm:$0xff]
        %v2100 = vld [vmem:[%s326 + $0x1e0] sm:$0xff]
        %v2101 = vld [vmem:[%s326 + $0x1e8] sm:$0xff]
        %v2102 = vld [vmem:[%s326 + $0x1f0] sm:$0xff]
        %v2103 = vld [vmem:[%s326 + $0x1f8] sm:$0xff]
        %2104 = vmatprep.subr.mxu0 %v2041
        %2105 = vmatpush1.msra.mxu0 %v2040
        %2106 = vmatprep.subr.mxu0 %v2045
        %2107 = vmatpush1.msra.mxu0 %v2044
        %2108 = vmatprep.subr.mxu0 %v2049
        %2109 = vmatpush1.msra.mxu0 %v2048
        %2110 = vmatprep.subr.mxu0 %v2053
        %2111 = vmatpush1.msra.mxu0 %v2052
        %2112 = vmatprep.subr.mxu0 %v2057
        %2113 = vmatpush1.msra.mxu0 %v2056
        %2114 = vmatprep.subr.mxu0 %v2061
        %2115 = vmatpush1.msra.mxu0 %v2060
        %2116 = vmatprep.subr.mxu0 %v2065
        %2117 = vmatpush1.msra.mxu0 %v2064
        %2118 = vmatprep.subr.mxu0 %v2069
        %2119 = vmatpush1.msra.mxu0 %v2068
        %2120 = vmatprep.subr.mxu0 %v2073
        %2121 = vmatpush1.msra.mxu0 %v2072
        %2122 = vmatprep.subr.mxu0 %v2077
        %2123 = vmatpush1.msra.mxu0 %v2076
        %2124 = vmatprep.subr.mxu0 %v2081
        %2125 = vmatpush1.msra.mxu0 %v2080
        %2126 = vmatprep.subr.mxu0 %v2085
        %2127 = vmatpush1.msra.mxu0 %v2084
        %2128 = vmatprep.subr.mxu0 %v2089
        %2129 = vmatpush1.msra.mxu0 %v2088
        %2130 = vmatprep.subr.mxu0 %v2093
        %2131 = vmatpush1.msra.mxu0 %v2092
        %2132 = vmatprep.subr.mxu0 %v2097
        %2133 = vmatpush1.msra.mxu0 %v2096
        %2134 = vmatprep.subr.mxu0 %v2101
        %2135 = vmatpush1.msra.mxu0 %v2100
        %2136 = vmatprep.subr.mxu0 0.0
        %2137 = vmatpush1.msra.mxu0 0.0
        %2138 = vmatprep.subr.mxu0 0.0
        %2139 = vmatpush1.msra.mxu0 0.0
        %2140 = vmatprep.subr.mxu0 0.0
        %2141 = vmatpush1.msra.mxu0 0.0
        %2142 = vmatprep.subr.mxu0 0.0
        %2143 = vmatpush1.msra.mxu0 0.0
        %2144 = vmatprep.subr.mxu0 0.0
        %2145 = vmatpush1.msra.mxu0 0.0
        %2146 = vmatprep.subr.mxu0 0.0
        %2147 = vmatpush1.msra.mxu0 0.0
        %2148 = vmatprep.subr.mxu0 0.0
        %2149 = vmatpush1.msra.mxu0 0.0
        %2150 = vmatprep.subr.mxu0 0.0
        %2151 = vmatpush1.msra.mxu0 0.0
        %2152 = vmatprep.subr.mxu0 0.0
        %2153 = vmatpush1.msra.mxu0 0.0
        %2154 = vmatprep.subr.mxu0 0.0
        %2155 = vmatpush1.msra.mxu0 0.0
        %2156 = vmatprep.subr.mxu0 0.0
        %2157 = vmatpush1.msra.mxu0 0.0
        %2158 = vmatprep.subr.mxu0 0.0
        %2159 = vmatpush1.msra.mxu0 0.0
        %2160 = vmatprep.subr.mxu0 0.0
        %2161 = vmatpush1.msra.mxu0 0.0
        %2162 = vmatprep.subr.mxu0 0.0
        %2163 = vmatpush1.msra.mxu0 0.0
        %2164 = vmatprep.subr.mxu0 0.0
        %2165 = vmatpush1.msra.mxu0 0.0
        %2166 = vmatprep.subr.mxu0 0.0
        %2167 = vmatpush1.msra.mxu0 0.0
        %2168 = vmatprep.mubr.f32.mxu0 0.0
        %2169 = vmatmul.mubr.f32.gmra.mrb[0].mxu0 %v2039
        %v2170 = vpop.f32.mrb[0].mxu0
        %v2171 = vadd.f32 0.0, %v2170
        %v2172 = vpop.f32.mrb[0].mxu0
        %v2173 = vadd.f32 0.0, %v2172
        %2174 = vdwg.mxu0
        %2175 = vmatprep.subr.mxu0 %v2043
        %2176 = vmatpush1.msra.mxu0 %v2042
        %2177 = vmatprep.subr.mxu0 %v2047
        %2178 = vmatpush1.msra.mxu0 %v2046
        %2179 = vmatprep.subr.mxu0 %v2051
        %2180 = vmatpush1.msra.mxu0 %v2050
        %2181 = vmatprep.subr.mxu0 %v2055
        %2182 = vmatpush1.msra.mxu0 %v2054
        %2183 = vmatprep.subr.mxu0 %v2059
        %2184 = vmatpush1.msra.mxu0 %v2058
        %2185 = vmatprep.subr.mxu0 %v2063
        %2186 = vmatpush1.msra.mxu0 %v2062
        %2187 = vmatprep.subr.mxu0 %v2067
        %2188 = vmatpush1.msra.mxu0 %v2066
        %2189 = vmatprep.subr.mxu0 %v2071
        %2190 = vmatpush1.msra.mxu0 %v2070
        %2191 = vmatprep.subr.mxu0 %v2075
        %2192 = vmatpush1.msra.mxu0 %v2074
        %2193 = vmatprep.subr.mxu0 %v2079
        %2194 = vmatpush1.msra.mxu0 %v2078
        %2195 = vmatprep.subr.mxu0 %v2083
        %2196 = vmatpush1.msra.mxu0 %v2082
        %2197 = vmatprep.subr.mxu0 %v2087
        %2198 = vmatpush1.msra.mxu0 %v2086
        %2199 = vmatprep.subr.mxu0 %v2091
        %2200 = vmatpush1.msra.mxu0 %v2090
        %2201 = vmatprep.subr.mxu0 %v2095
        %2202 = vmatpush1.msra.mxu0 %v2094
        %2203 = vmatprep.subr.mxu0 %v2099
        %2204 = vmatpush1.msra.mxu0 %v2098
        %2205 = vmatprep.subr.mxu0 %v2103
        %2206 = vmatpush1.msra.mxu0 %v2102
        %2207 = vmatprep.subr.mxu0 0.0
        %2208 = vmatpush1.msra.mxu0 0.0
        %2209 = vmatprep.subr.mxu0 0.0
        %2210 = vmatpush1.msra.mxu0 0.0
        %2211 = vmatprep.subr.mxu0 0.0
        %2212 = vmatpush1.msra.mxu0 0.0
        %2213 = vmatprep.subr.mxu0 0.0
        %2214 = vmatpush1.msra.mxu0 0.0
        %2215 = vmatprep.subr.mxu0 0.0
        %2216 = vmatpush1.msra.mxu0 0.0
        %2217 = vmatprep.subr.mxu0 0.0
        %2218 = vmatpush1.msra.mxu0 0.0
        %2219 = vmatprep.subr.mxu0 0.0
        %2220 = vmatpush1.msra.mxu0 0.0
        %2221 = vmatprep.subr.mxu0 0.0
        %2222 = vmatpush1.msra.mxu0 0.0
        %2223 = vmatprep.subr.mxu0 0.0
        %2224 = vmatpush1.msra.mxu0 0.0
        %2225 = vmatprep.subr.mxu0 0.0
        %2226 = vmatpush1.msra.mxu0 0.0
        %2227 = vmatprep.subr.mxu0 0.0
        %2228 = vmatpush1.msra.mxu0 0.0
        %2229 = vmatprep.subr.mxu0 0.0
        %2230 = vmatpush1.msra.mxu0 0.0
        %2231 = vmatprep.subr.mxu0 0.0
        %2232 = vmatpush1.msra.mxu0 0.0
        %2233 = vmatprep.subr.mxu0 0.0
        %2234 = vmatpush1.msra.mxu0 0.0
        %2235 = vmatprep.subr.mxu0 0.0
        %2236 = vmatpush1.msra.mxu0 0.0
        %2237 = vmatprep.subr.mxu0 0.0
        %2238 = vmatpush1.msra.mxu0 0.0
        %2239 = vmatprep.mubr.f32.mxu0 0.0
        %2240 = vmatmul.mubr.f32.gmra.mrb[0].mxu0 %v2039
        %v2241 = vpop.f32.mrb[0].mxu0
        %v2242 = vadd.f32 0.0, %v2241
        %v2243 = vpop.f32.mrb[0].mxu0
        %v2244 = vadd.f32 0.0, %v2243
        %2245 = vdwg.mxu0
        %v2246 = vadd.f32 %v2035, %v2171
        %v2247 = vadd.f32 %v2036, %v2173
        %v2248 = vadd.f32 %v2037, %v2242
        %v2249 = vadd.f32 %v2038, %v2244
        %v2250 = vxor.u32 %v2246, 2147483648
        %v2251 = vmul.f32 %v2250, 1.442695
        %v2252 = vpow.pop %v2251
        %v2253 = vadd.f32 %v2252, 1.0
        %v2254 = vrcp.pop %v2253
        %v2255 = vmul.f32 1.0, %v2254
        %v2256 = vxor.u32 %v2247, 2147483648
        %v2257 = vmul.f32 %v2256, 1.442695
        %v2258 = vpow.pop %v2257
        %v2259 = vadd.f32 %v2258, 1.0
        %v2260 = vrcp.pop %v2259
        %v2261 = vmul.f32 1.0, %v2260
        %v2262 = vtanh.pop %v2248
        %v2263 = vxor.u32 %v2249, 2147483648
        %v2264 = vmul.f32 %v2263, 1.442695
        %v2265 = vpow.pop %v2264
        %v2266 = vadd.f32 %v2265, 1.0
        %v2267 = vrcp.pop %v2266
        %v2268 = vmul.f32 1.0, %v2267
        %v2269 = vld [vmem:[#allocation3] sm:$0xff]
        %v2270 = vmul.f32 %v2261, %v2269
        %v2271 = vmul.f32 %v2255, %v2262
        %v2272 = vadd.f32 %v2270, %v2271
        %v2273 = vtanh.pop %v2272
        %v2274 = vmul.f32 %v2268, %v2273
        %v2275 = vstv %s2031
        %vm2276 = vcmp.lt.s32.totalorder %v2275, %v721
        %v2277 = vsel %vm2276, 1, 0
        %2278 = vset.pattern.permute.xlu0 0
        %2279 = vperm.xlu0 %2278, %v2277
        %v2280 = vpop.permute.xlu0 %2279
        %vm2281 = vcmp.eq.s32.totalorder %v2280, 1
        %v2282 = vsel %vm2281, %v2272, %v2269
        %2283 = vst [vmem:[#allocation3] sm:$0xff] %v2282
        %v2284 = vld [vmem:[#allocation2] sm:$0xff]
        %v2285 = vsel %vm2281, %v2274, %v2284
        %2286 = vst [vmem:[#allocation2] sm:$0xff] %v2285
        %v2287 = vsel %vm2281, %v2274, 0.0
        %s2288 = smul.u32 %s2030, 8
        %s2289 = scalar_lea.vmem %s366, %s2288 [#allocation11]
        %2290 = vst [vmem:[%s2289] sm:$0xff] %v2287
        %s2291 = smul.u32 %s29, 4294967291
        %s2292 = sadd.s32 %s2291, 6
        %s2293 = sadd.s32 %s720, %s2292
        %s2294 = smul.u32 %s2292, 4
        %s2295 = smul.addr %s2294, 8
        %s2296 = scalar_lea.vmem [#allocation4], %s2295
        %v2297 = vld [vmem:[%s2296] sm:$0xff]
        %v2298 = vld [vmem:[%s2296 + $0x8] sm:$0xff]
        %v2299 = vld [vmem:[%s2296 + $0x10] sm:$0xff]
        %v2300 = vld [vmem:[%s2296 + $0x18] sm:$0xff]
        %v2301 = vld [vmem:[#allocation2] sm:$0xff]
        %v2302 = vld [vmem:[%s326] sm:$0xff]
        %v2303 = vld [vmem:[%s326 + $0x8] sm:$0xff]
        %v2304 = vld [vmem:[%s326 + $0x10] sm:$0xff]
        %v2305 = vld [vmem:[%s326 + $0x18] sm:$0xff]
        %v2306 = vld [vmem:[%s326 + $0x20] sm:$0xff]
        %v2307 = vld [vmem:[%s326 + $0x28] sm:$0xff]
        %v2308 = vld [vmem:[%s326 + $0x30] sm:$0xff]
        %v2309 = vld [vmem:[%s326 + $0x38] sm:$0xff]
        %v2310 = vld [vmem:[%s326 + $0x40] sm:$0xff]
        %v2311 = vld [vmem:[%s326 + $0x48] sm:$0xff]
        %v2312 = vld [vmem:[%s326 + $0x50] sm:$0xff]
        %v2313 = vld [vmem:[%s326 + $0x58] sm:$0xff]
        %v2314 = vld [vmem:[%s326 + $0x60] sm:$0xff]
        %v2315 = vld [vmem:[%s326 + $0x68] sm:$0xff]
        %v2316 = vld [vmem:[%s326 + $0x70] sm:$0xff]
        %v2317 = vld [vmem:[%s326 + $0x78] sm:$0xff]
        %v2318 = vld [vmem:[%s326 + $0x80] sm:$0xff]
        %v2319 = vld [vmem:[%s326 + $0x88] sm:$0xff]
        %v2320 = vld [vmem:[%s326 + $0x90] sm:$0xff]
        %v2321 = vld [vmem:[%s326 + $0x98] sm:$0xff]
        %v2322 = vld [vmem:[%s326 + $0xa0] sm:$0xff]
        %v2323 = vld [vmem:[%s326 + $0xa8] sm:$0xff]
        %v2324 = vld [vmem:[%s326 + $0xb0] sm:$0xff]
        %v2325 = vld [vmem:[%s326 + $0xb8] sm:$0xff]
        %v2326 = vld [vmem:[%s326 + $0xc0] sm:$0xff]
        %v2327 = vld [vmem:[%s326 + $0xc8] sm:$0xff]
        %v2328 = vld [vmem:[%s326 + $0xd0] sm:$0xff]
        %v2329 = vld [vmem:[%s326 + $0xd8] sm:$0xff]
        %v2330 = vld [vmem:[%s326 + $0xe0] sm:$0xff]
        %v2331 = vld [vmem:[%s326 + $0xe8] sm:$0xff]
        %v2332 = vld [vmem:[%s326 + $0xf0] sm:$0xff]
        %v2333 = vld [vmem:[%s326 + $0xf8] sm:$0xff]
        %v2334 = vld [vmem:[%s326 + $0x100] sm:$0xff]
        %v2335 = vld [vmem:[%s326 + $0x108] sm:$0xff]
        %v2336 = vld [vmem:[%s326 + $0x110] sm:$0xff]
        %v2337 = vld [vmem:[%s326 + $0x118] sm:$0xff]
        %v2338 = vld [vmem:[%s326 + $0x120] sm:$0xff]
        %v2339 = vld [vmem:[%s326 + $0x128] sm:$0xff]
        %v2340 = vld [vmem:[%s326 + $0x130] sm:$0xff]
        %v2341 = vld [vmem:[%s326 + $0x138] sm:$0xff]
        %v2342 = vld [vmem:[%s326 + $0x140] sm:$0xff]
        %v2343 = vld [vmem:[%s326 + $0x148] sm:$0xff]
        %v2344 = vld [vmem:[%s326 + $0x150] sm:$0xff]
        %v2345 = vld [vmem:[%s326 + $0x158] sm:$0xff]
        %v2346 = vld [vmem:[%s326 + $0x160] sm:$0xff]
        %v2347 = vld [vmem:[%s326 + $0x168] sm:$0xff]
        %v2348 = vld [vmem:[%s326 + $0x170] sm:$0xff]
        %v2349 = vld [vmem:[%s326 + $0x178] sm:$0xff]
        %v2350 = vld [vmem:[%s326 + $0x180] sm:$0xff]
        %v2351 = vld [vmem:[%s326 + $0x188] sm:$0xff]
        %v2352 = vld [vmem:[%s326 + $0x190] sm:$0xff]
        %v2353 = vld [vmem:[%s326 + $0x198] sm:$0xff]
        %v2354 = vld [vmem:[%s326 + $0x1a0] sm:$0xff]
        %v2355 = vld [vmem:[%s326 + $0x1a8] sm:$0xff]
        %v2356 = vld [vmem:[%s326 + $0x1b0] sm:$0xff]
        %v2357 = vld [vmem:[%s326 + $0x1b8] sm:$0xff]
        %v2358 = vld [vmem:[%s326 + $0x1c0] sm:$0xff]
        %v2359 = vld [vmem:[%s326 + $0x1c8] sm:$0xff]
        %v2360 = vld [vmem:[%s326 + $0x1d0] sm:$0xff]
        %v2361 = vld [vmem:[%s326 + $0x1d8] sm:$0xff]
        %v2362 = vld [vmem:[%s326 + $0x1e0] sm:$0xff]
        %v2363 = vld [vmem:[%s326 + $0x1e8] sm:$0xff]
        %v2364 = vld [vmem:[%s326 + $0x1f0] sm:$0xff]
        %v2365 = vld [vmem:[%s326 + $0x1f8] sm:$0xff]
        %2366 = vmatprep.subr.mxu0 %v2303
        %2367 = vmatpush1.msra.mxu0 %v2302
        %2368 = vmatprep.subr.mxu0 %v2307
        %2369 = vmatpush1.msra.mxu0 %v2306
        %2370 = vmatprep.subr.mxu0 %v2311
        %2371 = vmatpush1.msra.mxu0 %v2310
        %2372 = vmatprep.subr.mxu0 %v2315
        %2373 = vmatpush1.msra.mxu0 %v2314
        %2374 = vmatprep.subr.mxu0 %v2319
        %2375 = vmatpush1.msra.mxu0 %v2318
        %2376 = vmatprep.subr.mxu0 %v2323
        %2377 = vmatpush1.msra.mxu0 %v2322
        %2378 = vmatprep.subr.mxu0 %v2327
        %2379 = vmatpush1.msra.mxu0 %v2326
        %2380 = vmatprep.subr.mxu0 %v2331
        %2381 = vmatpush1.msra.mxu0 %v2330
        %2382 = vmatprep.subr.mxu0 %v2335
        %2383 = vmatpush1.msra.mxu0 %v2334
        %2384 = vmatprep.subr.mxu0 %v2339
        %2385 = vmatpush1.msra.mxu0 %v2338
        %2386 = vmatprep.subr.mxu0 %v2343
        %2387 = vmatpush1.msra.mxu0 %v2342
        %2388 = vmatprep.subr.mxu0 %v2347
        %2389 = vmatpush1.msra.mxu0 %v2346
        %2390 = vmatprep.subr.mxu0 %v2351
        %2391 = vmatpush1.msra.mxu0 %v2350
        %2392 = vmatprep.subr.mxu0 %v2355
        %2393 = vmatpush1.msra.mxu0 %v2354
        %2394 = vmatprep.subr.mxu0 %v2359
        %2395 = vmatpush1.msra.mxu0 %v2358
        %2396 = vmatprep.subr.mxu0 %v2363
        %2397 = vmatpush1.msra.mxu0 %v2362
        %2398 = vmatprep.subr.mxu0 0.0
        %2399 = vmatpush1.msra.mxu0 0.0
        %2400 = vmatprep.subr.mxu0 0.0
        %2401 = vmatpush1.msra.mxu0 0.0
        %2402 = vmatprep.subr.mxu0 0.0
        %2403 = vmatpush1.msra.mxu0 0.0
        %2404 = vmatprep.subr.mxu0 0.0
        %2405 = vmatpush1.msra.mxu0 0.0
        %2406 = vmatprep.subr.mxu0 0.0
        %2407 = vmatpush1.msra.mxu0 0.0
        %2408 = vmatprep.subr.mxu0 0.0
        %2409 = vmatpush1.msra.mxu0 0.0
        %2410 = vmatprep.subr.mxu0 0.0
        %2411 = vmatpush1.msra.mxu0 0.0
        %2412 = vmatprep.subr.mxu0 0.0
        %2413 = vmatpush1.msra.mxu0 0.0
        %2414 = vmatprep.subr.mxu0 0.0
        %2415 = vmatpush1.msra.mxu0 0.0
        %2416 = vmatprep.subr.mxu0 0.0
        %2417 = vmatpush1.msra.mxu0 0.0
        %2418 = vmatprep.subr.mxu0 0.0
        %2419 = vmatpush1.msra.mxu0 0.0
        %2420 = vmatprep.subr.mxu0 0.0
        %2421 = vmatpush1.msra.mxu0 0.0
        %2422 = vmatprep.subr.mxu0 0.0
        %2423 = vmatpush1.msra.mxu0 0.0
        %2424 = vmatprep.subr.mxu0 0.0
        %2425 = vmatpush1.msra.mxu0 0.0
        %2426 = vmatprep.subr.mxu0 0.0
        %2427 = vmatpush1.msra.mxu0 0.0
        %2428 = vmatprep.subr.mxu0 0.0
        %2429 = vmatpush1.msra.mxu0 0.0
        %2430 = vmatprep.mubr.f32.mxu0 0.0
        %2431 = vmatmul.mubr.f32.gmra.mrb[0].mxu0 %v2301
        %v2432 = vpop.f32.mrb[0].mxu0
        %v2433 = vadd.f32 0.0, %v2432
        %v2434 = vpop.f32.mrb[0].mxu0
        %v2435 = vadd.f32 0.0, %v2434
        %2436 = vdwg.mxu0
        %2437 = vmatprep.subr.mxu0 %v2305
        %2438 = vmatpush1.msra.mxu0 %v2304
        %2439 = vmatprep.subr.mxu0 %v2309
        %2440 = vmatpush1.msra.mxu0 %v2308
        %2441 = vmatprep.subr.mxu0 %v2313
        %2442 = vmatpush1.msra.mxu0 %v2312
        %2443 = vmatprep.subr.mxu0 %v2317
        %2444 = vmatpush1.msra.mxu0 %v2316
        %2445 = vmatprep.subr.mxu0 %v2321
        %2446 = vmatpush1.msra.mxu0 %v2320
        %2447 = vmatprep.subr.mxu0 %v2325
        %2448 = vmatpush1.msra.mxu0 %v2324
        %2449 = vmatprep.subr.mxu0 %v2329
        %2450 = vmatpush1.msra.mxu0 %v2328
        %2451 = vmatprep.subr.mxu0 %v2333
        %2452 = vmatpush1.msra.mxu0 %v2332
        %2453 = vmatprep.subr.mxu0 %v2337
        %2454 = vmatpush1.msra.mxu0 %v2336
        %2455 = vmatprep.subr.mxu0 %v2341
        %2456 = vmatpush1.msra.mxu0 %v2340
        %2457 = vmatprep.subr.mxu0 %v2345
        %2458 = vmatpush1.msra.mxu0 %v2344
        %2459 = vmatprep.subr.mxu0 %v2349
        %2460 = vmatpush1.msra.mxu0 %v2348
        %2461 = vmatprep.subr.mxu0 %v2353
        %2462 = vmatpush1.msra.mxu0 %v2352
        %2463 = vmatprep.subr.mxu0 %v2357
        %2464 = vmatpush1.msra.mxu0 %v2356
        %2465 = vmatprep.subr.mxu0 %v2361
        %2466 = vmatpush1.msra.mxu0 %v2360
        %2467 = vmatprep.subr.mxu0 %v2365
        %2468 = vmatpush1.msra.mxu0 %v2364
        %2469 = vmatprep.subr.mxu0 0.0
        %2470 = vmatpush1.msra.mxu0 0.0
        %2471 = vmatprep.subr.mxu0 0.0
        %2472 = vmatpush1.msra.mxu0 0.0
        %2473 = vmatprep.subr.mxu0 0.0
        %2474 = vmatpush1.msra.mxu0 0.0
        %2475 = vmatprep.subr.mxu0 0.0
        %2476 = vmatpush1.msra.mxu0 0.0
        %2477 = vmatprep.subr.mxu0 0.0
        %2478 = vmatpush1.msra.mxu0 0.0
        %2479 = vmatprep.subr.mxu0 0.0
        %2480 = vmatpush1.msra.mxu0 0.0
        %2481 = vmatprep.subr.mxu0 0.0
        %2482 = vmatpush1.msra.mxu0 0.0
        %2483 = vmatprep.subr.mxu0 0.0
        %2484 = vmatpush1.msra.mxu0 0.0
        %2485 = vmatprep.subr.mxu0 0.0
        %2486 = vmatpush1.msra.mxu0 0.0
        %2487 = vmatprep.subr.mxu0 0.0
        %2488 = vmatpush1.msra.mxu0 0.0
        %2489 = vmatprep.subr.mxu0 0.0
        %2490 = vmatpush1.msra.mxu0 0.0
        %2491 = vmatprep.subr.mxu0 0.0
        %2492 = vmatpush1.msra.mxu0 0.0
        %2493 = vmatprep.subr.mxu0 0.0
        %2494 = vmatpush1.msra.mxu0 0.0
        %2495 = vmatprep.subr.mxu0 0.0
        %2496 = vmatpush1.msra.mxu0 0.0
        %2497 = vmatprep.subr.mxu0 0.0
        %2498 = vmatpush1.msra.mxu0 0.0
        %2499 = vmatprep.subr.mxu0 0.0
        %2500 = vmatpush1.msra.mxu0 0.0
        %2501 = vmatprep.mubr.f32.mxu0 0.0
        %2502 = vmatmul.mubr.f32.gmra.mrb[0].mxu0 %v2301
        %v2503 = vpop.f32.mrb[0].mxu0
        %v2504 = vadd.f32 0.0, %v2503
        %v2505 = vpop.f32.mrb[0].mxu0
        %v2506 = vadd.f32 0.0, %v2505
        %2507 = vdwg.mxu0
        %v2508 = vadd.f32 %v2297, %v2433
        %v2509 = vadd.f32 %v2298, %v2435
        %v2510 = vadd.f32 %v2299, %v2504
        %v2511 = vadd.f32 %v2300, %v2506
        %v2512 = vxor.u32 %v2508, 2147483648
        %v2513 = vmul.f32 %v2512, 1.442695
        %v2514 = vpow.pop %v2513
        %v2515 = vadd.f32 %v2514, 1.0
        %v2516 = vrcp.pop %v2515
        %v2517 = vmul.f32 1.0, %v2516
        %v2518 = vxor.u32 %v2509, 2147483648
        %v2519 = vmul.f32 %v2518, 1.442695
        %v2520 = vpow.pop %v2519
        %v2521 = vadd.f32 %v2520, 1.0
        %v2522 = vrcp.pop %v2521
        %v2523 = vmul.f32 1.0, %v2522
        %v2524 = vtanh.pop %v2510
        %v2525 = vxor.u32 %v2511, 2147483648
        %v2526 = vmul.f32 %v2525, 1.442695
        %v2527 = vpow.pop %v2526
        %v2528 = vadd.f32 %v2527, 1.0
        %v2529 = vrcp.pop %v2528
        %v2530 = vmul.f32 1.0, %v2529
        %v2531 = vld [vmem:[#allocation3] sm:$0xff]
        %v2532 = vmul.f32 %v2523, %v2531
        %v2533 = vmul.f32 %v2517, %v2524
        %v2534 = vadd.f32 %v2532, %v2533
        %v2535 = vtanh.pop %v2534
        %v2536 = vmul.f32 %v2530, %v2535
        %v2537 = vstv %s2293
        %vm2538 = vcmp.lt.s32.totalorder %v2537, %v721
        %v2539 = vsel %vm2538, 1, 0
        %2540 = vset.pattern.permute.xlu0 0
        %2541 = vperm.xlu0 %2540, %v2539
        %v2542 = vpop.permute.xlu0 %2541
        %vm2543 = vcmp.eq.s32.totalorder %v2542, 1
        %v2544 = vsel %vm2543, %v2534, %v2531
        %2545 = vst [vmem:[#allocation3] sm:$0xff] %v2544
        %v2546 = vld [vmem:[#allocation2] sm:$0xff]
        %v2547 = vsel %vm2543, %v2536, %v2546
        %2548 = vst [vmem:[#allocation2] sm:$0xff] %v2547
        %v2549 = vsel %vm2543, %v2536, 0.0
        %s2550 = smul.u32 %s2292, 8
        %s2551 = scalar_lea.vmem %s366, %s2550 [#allocation11]
        %2552 = vst [vmem:[%s2551] sm:$0xff] %v2549
        %s2553 = smul.u32 %s29, 4294967289
        %s2554 = sadd.s32 %s2553, 7
        %s2555 = sadd.s32 %s720, %s2554
        %s2556 = smul.u32 %s2554, 4
        %s2557 = smul.addr %s2556, 8
        %s2558 = scalar_lea.vmem [#allocation4], %s2557
        %v2559 = vld [vmem:[%s2558] sm:$0xff]
        %v2560 = vld [vmem:[%s2558 + $0x8] sm:$0xff]
        %v2561 = vld [vmem:[%s2558 + $0x10] sm:$0xff]
        %v2562 = vld [vmem:[%s2558 + $0x18] sm:$0xff]
        %v2563 = vld [vmem:[#allocation2] sm:$0xff]
        %v2564 = vld [vmem:[%s326] sm:$0xff]
        %v2565 = vld [vmem:[%s326 + $0x8] sm:$0xff]
        %v2566 = vld [vmem:[%s326 + $0x10] sm:$0xff]
        %v2567 = vld [vmem:[%s326 + $0x18] sm:$0xff]
        %v2568 = vld [vmem:[%s326 + $0x20] sm:$0xff]
        %v2569 = vld [vmem:[%s326 + $0x28] sm:$0xff]
        %v2570 = vld [vmem:[%s326 + $0x30] sm:$0xff]
        %v2571 = vld [vmem:[%s326 + $0x38] sm:$0xff]
        %v2572 = vld [vmem:[%s326 + $0x40] sm:$0xff]
        %v2573 = vld [vmem:[%s326 + $0x48] sm:$0xff]
        %v2574 = vld [vmem:[%s326 + $0x50] sm:$0xff]
        %v2575 = vld [vmem:[%s326 + $0x58] sm:$0xff]
        %v2576 = vld [vmem:[%s326 + $0x60] sm:$0xff]
        %v2577 = vld [vmem:[%s326 + $0x68] sm:$0xff]
        %v2578 = vld [vmem:[%s326 + $0x70] sm:$0xff]
        %v2579 = vld [vmem:[%s326 + $0x78] sm:$0xff]
        %v2580 = vld [vmem:[%s326 + $0x80] sm:$0xff]
        %v2581 = vld [vmem:[%s326 + $0x88] sm:$0xff]
        %v2582 = vld [vmem:[%s326 + $0x90] sm:$0xff]
        %v2583 = vld [vmem:[%s326 + $0x98] sm:$0xff]
        %v2584 = vld [vmem:[%s326 + $0xa0] sm:$0xff]
        %v2585 = vld [vmem:[%s326 + $0xa8] sm:$0xff]
        %v2586 = vld [vmem:[%s326 + $0xb0] sm:$0xff]
        %v2587 = vld [vmem:[%s326 + $0xb8] sm:$0xff]
        %v2588 = vld [vmem:[%s326 + $0xc0] sm:$0xff]
        %v2589 = vld [vmem:[%s326 + $0xc8] sm:$0xff]
        %v2590 = vld [vmem:[%s326 + $0xd0] sm:$0xff]
        %v2591 = vld [vmem:[%s326 + $0xd8] sm:$0xff]
        %v2592 = vld [vmem:[%s326 + $0xe0] sm:$0xff]
        %v2593 = vld [vmem:[%s326 + $0xe8] sm:$0xff]
        %v2594 = vld [vmem:[%s326 + $0xf0] sm:$0xff]
        %v2595 = vld [vmem:[%s326 + $0xf8] sm:$0xff]
        %v2596 = vld [vmem:[%s326 + $0x100] sm:$0xff]
        %v2597 = vld [vmem:[%s326 + $0x108] sm:$0xff]
        %v2598 = vld [vmem:[%s326 + $0x110] sm:$0xff]
        %v2599 = vld [vmem:[%s326 + $0x118] sm:$0xff]
        %v2600 = vld [vmem:[%s326 + $0x120] sm:$0xff]
        %v2601 = vld [vmem:[%s326 + $0x128] sm:$0xff]
        %v2602 = vld [vmem:[%s326 + $0x130] sm:$0xff]
        %v2603 = vld [vmem:[%s326 + $0x138] sm:$0xff]
        %v2604 = vld [vmem:[%s326 + $0x140] sm:$0xff]
        %v2605 = vld [vmem:[%s326 + $0x148] sm:$0xff]
        %v2606 = vld [vmem:[%s326 + $0x150] sm:$0xff]
        %v2607 = vld [vmem:[%s326 + $0x158] sm:$0xff]
        %v2608 = vld [vmem:[%s326 + $0x160] sm:$0xff]
        %v2609 = vld [vmem:[%s326 + $0x168] sm:$0xff]
        %v2610 = vld [vmem:[%s326 + $0x170] sm:$0xff]
        %v2611 = vld [vmem:[%s326 + $0x178] sm:$0xff]
        %v2612 = vld [vmem:[%s326 + $0x180] sm:$0xff]
        %v2613 = vld [vmem:[%s326 + $0x188] sm:$0xff]
        %v2614 = vld [vmem:[%s326 + $0x190] sm:$0xff]
        %v2615 = vld [vmem:[%s326 + $0x198] sm:$0xff]
        %v2616 = vld [vmem:[%s326 + $0x1a0] sm:$0xff]
        %v2617 = vld [vmem:[%s326 + $0x1a8] sm:$0xff]
        %v2618 = vld [vmem:[%s326 + $0x1b0] sm:$0xff]
        %v2619 = vld [vmem:[%s326 + $0x1b8] sm:$0xff]
        %v2620 = vld [vmem:[%s326 + $0x1c0] sm:$0xff]
        %v2621 = vld [vmem:[%s326 + $0x1c8] sm:$0xff]
        %v2622 = vld [vmem:[%s326 + $0x1d0] sm:$0xff]
        %v2623 = vld [vmem:[%s326 + $0x1d8] sm:$0xff]
        %v2624 = vld [vmem:[%s326 + $0x1e0] sm:$0xff]
        %v2625 = vld [vmem:[%s326 + $0x1e8] sm:$0xff]
        %v2626 = vld [vmem:[%s326 + $0x1f0] sm:$0xff]
        %v2627 = vld [vmem:[%s326 + $0x1f8] sm:$0xff]
        %2628 = vmatprep.subr.mxu0 %v2565
        %2629 = vmatpush1.msra.mxu0 %v2564
        %2630 = vmatprep.subr.mxu0 %v2569
        %2631 = vmatpush1.msra.mxu0 %v2568
        %2632 = vmatprep.subr.mxu0 %v2573
        %2633 = vmatpush1.msra.mxu0 %v2572
        %2634 = vmatprep.subr.mxu0 %v2577
        %2635 = vmatpush1.msra.mxu0 %v2576
        %2636 = vmatprep.subr.mxu0 %v2581
        %2637 = vmatpush1.msra.mxu0 %v2580
        %2638 = vmatprep.subr.mxu0 %v2585
        %2639 = vmatpush1.msra.mxu0 %v2584
        %2640 = vmatprep.subr.mxu0 %v2589
        %2641 = vmatpush1.msra.mxu0 %v2588
        %2642 = vmatprep.subr.mxu0 %v2593
        %2643 = vmatpush1.msra.mxu0 %v2592
        %2644 = vmatprep.subr.mxu0 %v2597
        %2645 = vmatpush1.msra.mxu0 %v2596
        %2646 = vmatprep.subr.mxu0 %v2601
        %2647 = vmatpush1.msra.mxu0 %v2600
        %2648 = vmatprep.subr.mxu0 %v2605
        %2649 = vmatpush1.msra.mxu0 %v2604
        %2650 = vmatprep.subr.mxu0 %v2609
        %2651 = vmatpush1.msra.mxu0 %v2608
        %2652 = vmatprep.subr.mxu0 %v2613
        %2653 = vmatpush1.msra.mxu0 %v2612
        %2654 = vmatprep.subr.mxu0 %v2617
        %2655 = vmatpush1.msra.mxu0 %v2616
        %2656 = vmatprep.subr.mxu0 %v2621
        %2657 = vmatpush1.msra.mxu0 %v2620
        %2658 = vmatprep.subr.mxu0 %v2625
        %2659 = vmatpush1.msra.mxu0 %v2624
        %2660 = vmatprep.subr.mxu0 0.0
        %2661 = vmatpush1.msra.mxu0 0.0
        %2662 = vmatprep.subr.mxu0 0.0
        %2663 = vmatpush1.msra.mxu0 0.0
        %2664 = vmatprep.subr.mxu0 0.0
        %2665 = vmatpush1.msra.mxu0 0.0
        %2666 = vmatprep.subr.mxu0 0.0
        %2667 = vmatpush1.msra.mxu0 0.0
        %2668 = vmatprep.subr.mxu0 0.0
        %2669 = vmatpush1.msra.mxu0 0.0
        %2670 = vmatprep.subr.mxu0 0.0
        %2671 = vmatpush1.msra.mxu0 0.0
        %2672 = vmatprep.subr.mxu0 0.0
        %2673 = vmatpush1.msra.mxu0 0.0
        %2674 = vmatprep.subr.mxu0 0.0
        %2675 = vmatpush1.msra.mxu0 0.0
        %2676 = vmatprep.subr.mxu0 0.0
        %2677 = vmatpush1.msra.mxu0 0.0
        %2678 = vmatprep.subr.mxu0 0.0
        %2679 = vmatpush1.msra.mxu0 0.0
        %2680 = vmatprep.subr.mxu0 0.0
        %2681 = vmatpush1.msra.mxu0 0.0
        %2682 = vmatprep.subr.mxu0 0.0
        %2683 = vmatpush1.msra.mxu0 0.0
        %2684 = vmatprep.subr.mxu0 0.0
        %2685 = vmatpush1.msra.mxu0 0.0
        %2686 = vmatprep.subr.mxu0 0.0
        %2687 = vmatpush1.msra.mxu0 0.0
        %2688 = vmatprep.subr.mxu0 0.0
        %2689 = vmatpush1.msra.mxu0 0.0
        %2690 = vmatprep.subr.mxu0 0.0
        %2691 = vmatpush1.msra.mxu0 0.0
        %2692 = vmatprep.mubr.f32.mxu0 0.0
        %2693 = vmatmul.mubr.f32.gmra.mrb[0].mxu0 %v2563
        %v2694 = vpop.f32.mrb[0].mxu0
        %v2695 = vadd.f32 0.0, %v2694
        %v2696 = vpop.f32.mrb[0].mxu0
        %v2697 = vadd.f32 0.0, %v2696
        %2698 = vdwg.mxu0
        %2699 = vmatprep.subr.mxu0 %v2567
        %2700 = vmatpush1.msra.mxu0 %v2566
        %2701 = vmatprep.subr.mxu0 %v2571
        %2702 = vmatpush1.msra.mxu0 %v2570
        %2703 = vmatprep.subr.mxu0 %v2575
        %2704 = vmatpush1.msra.mxu0 %v2574
        %2705 = vmatprep.subr.mxu0 %v2579
        %2706 = vmatpush1.msra.mxu0 %v2578
        %2707 = vmatprep.subr.mxu0 %v2583
        %2708 = vmatpush1.msra.mxu0 %v2582
        %2709 = vmatprep.subr.mxu0 %v2587
        %2710 = vmatpush1.msra.mxu0 %v2586
        %2711 = vmatprep.subr.mxu0 %v2591
        %2712 = vmatpush1.msra.mxu0 %v2590
        %2713 = vmatprep.subr.mxu0 %v2595
        %2714 = vmatpush1.msra.mxu0 %v2594
        %2715 = vmatprep.subr.mxu0 %v2599
        %2716 = vmatpush1.msra.mxu0 %v2598
        %2717 = vmatprep.subr.mxu0 %v2603
        %2718 = vmatpush1.msra.mxu0 %v2602
        %2719 = vmatprep.subr.mxu0 %v2607
        %2720 = vmatpush1.msra.mxu0 %v2606
        %2721 = vmatprep.subr.mxu0 %v2611
        %2722 = vmatpush1.msra.mxu0 %v2610
        %2723 = vmatprep.subr.mxu0 %v2615
        %2724 = vmatpush1.msra.mxu0 %v2614
        %2725 = vmatprep.subr.mxu0 %v2619
        %2726 = vmatpush1.msra.mxu0 %v2618
        %2727 = vmatprep.subr.mxu0 %v2623
        %2728 = vmatpush1.msra.mxu0 %v2622
        %2729 = vmatprep.subr.mxu0 %v2627
        %2730 = vmatpush1.msra.mxu0 %v2626
        %2731 = vmatprep.subr.mxu0 0.0
        %2732 = vmatpush1.msra.mxu0 0.0
        %2733 = vmatprep.subr.mxu0 0.0
        %2734 = vmatpush1.msra.mxu0 0.0
        %2735 = vmatprep.subr.mxu0 0.0
        %2736 = vmatpush1.msra.mxu0 0.0
        %2737 = vmatprep.subr.mxu0 0.0
        %2738 = vmatpush1.msra.mxu0 0.0
        %2739 = vmatprep.subr.mxu0 0.0
        %2740 = vmatpush1.msra.mxu0 0.0
        %2741 = vmatprep.subr.mxu0 0.0
        %2742 = vmatpush1.msra.mxu0 0.0
        %2743 = vmatprep.subr.mxu0 0.0
        %2744 = vmatpush1.msra.mxu0 0.0
        %2745 = vmatprep.subr.mxu0 0.0
        %2746 = vmatpush1.msra.mxu0 0.0
        %2747 = vmatprep.subr.mxu0 0.0
        %2748 = vmatpush1.msra.mxu0 0.0
        %2749 = vmatprep.subr.mxu0 0.0
        %2750 = vmatpush1.msra.mxu0 0.0
        %2751 = vmatprep.subr.mxu0 0.0
        %2752 = vmatpush1.msra.mxu0 0.0
        %2753 = vmatprep.subr.mxu0 0.0
        %2754 = vmatpush1.msra.mxu0 0.0
        %2755 = vmatprep.subr.mxu0 0.0
        %2756 = vmatpush1.msra.mxu0 0.0
        %2757 = vmatprep.subr.mxu0 0.0
        %2758 = vmatpush1.msra.mxu0 0.0
        %2759 = vmatprep.subr.mxu0 0.0
        %2760 = vmatpush1.msra.mxu0 0.0
        %2761 = vmatprep.subr.mxu0 0.0
        %2762 = vmatpush1.msra.mxu0 0.0
        %2763 = vmatprep.mubr.f32.mxu0 0.0
        %2764 = vmatmul.mubr.f32.gmra.mrb[0].mxu0 %v2563
        %v2765 = vpop.f32.mrb[0].mxu0
        %v2766 = vadd.f32 0.0, %v2765
        %v2767 = vpop.f32.mrb[0].mxu0
        %v2768 = vadd.f32 0.0, %v2767
        %2769 = vdwg.mxu0
        %v2770 = vadd.f32 %v2559, %v2695
        %v2771 = vadd.f32 %v2560, %v2697
        %v2772 = vadd.f32 %v2561, %v2766
        %v2773 = vadd.f32 %v2562, %v2768
        %v2774 = vxor.u32 %v2770, 2147483648
        %v2775 = vmul.f32 %v2774, 1.442695
        %v2776 = vpow.pop %v2775
        %v2777 = vadd.f32 %v2776, 1.0
        %v2778 = vrcp.pop %v2777
        %v2779 = vmul.f32 1.0, %v2778
        %v2780 = vxor.u32 %v2771, 2147483648
        %v2781 = vmul.f32 %v2780, 1.442695
        %v2782 = vpow.pop %v2781
        %v2783 = vadd.f32 %v2782, 1.0
        %v2784 = vrcp.pop %v2783
        %v2785 = vmul.f32 1.0, %v2784
        %v2786 = vtanh.pop %v2772
        %v2787 = vxor.u32 %v2773, 2147483648
        %v2788 = vmul.f32 %v2787, 1.442695
        %v2789 = vpow.pop %v2788
        %v2790 = vadd.f32 %v2789, 1.0
        %v2791 = vrcp.pop %v2790
        %v2792 = vmul.f32 1.0, %v2791
        %v2793 = vld [vmem:[#allocation3] sm:$0xff]
        %v2794 = vmul.f32 %v2785, %v2793
        %v2795 = vmul.f32 %v2779, %v2786
        %v2796 = vadd.f32 %v2794, %v2795
        %v2797 = vtanh.pop %v2796
        %v2798 = vmul.f32 %v2792, %v2797
        %v2799 = vstv %s2555
        %vm2800 = vcmp.lt.s32.totalorder %v2799, %v721
        %v2801 = vsel %vm2800, 1, 0
        %2802 = vset.pattern.permute.xlu0 0
        %2803 = vperm.xlu0 %2802, %v2801
        %v2804 = vpop.permute.xlu0 %2803
        %vm2805 = vcmp.eq.s32.totalorder %v2804, 1
        %v2806 = vsel %vm2805, %v2796, %v2793
        %2807 = vst [vmem:[#allocation3] sm:$0xff] %v2806
        %v2808 = vld [vmem:[#allocation2] sm:$0xff]
        %v2809 = vsel %vm2805, %v2798, %v2808
        %2810 = vst [vmem:[#allocation2] sm:$0xff] %v2809
        %v2811 = vsel %vm2805, %v2798, 0.0
        %s2812 = smul.u32 %s2554, 8
        %s2813 = scalar_lea.vmem %s366, %s2812 [#allocation11]
        %2814 = vst [vmem:[%s2813] sm:$0xff] %v2811
        %s2815 = sand.u32 %s188, 1
        %s2816 = scalar_lea.sflag [#allocation7], %s2815
        %s2817 = sand.u32 %s188, 1
        %s2818 = smul.addr %s2817, 64
        %s2819 = scalar_lea.vmem [#allocation11], %s2818
        // Predicated region
        $region57: #{tpu_custom_call.1} parent=39 // pred_check
          %p2820 = pneg %p198
        $region58: #{tpu_custom_call.1} parent=39 // pred_check_branch
          %2822 = sbr.rel (%p2820) target = $region60
        $region59: #{tpu_custom_call.1} parent=39 // pred_region
          %s2823 = smul.u32 %s30, 2
          %s2824 = ssub.s32 0, %s2823
          %s2825 = smul.u32 %s29, %s2824
          %s2826 = sadd.s32 %s30, %s2825
          %s2827 = smul.u32 8, %s2826
          %s2829 = ssub.s32 1024, 1024
          %2830 = vsyncadd %s2816, %s2829
          %s2831 = smul.addr %s2827, 2
          %s2832 = sadd.s32 %s29, %s2831
          %s2833 = smul.addr %s2832, 128
          %s2834 = scalar_lea.hbm %s5, %s2833
          %s2835 = sshll.u32 %s2819, 4
          %s2836 = int_to_ptr.vmem [resolvable:$true] %s2835
          %2841 = dma.vmem_to_hbm [thread:$0]  %s2836, 1024, %s2834, %s2816, 128, 256, 8
        $region60: #{tpu_custom_call.1} parent=39 // pred_fallthru
          _
      $region40: #{tpu_custom_call.1} parent=5 // pred_fallthru
        _
      %p2842 = scmp.le.s32.totalorder 2, %s20
      // Predicated region
      $region61: #{tpu_custom_call.1} parent=5 // pred_check
        %p2843 = pneg %p2842
      $region62: #{tpu_custom_call.1} parent=5 // pred_check_branch
        %2845 = sbr.rel (%p2843) target = $region64
      $region63: #{tpu_custom_call.1} parent=5 // pred_region
        %s2846 = ssub.s32 %s20, 2
        // Predicated region
        $region65: #{tpu_custom_call.1} parent=63 // pred_check
          %p2847 = pneg %p204
        $region66: #{tpu_custom_call.1} parent=63 // pred_check_branch
          %2849 = sbr.rel (%p2847) target = $region68
        $region67: #{tpu_custom_call.1} parent=63 // pred_region
          %s2850 = sand.u32 %s189, 1
          %s2851 = scalar_lea.sflag [#allocation7], %s2850
          %s2852 = sand.u32 %s189, 1
          %s2853 = smul.addr %s2852, 64
          %s2854 = scalar_lea.vmem [#allocation11], %s2853
          %2855 = dma.done %s2851, 1024
        $region68: #{tpu_custom_call.1} parent=63 // pred_fallthru
          _
      $region64: #{tpu_custom_call.1} parent=5 // pred_fallthru
        _
    $region6: #{tpu_custom_call.1} parent=1 // loop_footer
      %s24 = sadd.s32 1, %s20
    $region7: #{tpu_custom_call.1} parent=1 // loop_footer_branch
      %19 = sbr.rel target = $region3
    $region8: #{tpu_custom_call.1} parent=1 // loop_exit
      _
    %2856 = vsyncpa [#allocation6], 1
    %s2857 = scalar_lea.sflag [#allocation6], 1
    %2858 = vsyncpa %s2857, 1
    %2859 = vsyncpa [#allocation9], 1
    %s2860 = scalar_lea.sflag [#allocation9], 1
    %2861 = vsyncpa %s2860, 1
    %2862 = vsyncpa [#allocation7], 1
    %s2863 = scalar_lea.sflag [#allocation7], 1
    %2864 = vsyncpa %s2863, 1

</llo_original>
